<compile_context>
chip_gen: v7x
topology: tpu7x:2x2x1
jax: 0.10.0
libtpu: 0.0.40
codegen_flags: <defaults>
</compile_context>

<pallas_src>
import functools

import jax
import jax.numpy as jnp
from jax.experimental import pallas as pl
from jax.experimental.pallas import tpu as pltpu


# ----------------------------------------------------------------------------
# Fused kernel
# ----------------------------------------------------------------------------
def fused_bilstm_kernel(
        ids_ref, emb_ref,
        wih_f0_ref, whh_f0_ref, b_f0_ref, wih_b0_ref, whh_b0_ref, b_b0_ref,
        wih_f1_ref, whh_f1_ref, b_f1_ref, wih_b1_ref, whh_b1_ref, b_b1_ref,
        dense_w_ref, dense_b_ref,
        out_ref,
        act_scr, flat_scr,
        *, seq_len, batch, hidden, vocab):
    T, B, H = seq_len, batch, hidden
    f32 = jnp.float32

    # --- Embedding lookup as one-hot @ table (one MXU pass, no HBM gather) ---
    ids = ids_ref[...]                                            # (T*B, 1) i32
    vocab_ids = jax.lax.broadcasted_iota(jnp.int32, (T * B, vocab), 1)
    one_hot = (ids == vocab_ids).astype(f32)                      # (T*B, V)
    x0 = jnp.dot(one_hot, emb_ref[...], preferred_element_type=f32)  # (T*B, E)
    # Dropout: inference-time identity.

    def lstm_cell_seq(proj, whh, reverse, store):
        """Serial LSTM recurrence. Input projection already hoisted into proj."""
        h = jnp.zeros((B, H), f32)
        c = jnp.zeros((B, H), f32)
        order = range(T - 1, -1, -1) if reverse else range(T)
        for t in order:                           # static unroll (T is small)
            gates = proj[t * B:(t + 1) * B, :] + jnp.dot(
                h, whh, preferred_element_type=f32)               # (B, 4H)
            i_g = jax.nn.sigmoid(gates[:, 0 * H:1 * H])
            f_g = jax.nn.sigmoid(gates[:, 1 * H:2 * H])
            g_g = jnp.tanh(gates[:, 2 * H:3 * H])
            o_g = jax.nn.sigmoid(gates[:, 3 * H:4 * H])
            c = f_g * c + i_g * g_g
            h = o_g * jnp.tanh(c)
            store(t, h)

    def run_bilstm_layer(x_rows, wih_f, whh_f, b_f, wih_b, whh_b, b_b,
                         store_f, store_b):
        # Hoisted input projection: one matmul per direction for all T steps.
        proj_f = jnp.dot(x_rows, wih_f, preferred_element_type=f32) + b_f
        proj_b = jnp.dot(x_rows, wih_b, preferred_element_type=f32) + b_b
        lstm_cell_seq(proj_f, whh_f, False, store_f)
        lstm_cell_seq(proj_b, whh_b, True, store_b)

    # ---- Layer 0: time-major (T*B, 2H) activation, fwd||bwd along features.
    def store_l0(col):
        def store(t, h):
            act_scr[t * B:(t + 1) * B, col:col + H] = h
        return store

    run_bilstm_layer(x0,
                     wih_f0_ref[...], whh_f0_ref[...], b_f0_ref[...],
                     wih_b0_ref[...], whh_b0_ref[...], b_b0_ref[...],
                     store_l0(0), store_l0(H))
    x1 = act_scr[...]                                             # (T*B, 2H)

    # ---- Layer 1: store directly in the PyTorch output.view([-1, T*2H])
    #      layout: flat[r, k] == contiguous (T, B, 2H) element r*T*2H + k.
    def store_l1(col):
        def store(t, h):
            for b in range(B):                     # static: B tiny
                lin = (t * B + b) * 2 * H + col
                r, k = divmod(lin, T * 2 * H)      # python ints
                flat_scr[r:r + 1, k:k + H] = h[b:b + 1, :]
        return store

    run_bilstm_layer(x1,
                     wih_f1_ref[...], whh_f1_ref[...], b_f1_ref[...],
                     wih_b1_ref[...], whh_b1_ref[...], b_b1_ref[...],
                     store_l1(0), store_l1(H))

    # ---- Dense + sigmoid, fused (no extra launch, no HBM round trip).
    flat = flat_scr[...]                                          # (B, T*2H)
    logits = jnp.dot(flat, dense_w_ref[...],
                     preferred_element_type=f32) + dense_b_ref[...]
    out_ref[...] = jax.nn.sigmoid(logits)


# ----------------------------------------------------------------------------
# Wrapper
# ----------------------------------------------------------------------------
def bilstm_forward(x_ids, params, *, seq_len, num_units, vocab_size):
    """Full BiLSTM.forward.  x_ids: (T, B) int32 token ids."""
    T, B = x_ids.shape
    H = num_units
    assert len(params["lstm_layers"]) == 2, "kernel is specialized to 2 layers"

    emb = params["embedding"]
    dense_w = params["dense_w"]
    dense_b = params["dense_b"].reshape(1, -1)
    O = dense_w.shape[1]

    ids2d = x_ids.reshape(T * B, 1).astype(jnp.int32)   # time-major rows

    def prep(layer_p):
        w_ih_f, w_hh_f, b_f = layer_p["fwd"]
        w_ih_b, w_hh_b, b_b = layer_p["bwd"]
        return [w_ih_f, w_hh_f, b_f.reshape(1, -1),
                w_ih_b, w_hh_b, b_b.reshape(1, -1)]

    inputs = [ids2d, emb]
    for layer_p in params["lstm_layers"]:
        inputs += prep(layer_p)
    inputs += [dense_w, dense_b]

    kernel = functools.partial(fused_bilstm_kernel, seq_len=T, batch=B,
                               hidden=H, vocab=vocab_size)

    return pl.pallas_call(
        kernel,
        out_shape=jax.ShapeDtypeStruct((B, O), jnp.float32),
        grid_spec=pltpu.PrefetchScalarGridSpec(
            num_scalar_prefetch=0,
            grid=(1,),                                  # single step, all VMEM
            in_specs=[pl.BlockSpec(a.shape, lambda i: (0, 0)) for a in inputs],
            out_specs=pl.BlockSpec((B, O), lambda i: (0, 0)),
            scratch_shapes=[
                pltpu.VMEM((T * B, 2 * H), jnp.float32),   # layer-0 output
                pltpu.VMEM((B, T * 2 * H), jnp.float32),   # layer-1 out, view layout
            ],
        ),
        compiler_params=pltpu.CompilerParams(
            dimension_semantics=("arbitrary",)),
    )(*inputs)


# ----------------------------------------------------------------------------
# Deterministic parameter construction
# ----------------------------------------------------------------------------
def init_params(key, vocab_size, embed_size, num_units, output_size,
                seq_len, num_layers):
    ks = iter(jax.random.split(key, 4 + num_layers * 12))
    H = num_units
    params = {
        "embedding": 0.1 * jax.random.normal(next(ks),
                                             (vocab_size, embed_size),
                                             jnp.float32),
        "dense_w": 0.05 * jax.random.normal(next(ks),
                                            (seq_len * 2 * H, output_size),
                                            jnp.float32),
        "dense_b": 0.05 * jax.random.normal(next(ks), (output_size,),
                                            jnp.float32),
        "lstm_layers": [],
    }
    for layer in range(num_layers):
        in_dim = embed_size if layer == 0 else 2 * H
        layer_p = {}
        for direction in ("fwd", "bwd"):
            w_ih = 0.1 * jax.random.normal(next(ks), (in_dim, 4 * H),
                                           jnp.float32)
            w_hh = 0.1 * jax.random.normal(next(ks), (H, 4 * H), jnp.float32)
            # NOTE: PyTorch has b_ih and b_hh; when porting real weights pass
            # their sum here (single combined bias).
            bias = 0.1 * jax.random.normal(next(ks), (4 * H,), jnp.float32)
            layer_p[direction] = (w_ih, w_hh, bias)
        params["lstm_layers"].append(layer_p)
    return params


# ----------------------------------------------------------------------------
if __name__ == "__main__":
    vocab_size = 50
    embed_size = 16
    num_units = 32      # H
    output_size = 4
    seq_len = 8         # T
    batch_size = 2      # B
    num_layers = 2

    key = jax.random.PRNGKey(0)
    k_param, k_x = jax.random.split(key)
    params = init_params(k_param, vocab_size, embed_size, num_units,
                         output_size, seq_len, num_layers)

    x_ids = jax.random.randint(k_x, (seq_len, batch_size), 0, vocab_size,
                               dtype=jnp.int32)
    # `target` is unused by the PyTorch forward; omitted.

    pred = bilstm_forward(x_ids, params, seq_len=seq_len, num_units=num_units,
                          vocab_size=vocab_size)
    pred = jax.block_until_ready(pred)

    assert pred.shape == (batch_size, output_size)
    assert bool(jnp.all(jnp.isfinite(pred)))
    print("KERNEL_OK")
</pallas_src>

<mosaic_0001>
module attributes {stable_mosaic.version = 11 : i64} {
  func.func @fused_bilstm_kernel(%arg0: i32, %arg1: memref<16x1xi32, #tpu.memory_space<vmem>>, %arg2: memref<50x16xf32, #tpu.memory_space<vmem>>, %arg3: memref<16x128xf32, #tpu.memory_space<vmem>>, %arg4: memref<32x128xf32, #tpu.memory_space<vmem>>, %arg5: memref<1x128xf32, #tpu.memory_space<vmem>>, %arg6: memref<16x128xf32, #tpu.memory_space<vmem>>, %arg7: memref<32x128xf32, #tpu.memory_space<vmem>>, %arg8: memref<1x128xf32, #tpu.memory_space<vmem>>, %arg9: memref<64x128xf32, #tpu.memory_space<vmem>>, %arg10: memref<32x128xf32, #tpu.memory_space<vmem>>, %arg11: memref<1x128xf32, #tpu.memory_space<vmem>>, %arg12: memref<64x128xf32, #tpu.memory_space<vmem>>, %arg13: memref<32x128xf32, #tpu.memory_space<vmem>>, %arg14: memref<1x128xf32, #tpu.memory_space<vmem>>, %arg15: memref<512x4xf32, #tpu.memory_space<vmem>>, %arg16: memref<1x4xf32, #tpu.memory_space<vmem>>, %arg17: memref<2x4xf32, #tpu.memory_space<vmem>>, %arg18: memref<16x64xf32, #tpu.memory_space<vmem>>, %arg19: memref<2x512xf32, #tpu.memory_space<vmem>>) attributes {dimension_semantics = [#tpu.dimension_semantics<arbitrary>], iteration_bounds = array<i64: 1>, scalar_prefetch = 0 : i64, scratch_operands = 2 : i64, tpu.core_type = #tpu.core_type<tc>, window_params = [{pipeline_mode = #tpu.pipeline_mode<synchronous>, transform_indices = @transform_0, window_bounds = array<i64: 16, 1>}, {pipeline_mode = #tpu.pipeline_mode<synchronous>, transform_indices = @transform_1, window_bounds = array<i64: 50, 16>}, {pipeline_mode = #tpu.pipeline_mode<synchronous>, transform_indices = @transform_2, window_bounds = array<i64: 16, 128>}, {pipeline_mode = #tpu.pipeline_mode<synchronous>, transform_indices = @transform_3, window_bounds = array<i64: 32, 128>}, {pipeline_mode = #tpu.pipeline_mode<synchronous>, transform_indices = @transform_4, window_bounds = array<i64: 1, 128>}, {pipeline_mode = #tpu.pipeline_mode<synchronous>, transform_indices = @transform_5, window_bounds = array<i64: 16, 128>}, {pipeline_mode = #tpu.pipeline_mode<synchronous>, transform_indices = @transform_6, window_bounds = array<i64: 32, 128>}, {pipeline_mode = #tpu.pipeline_mode<synchronous>, transform_indices = @transform_7, window_bounds = array<i64: 1, 128>}, {pipeline_mode = #tpu.pipeline_mode<synchronous>, transform_indices = @transform_8, window_bounds = array<i64: 64, 128>}, {pipeline_mode = #tpu.pipeline_mode<synchronous>, transform_indices = @transform_9, window_bounds = array<i64: 32, 128>}, {pipeline_mode = #tpu.pipeline_mode<synchronous>, transform_indices = @transform_10, window_bounds = array<i64: 1, 128>}, {pipeline_mode = #tpu.pipeline_mode<synchronous>, transform_indices = @transform_11, window_bounds = array<i64: 64, 128>}, {pipeline_mode = #tpu.pipeline_mode<synchronous>, transform_indices = @transform_12, window_bounds = array<i64: 32, 128>}, {pipeline_mode = #tpu.pipeline_mode<synchronous>, transform_indices = @transform_13, window_bounds = array<i64: 1, 128>}, {pipeline_mode = #tpu.pipeline_mode<synchronous>, transform_indices = @transform_14, window_bounds = array<i64: 512, 4>}, {pipeline_mode = #tpu.pipeline_mode<synchronous>, transform_indices = @transform_15, window_bounds = array<i64: 1, 4>}, {pipeline_mode = #tpu.pipeline_mode<synchronous>, transform_indices = @transform_16, window_bounds = array<i64: 2, 4>}]} {
    %c0 = arith.constant 0 : index
    %c0_0 = arith.constant 0 : index
    %0 = vector.load %arg1[%c0, %c0_0] : memref<16x1xi32, #tpu.memory_space<vmem>>, vector<16x1xi32>
    %1 = tpu.iota {dimensions = array<i32: 1>} : vector<16x50xi32>
    %2 = vector.broadcast %0 : vector<16x1xi32> to vector<16x50xi32>
    %3 = arith.cmpi eq, %2, %1 : vector<16x50xi32>
    %4 = arith.extui %3 : vector<16x50xi1> to vector<16x50xi32>
    %5 = arith.sitofp %4 : vector<16x50xi32> to vector<16x50xf32>
    %c0_1 = arith.constant 0 : index
    %c0_2 = arith.constant 0 : index
    %6 = vector.load %arg2[%c0_1, %c0_2] : memref<50x16xf32, #tpu.memory_space<vmem>>, vector<50x16xf32>
    %cst = arith.constant dense<0.000000e+00> : vector<16x16xf32>
    %7 = tpu.matmul %5, %6, %cst {dimension_numbers = #tpu.dot_dimension_numbers<[1], [0], [0], [1], [0, 0, 1, 1], [], []>} : vector<16x50xf32>, vector<50x16xf32>, vector<16x16xf32> -> vector<16x16xf32>
    %c0_3 = arith.constant 0 : index
    %c0_4 = arith.constant 0 : index
    %8 = vector.load %arg3[%c0_3, %c0_4] : memref<16x128xf32, #tpu.memory_space<vmem>>, vector<16x128xf32>
    %c0_5 = arith.constant 0 : index
    %c0_6 = arith.constant 0 : index
    %9 = vector.load %arg4[%c0_5, %c0_6] : memref<32x128xf32, #tpu.memory_space<vmem>>, vector<32x128xf32>
    %c0_7 = arith.constant 0 : index
    %c0_8 = arith.constant 0 : index
    %10 = vector.load %arg5[%c0_7, %c0_8] : memref<1x128xf32, #tpu.memory_space<vmem>>, vector<1x128xf32>
    %c0_9 = arith.constant 0 : index
    %c0_10 = arith.constant 0 : index
    %11 = vector.load %arg6[%c0_9, %c0_10] : memref<16x128xf32, #tpu.memory_space<vmem>>, vector<16x128xf32>
    %c0_11 = arith.constant 0 : index
    %c0_12 = arith.constant 0 : index
    %12 = vector.load %arg7[%c0_11, %c0_12] : memref<32x128xf32, #tpu.memory_space<vmem>>, vector<32x128xf32>
    %c0_13 = arith.constant 0 : index
    %c0_14 = arith.constant 0 : index
    %13 = vector.load %arg8[%c0_13, %c0_14] : memref<1x128xf32, #tpu.memory_space<vmem>>, vector<1x128xf32>
    %cst_15 = arith.constant dense<0.000000e+00> : vector<16x128xf32>
    %14 = tpu.matmul %7, %8, %cst_15 {dimension_numbers = #tpu.dot_dimension_numbers<[1], [0], [0], [1], [0, 0, 1, 1], [], []>} : vector<16x16xf32>, vector<16x128xf32>, vector<16x128xf32> -> vector<16x128xf32>
    %15 = vector.broadcast %10 : vector<1x128xf32> to vector<16x128xf32>
    %16 = arith.addf %14, %15 : vector<16x128xf32>
    %cst_16 = arith.constant dense<0.000000e+00> : vector<16x128xf32>
    %17 = tpu.matmul %7, %11, %cst_16 {dimension_numbers = #tpu.dot_dimension_numbers<[1], [0], [0], [1], [0, 0, 1, 1], [], []>} : vector<16x16xf32>, vector<16x128xf32>, vector<16x128xf32> -> vector<16x128xf32>
    %18 = vector.broadcast %13 : vector<1x128xf32> to vector<16x128xf32>
    %19 = arith.addf %17, %18 : vector<16x128xf32>
    %cst_17 = arith.constant 0.000000e+00 : f32
    %20 = vector.broadcast %cst_17 : f32 to vector<2x32xf32>
    %cst_18 = arith.constant 0.000000e+00 : f32
    %21 = vector.broadcast %cst_18 : f32 to vector<2x32xf32>
    %22 = vector.extract_strided_slice %16 {offsets = [0, 0], sizes = [2, 128], strides = [1, 1]} : vector<16x128xf32> to vector<2x128xf32>
    %cst_19 = arith.constant dense<0.000000e+00> : vector<2x128xf32>
    %23 = tpu.matmul %20, %9, %cst_19 {dimension_numbers = #tpu.dot_dimension_numbers<[1], [0], [0], [1], [0, 0, 1, 1], [], []>} : vector<2x32xf32>, vector<32x128xf32>, vector<2x128xf32> -> vector<2x128xf32>
    %24 = arith.addf %22, %23 : vector<2x128xf32>
    %25 = vector.extract_strided_slice %24 {offsets = [0, 0], sizes = [2, 32], strides = [1, 1]} : vector<2x128xf32> to vector<2x32xf32>
    %26 = arith.negf %25 : vector<2x32xf32>
    %27 = math.exp %26 : vector<2x32xf32>
    %cst_20 = arith.constant 1.000000e+00 : f32
    %28 = vector.broadcast %cst_20 : f32 to vector<2x32xf32>
    %29 = arith.addf %28, %27 : vector<2x32xf32>
    %30 = arith.divf %28, %29 : vector<2x32xf32>
    %31 = vector.extract_strided_slice %24 {offsets = [0, 32], sizes = [2, 32], strides = [1, 1]} : vector<2x128xf32> to vector<2x32xf32>
    %32 = arith.negf %31 : vector<2x32xf32>
    %33 = math.exp %32 : vector<2x32xf32>
    %cst_21 = arith.constant 1.000000e+00 : f32
    %34 = vector.broadcast %cst_21 : f32 to vector<2x32xf32>
    %35 = arith.addf %34, %33 : vector<2x32xf32>
    %36 = arith.divf %34, %35 : vector<2x32xf32>
    %37 = vector.extract_strided_slice %24 {offsets = [0, 64], sizes = [2, 32], strides = [1, 1]} : vector<2x128xf32> to vector<2x32xf32>
    %38 = math.tanh %37 : vector<2x32xf32>
    %39 = vector.extract_strided_slice %24 {offsets = [0, 96], sizes = [2, 32], strides = [1, 1]} : vector<2x128xf32> to vector<2x32xf32>
    %40 = arith.negf %39 : vector<2x32xf32>
    %41 = math.exp %40 : vector<2x32xf32>
    %cst_22 = arith.constant 1.000000e+00 : f32
    %42 = vector.broadcast %cst_22 : f32 to vector<2x32xf32>
    %43 = arith.addf %42, %41 : vector<2x32xf32>
    %44 = arith.divf %42, %43 : vector<2x32xf32>
    %45 = arith.mulf %36, %21 : vector<2x32xf32>
    %46 = arith.mulf %30, %38 : vector<2x32xf32>
    %47 = arith.addf %45, %46 : vector<2x32xf32>
    %48 = math.tanh %47 : vector<2x32xf32>
    %49 = arith.mulf %44, %48 : vector<2x32xf32>
    %c0_23 = arith.constant 0 : index
    %c0_24 = arith.constant 0 : index
    %50 = vector.load %arg18[%c0_23, %c0_24] : memref<16x64xf32, #tpu.memory_space<vmem>>, vector<2x32xf32>
    tpu.vector_store %arg18[%c0_23, %c0_24], %49 {strides = array<i32>} : memref<16x64xf32, #tpu.memory_space<vmem>>, vector<2x32xf32>,
    %51 = vector.extract_strided_slice %16 {offsets = [2, 0], sizes = [2, 128], strides = [1, 1]} : vector<16x128xf32> to vector<2x128xf32>
    %cst_25 = arith.constant dense<0.000000e+00> : vector<2x128xf32>
    %52 = tpu.matmul %49, %9, %cst_25 {dimension_numbers = #tpu.dot_dimension_numbers<[1], [0], [0], [1], [0, 0, 1, 1], [], []>} : vector<2x32xf32>, vector<32x128xf32>, vector<2x128xf32> -> vector<2x128xf32>
    %53 = arith.addf %51, %52 : vector<2x128xf32>
    %54 = vector.extract_strided_slice %53 {offsets = [0, 0], sizes = [2, 32], strides = [1, 1]} : vector<2x128xf32> to vector<2x32xf32>
    %55 = arith.negf %54 : vector<2x32xf32>
    %56 = math.exp %55 : vector<2x32xf32>
    %cst_26 = arith.constant 1.000000e+00 : f32
    %57 = vector.broadcast %cst_26 : f32 to vector<2x32xf32>
    %58 = arith.addf %57, %56 : vector<2x32xf32>
    %59 = arith.divf %57, %58 : vector<2x32xf32>
    %60 = vector.extract_strided_slice %53 {offsets = [0, 32], sizes = [2, 32], strides = [1, 1]} : vector<2x128xf32> to vector<2x32xf32>
    %61 = arith.negf %60 : vector<2x32xf32>
    %62 = math.exp %61 : vector<2x32xf32>
    %cst_27 = arith.constant 1.000000e+00 : f32
    %63 = vector.broadcast %cst_27 : f32 to vector<2x32xf32>
    %64 = arith.addf %63, %62 : vector<2x32xf32>
    %65 = arith.divf %63, %64 : vector<2x32xf32>
    %66 = vector.extract_strided_slice %53 {offsets = [0, 64], sizes = [2, 32], strides = [1, 1]} : vector<2x128xf32> to vector<2x32xf32>
    %67 = math.tanh %66 : vector<2x32xf32>
    %68 = vector.extract_strided_slice %53 {offsets = [0, 96], sizes = [2, 32], strides = [1, 1]} : vector<2x128xf32> to vector<2x32xf32>
    %69 = arith.negf %68 : vector<2x32xf32>
    %70 = math.exp %69 : vector<2x32xf32>
    %cst_28 = arith.constant 1.000000e+00 : f32
    %71 = vector.broadcast %cst_28 : f32 to vector<2x32xf32>
    %72 = arith.addf %71, %70 : vector<2x32xf32>
    %73 = arith.divf %71, %72 : vector<2x32xf32>
    %74 = arith.mulf %65, %47 : vector<2x32xf32>
    %75 = arith.mulf %59, %67 : vector<2x32xf32>
    %76 = arith.addf %74, %75 : vector<2x32xf32>
    %77 = math.tanh %76 : vector<2x32xf32>
    %78 = arith.mulf %73, %77 : vector<2x32xf32>
    %c2 = arith.constant 2 : index
    %c0_29 = arith.constant 0 : index
    %79 = vector.load %arg18[%c2, %c0_29] : memref<16x64xf32, #tpu.memory_space<vmem>>, vector<2x32xf32>
    tpu.vector_store %arg18[%c2, %c0_29], %78 {strides = array<i32>} : memref<16x64xf32, #tpu.memory_space<vmem>>, vector<2x32xf32>,
    %80 = vector.extract_strided_slice %16 {offsets = [4, 0], sizes = [2, 128], strides = [1, 1]} : vector<16x128xf32> to vector<2x128xf32>
    %cst_30 = arith.constant dense<0.000000e+00> : vector<2x128xf32>
    %81 = tpu.matmul %78, %9, %cst_30 {dimension_numbers = #tpu.dot_dimension_numbers<[1], [0], [0], [1], [0, 0, 1, 1], [], []>} : vector<2x32xf32>, vector<32x128xf32>, vector<2x128xf32> -> vector<2x128xf32>
    %82 = arith.addf %80, %81 : vector<2x128xf32>
    %83 = vector.extract_strided_slice %82 {offsets = [0, 0], sizes = [2, 32], strides = [1, 1]} : vector<2x128xf32> to vector<2x32xf32>
    %84 = arith.negf %83 : vector<2x32xf32>
    %85 = math.exp %84 : vector<2x32xf32>
    %cst_31 = arith.constant 1.000000e+00 : f32
    %86 = vector.broadcast %cst_31 : f32 to vector<2x32xf32>
    %87 = arith.addf %86, %85 : vector<2x32xf32>
    %88 = arith.divf %86, %87 : vector<2x32xf32>
    %89 = vector.extract_strided_slice %82 {offsets = [0, 32], sizes = [2, 32], strides = [1, 1]} : vector<2x128xf32> to vector<2x32xf32>
    %90 = arith.negf %89 : vector<2x32xf32>
    %91 = math.exp %90 : vector<2x32xf32>
    %cst_32 = arith.constant 1.000000e+00 : f32
    %92 = vector.broadcast %cst_32 : f32 to vector<2x32xf32>
    %93 = arith.addf %92, %91 : vector<2x32xf32>
    %94 = arith.divf %92, %93 : vector<2x32xf32>
    %95 = vector.extract_strided_slice %82 {offsets = [0, 64], sizes = [2, 32], strides = [1, 1]} : vector<2x128xf32> to vector<2x32xf32>
    %96 = math.tanh %95 : vector<2x32xf32>
    %97 = vector.extract_strided_slice %82 {offsets = [0, 96], sizes = [2, 32], strides = [1, 1]} : vector<2x128xf32> to vector<2x32xf32>
    %98 = arith.negf %97 : vector<2x32xf32>
    %99 = math.exp %98 : vector<2x32xf32>
    %cst_33 = arith.constant 1.000000e+00 : f32
    %100 = vector.broadcast %cst_33 : f32 to vector<2x32xf32>
    %101 = arith.addf %100, %99 : vector<2x32xf32>
    %102 = arith.divf %100, %101 : vector<2x32xf32>
    %103 = arith.mulf %94, %76 : vector<2x32xf32>
    %104 = arith.mulf %88, %96 : vector<2x32xf32>
    %105 = arith.addf %103, %104 : vector<2x32xf32>
    %106 = math.tanh %105 : vector<2x32xf32>
    %107 = arith.mulf %102, %106 : vector<2x32xf32>
    %c4 = arith.constant 4 : index
    %c0_34 = arith.constant 0 : index
    %108 = vector.load %arg18[%c4, %c0_34] : memref<16x64xf32, #tpu.memory_space<vmem>>, vector<2x32xf32>
    tpu.vector_store %arg18[%c4, %c0_34], %107 {strides = array<i32>} : memref<16x64xf32, #tpu.memory_space<vmem>>, vector<2x32xf32>,
    %109 = vector.extract_strided_slice %16 {offsets = [6, 0], sizes = [2, 128], strides = [1, 1]} : vector<16x128xf32> to vector<2x128xf32>
    %cst_35 = arith.constant dense<0.000000e+00> : vector<2x128xf32>
    %110 = tpu.matmul %107, %9, %cst_35 {dimension_numbers = #tpu.dot_dimension_numbers<[1], [0], [0], [1], [0, 0, 1, 1], [], []>} : vector<2x32xf32>, vector<32x128xf32>, vector<2x128xf32> -> vector<2x128xf32>
    %111 = arith.addf %109, %110 : vector<2x128xf32>
    %112 = vector.extract_strided_slice %111 {offsets = [0, 0], sizes = [2, 32], strides = [1, 1]} : vector<2x128xf32> to vector<2x32xf32>
    %113 = arith.negf %112 : vector<2x32xf32>
    %114 = math.exp %113 : vector<2x32xf32>
    %cst_36 = arith.constant 1.000000e+00 : f32
    %115 = vector.broadcast %cst_36 : f32 to vector<2x32xf32>
    %116 = arith.addf %115, %114 : vector<2x32xf32>
    %117 = arith.divf %115, %116 : vector<2x32xf32>
    %118 = vector.extract_strided_slice %111 {offsets = [0, 32], sizes = [2, 32], strides = [1, 1]} : vector<2x128xf32> to vector<2x32xf32>
    %119 = arith.negf %118 : vector<2x32xf32>
    %120 = math.exp %119 : vector<2x32xf32>
    %cst_37 = arith.constant 1.000000e+00 : f32
    %121 = vector.broadcast %cst_37 : f32 to vector<2x32xf32>
    %122 = arith.addf %121, %120 : vector<2x32xf32>
    %123 = arith.divf %121, %122 : vector<2x32xf32>
    %124 = vector.extract_strided_slice %111 {offsets = [0, 64], sizes = [2, 32], strides = [1, 1]} : vector<2x128xf32> to vector<2x32xf32>
    %125 = math.tanh %124 : vector<2x32xf32>
    %126 = vector.extract_strided_slice %111 {offsets = [0, 96], sizes = [2, 32], strides = [1, 1]} : vector<2x128xf32> to vector<2x32xf32>
    %127 = arith.negf %126 : vector<2x32xf32>
    %128 = math.exp %127 : vector<2x32xf32>
    %cst_38 = arith.constant 1.000000e+00 : f32
    %129 = vector.broadcast %cst_38 : f32 to vector<2x32xf32>
    %130 = arith.addf %129, %128 : vector<2x32xf32>
    %131 = arith.divf %129, %130 : vector<2x32xf32>
    %132 = arith.mulf %123, %105 : vector<2x32xf32>
    %133 = arith.mulf %117, %125 : vector<2x32xf32>
    %134 = arith.addf %132, %133 : vector<2x32xf32>
    %135 = math.tanh %134 : vector<2x32xf32>
    %136 = arith.mulf %131, %135 : vector<2x32xf32>
    %c6 = arith.constant 6 : index
    %c0_39 = arith.constant 0 : index
    %137 = vector.load %arg18[%c6, %c0_39] : memref<16x64xf32, #tpu.memory_space<vmem>>, vector<2x32xf32>
    tpu.vector_store %arg18[%c6, %c0_39], %136 {strides = array<i32>} : memref<16x64xf32, #tpu.memory_space<vmem>>, vector<2x32xf32>,
    %138 = vector.extract_strided_slice %16 {offsets = [8, 0], sizes = [2, 128], strides = [1, 1]} : vector<16x128xf32> to vector<2x128xf32>
    %cst_40 = arith.constant dense<0.000000e+00> : vector<2x128xf32>
    %139 = tpu.matmul %136, %9, %cst_40 {dimension_numbers = #tpu.dot_dimension_numbers<[1], [0], [0], [1], [0, 0, 1, 1], [], []>} : vector<2x32xf32>, vector<32x128xf32>, vector<2x128xf32> -> vector<2x128xf32>
    %140 = arith.addf %138, %139 : vector<2x128xf32>
    %141 = vector.extract_strided_slice %140 {offsets = [0, 0], sizes = [2, 32], strides = [1, 1]} : vector<2x128xf32> to vector<2x32xf32>
    %142 = arith.negf %141 : vector<2x32xf32>
    %143 = math.exp %142 : vector<2x32xf32>
    %cst_41 = arith.constant 1.000000e+00 : f32
    %144 = vector.broadcast %cst_41 : f32 to vector<2x32xf32>
    %145 = arith.addf %144, %143 : vector<2x32xf32>
    %146 = arith.divf %144, %145 : vector<2x32xf32>
    %147 = vector.extract_strided_slice %140 {offsets = [0, 32], sizes = [2, 32], strides = [1, 1]} : vector<2x128xf32> to vector<2x32xf32>
    %148 = arith.negf %147 : vector<2x32xf32>
    %149 = math.exp %148 : vector<2x32xf32>
    %cst_42 = arith.constant 1.000000e+00 : f32
    %150 = vector.broadcast %cst_42 : f32 to vector<2x32xf32>
    %151 = arith.addf %150, %149 : vector<2x32xf32>
    %152 = arith.divf %150, %151 : vector<2x32xf32>
    %153 = vector.extract_strided_slice %140 {offsets = [0, 64], sizes = [2, 32], strides = [1, 1]} : vector<2x128xf32> to vector<2x32xf32>
    %154 = math.tanh %153 : vector<2x32xf32>
    %155 = vector.extract_strided_slice %140 {offsets = [0, 96], sizes = [2, 32], strides = [1, 1]} : vector<2x128xf32> to vector<2x32xf32>
    %156 = arith.negf %155 : vector<2x32xf32>
    %157 = math.exp %156 : vector<2x32xf32>
    %cst_43 = arith.constant 1.000000e+00 : f32
    %158 = vector.broadcast %cst_43 : f32 to vector<2x32xf32>
    %159 = arith.addf %158, %157 : vector<2x32xf32>
    %160 = arith.divf %158, %159 : vector<2x32xf32>
    %161 = arith.mulf %152, %134 : vector<2x32xf32>
    %162 = arith.mulf %146, %154 : vector<2x32xf32>
    %163 = arith.addf %161, %162 : vector<2x32xf32>
    %164 = math.tanh %163 : vector<2x32xf32>
    %165 = arith.mulf %160, %164 : vector<2x32xf32>
    %c8 = arith.constant 8 : index
    %c0_44 = arith.constant 0 : index
    %166 = vector.load %arg18[%c8, %c0_44] : memref<16x64xf32, #tpu.memory_space<vmem>>, vector<2x32xf32>
    tpu.vector_store %arg18[%c8, %c0_44], %165 {strides = array<i32>} : memref<16x64xf32, #tpu.memory_space<vmem>>, vector<2x32xf32>,
    %167 = vector.extract_strided_slice %16 {offsets = [10, 0], sizes = [2, 128], strides = [1, 1]} : vector<16x128xf32> to vector<2x128xf32>
    %cst_45 = arith.constant dense<0.000000e+00> : vector<2x128xf32>
    %168 = tpu.matmul %165, %9, %cst_45 {dimension_numbers = #tpu.dot_dimension_numbers<[1], [0], [0], [1], [0, 0, 1, 1], [], []>} : vector<2x32xf32>, vector<32x128xf32>, vector<2x128xf32> -> vector<2x128xf32>
    %169 = arith.addf %167, %168 : vector<2x128xf32>
    %170 = vector.extract_strided_slice %169 {offsets = [0, 0], sizes = [2, 32], strides = [1, 1]} : vector<2x128xf32> to vector<2x32xf32>
    %171 = arith.negf %170 : vector<2x32xf32>
    %172 = math.exp %171 : vector<2x32xf32>
    %cst_46 = arith.constant 1.000000e+00 : f32
    %173 = vector.broadcast %cst_46 : f32 to vector<2x32xf32>
    %174 = arith.addf %173, %172 : vector<2x32xf32>
    %175 = arith.divf %173, %174 : vector<2x32xf32>
    %176 = vector.extract_strided_slice %169 {offsets = [0, 32], sizes = [2, 32], strides = [1, 1]} : vector<2x128xf32> to vector<2x32xf32>
    %177 = arith.negf %176 : vector<2x32xf32>
    %178 = math.exp %177 : vector<2x32xf32>
    %cst_47 = arith.constant 1.000000e+00 : f32
    %179 = vector.broadcast %cst_47 : f32 to vector<2x32xf32>
    %180 = arith.addf %179, %178 : vector<2x32xf32>
    %181 = arith.divf %179, %180 : vector<2x32xf32>
    %182 = vector.extract_strided_slice %169 {offsets = [0, 64], sizes = [2, 32], strides = [1, 1]} : vector<2x128xf32> to vector<2x32xf32>
    %183 = math.tanh %182 : vector<2x32xf32>
    %184 = vector.extract_strided_slice %169 {offsets = [0, 96], sizes = [2, 32], strides = [1, 1]} : vector<2x128xf32> to vector<2x32xf32>
    %185 = arith.negf %184 : vector<2x32xf32>
    %186 = math.exp %185 : vector<2x32xf32>
    %cst_48 = arith.constant 1.000000e+00 : f32
    %187 = vector.broadcast %cst_48 : f32 to vector<2x32xf32>
    %188 = arith.addf %187, %186 : vector<2x32xf32>
    %189 = arith.divf %187, %188 : vector<2x32xf32>
    %190 = arith.mulf %181, %163 : vector<2x32xf32>
    %191 = arith.mulf %175, %183 : vector<2x32xf32>
    %192 = arith.addf %190, %191 : vector<2x32xf32>
    %193 = math.tanh %192 : vector<2x32xf32>
    %194 = arith.mulf %189, %193 : vector<2x32xf32>
    %c10 = arith.constant 10 : index
    %c0_49 = arith.constant 0 : index
    %195 = vector.load %arg18[%c10, %c0_49] : memref<16x64xf32, #tpu.memory_space<vmem>>, vector<2x32xf32>
    tpu.vector_store %arg18[%c10, %c0_49], %194 {strides = array<i32>} : memref<16x64xf32, #tpu.memory_space<vmem>>, vector<2x32xf32>,
    %196 = vector.extract_strided_slice %16 {offsets = [12, 0], sizes = [2, 128], strides = [1, 1]} : vector<16x128xf32> to vector<2x128xf32>
    %cst_50 = arith.constant dense<0.000000e+00> : vector<2x128xf32>
    %197 = tpu.matmul %194, %9, %cst_50 {dimension_numbers = #tpu.dot_dimension_numbers<[1], [0], [0], [1], [0, 0, 1, 1], [], []>} : vector<2x32xf32>, vector<32x128xf32>, vector<2x128xf32> -> vector<2x128xf32>
    %198 = arith.addf %196, %197 : vector<2x128xf32>
    %199 = vector.extract_strided_slice %198 {offsets = [0, 0], sizes = [2, 32], strides = [1, 1]} : vector<2x128xf32> to vector<2x32xf32>
    %200 = arith.negf %199 : vector<2x32xf32>
    %201 = math.exp %200 : vector<2x32xf32>
    %cst_51 = arith.constant 1.000000e+00 : f32
    %202 = vector.broadcast %cst_51 : f32 to vector<2x32xf32>
    %203 = arith.addf %202, %201 : vector<2x32xf32>
    %204 = arith.divf %202, %203 : vector<2x32xf32>
    %205 = vector.extract_strided_slice %198 {offsets = [0, 32], sizes = [2, 32], strides = [1, 1]} : vector<2x128xf32> to vector<2x32xf32>
    %206 = arith.negf %205 : vector<2x32xf32>
    %207 = math.exp %206 : vector<2x32xf32>
    %cst_52 = arith.constant 1.000000e+00 : f32
    %208 = vector.broadcast %cst_52 : f32 to vector<2x32xf32>
    %209 = arith.addf %208, %207 : vector<2x32xf32>
    %210 = arith.divf %208, %209 : vector<2x32xf32>
    %211 = vector.extract_strided_slice %198 {offsets = [0, 64], sizes = [2, 32], strides = [1, 1]} : vector<2x128xf32> to vector<2x32xf32>
    %212 = math.tanh %211 : vector<2x32xf32>
    %213 = vector.extract_strided_slice %198 {offsets = [0, 96], sizes = [2, 32], strides = [1, 1]} : vector<2x128xf32> to vector<2x32xf32>
    %214 = arith.negf %213 : vector<2x32xf32>
    %215 = math.exp %214 : vector<2x32xf32>
    %cst_53 = arith.constant 1.000000e+00 : f32
    %216 = vector.broadcast %cst_53 : f32 to vector<2x32xf32>
    %217 = arith.addf %216, %215 : vector<2x32xf32>
    %218 = arith.divf %216, %217 : vector<2x32xf32>
    %219 = arith.mulf %210, %192 : vector<2x32xf32>
    %220 = arith.mulf %204, %212 : vector<2x32xf32>
    %221 = arith.addf %219, %220 : vector<2x32xf32>
    %222 = math.tanh %221 : vector<2x32xf32>
    %223 = arith.mulf %218, %222 : vector<2x32xf32>
    %c12 = arith.constant 12 : index
    %c0_54 = arith.constant 0 : index
    %224 = vector.load %arg18[%c12, %c0_54] : memref<16x64xf32, #tpu.memory_space<vmem>>, vector<2x32xf32>
    tpu.vector_store %arg18[%c12, %c0_54], %223 {strides = array<i32>} : memref<16x64xf32, #tpu.memory_space<vmem>>, vector<2x32xf32>,
    %225 = vector.extract_strided_slice %16 {offsets = [14, 0], sizes = [2, 128], strides = [1, 1]} : vector<16x128xf32> to vector<2x128xf32>
    %cst_55 = arith.constant dense<0.000000e+00> : vector<2x128xf32>
    %226 = tpu.matmul %223, %9, %cst_55 {dimension_numbers = #tpu.dot_dimension_numbers<[1], [0], [0], [1], [0, 0, 1, 1], [], []>} : vector<2x32xf32>, vector<32x128xf32>, vector<2x128xf32> -> vector<2x128xf32>
    %227 = arith.addf %225, %226 : vector<2x128xf32>
    %228 = vector.extract_strided_slice %227 {offsets = [0, 0], sizes = [2, 32], strides = [1, 1]} : vector<2x128xf32> to vector<2x32xf32>
    %229 = arith.negf %228 : vector<2x32xf32>
    %230 = math.exp %229 : vector<2x32xf32>
    %cst_56 = arith.constant 1.000000e+00 : f32
    %231 = vector.broadcast %cst_56 : f32 to vector<2x32xf32>
    %232 = arith.addf %231, %230 : vector<2x32xf32>
    %233 = arith.divf %231, %232 : vector<2x32xf32>
    %234 = vector.extract_strided_slice %227 {offsets = [0, 32], sizes = [2, 32], strides = [1, 1]} : vector<2x128xf32> to vector<2x32xf32>
    %235 = arith.negf %234 : vector<2x32xf32>
    %236 = math.exp %235 : vector<2x32xf32>
    %cst_57 = arith.constant 1.000000e+00 : f32
    %237 = vector.broadcast %cst_57 : f32 to vector<2x32xf32>
    %238 = arith.addf %237, %236 : vector<2x32xf32>
    %239 = arith.divf %237, %238 : vector<2x32xf32>
    %240 = vector.extract_strided_slice %227 {offsets = [0, 64], sizes = [2, 32], strides = [1, 1]} : vector<2x128xf32> to vector<2x32xf32>
    %241 = math.tanh %240 : vector<2x32xf32>
    %242 = vector.extract_strided_slice %227 {offsets = [0, 96], sizes = [2, 32], strides = [1, 1]} : vector<2x128xf32> to vector<2x32xf32>
    %243 = arith.negf %242 : vector<2x32xf32>
    %244 = math.exp %243 : vector<2x32xf32>
    %cst_58 = arith.constant 1.000000e+00 : f32
    %245 = vector.broadcast %cst_58 : f32 to vector<2x32xf32>
    %246 = arith.addf %245, %244 : vector<2x32xf32>
    %247 = arith.divf %245, %246 : vector<2x32xf32>
    %248 = arith.mulf %239, %221 : vector<2x32xf32>
    %249 = arith.mulf %233, %241 : vector<2x32xf32>
    %250 = arith.addf %248, %249 : vector<2x32xf32>
    %251 = math.tanh %250 : vector<2x32xf32>
    %252 = arith.mulf %247, %251 : vector<2x32xf32>
    %c14 = arith.constant 14 : index
    %c0_59 = arith.constant 0 : index
    %253 = vector.load %arg18[%c14, %c0_59] : memref<16x64xf32, #tpu.memory_space<vmem>>, vector<2x32xf32>
    tpu.vector_store %arg18[%c14, %c0_59], %252 {strides = array<i32>} : memref<16x64xf32, #tpu.memory_space<vmem>>, vector<2x32xf32>,
    %cst_60 = arith.constant 0.000000e+00 : f32
    %254 = vector.broadcast %cst_60 : f32 to vector<2x32xf32>
    %cst_61 = arith.constant 0.000000e+00 : f32
    %255 = vector.broadcast %cst_61 : f32 to vector<2x32xf32>
    %256 = vector.extract_strided_slice %19 {offsets = [14, 0], sizes = [2, 128], strides = [1, 1]} : vector<16x128xf32> to vector<2x128xf32>
    %cst_62 = arith.constant dense<0.000000e+00> : vector<2x128xf32>
    %257 = tpu.matmul %254, %12, %cst_62 {dimension_numbers = #tpu.dot_dimension_numbers<[1], [0], [0], [1], [0, 0, 1, 1], [], []>} : vector<2x32xf32>, vector<32x128xf32>, vector<2x128xf32> -> vector<2x128xf32>
    %258 = arith.addf %256, %257 : vector<2x128xf32>
    %259 = vector.extract_strided_slice %258 {offsets = [0, 0], sizes = [2, 32], strides = [1, 1]} : vector<2x128xf32> to vector<2x32xf32>
    %260 = arith.negf %259 : vector<2x32xf32>
    %261 = math.exp %260 : vector<2x32xf32>
    %cst_63 = arith.constant 1.000000e+00 : f32
    %262 = vector.broadcast %cst_63 : f32 to vector<2x32xf32>
    %263 = arith.addf %262, %261 : vector<2x32xf32>
    %264 = arith.divf %262, %263 : vector<2x32xf32>
    %265 = vector.extract_strided_slice %258 {offsets = [0, 32], sizes = [2, 32], strides = [1, 1]} : vector<2x128xf32> to vector<2x32xf32>
    %266 = arith.negf %265 : vector<2x32xf32>
    %267 = math.exp %266 : vector<2x32xf32>
    %cst_64 = arith.constant 1.000000e+00 : f32
    %268 = vector.broadcast %cst_64 : f32 to vector<2x32xf32>
    %269 = arith.addf %268, %267 : vector<2x32xf32>
    %270 = arith.divf %268, %269 : vector<2x32xf32>
    %271 = vector.extract_strided_slice %258 {offsets = [0, 64], sizes = [2, 32], strides = [1, 1]} : vector<2x128xf32> to vector<2x32xf32>
    %272 = math.tanh %271 : vector<2x32xf32>
    %273 = vector.extract_strided_slice %258 {offsets = [0, 96], sizes = [2, 32], strides = [1, 1]} : vector<2x128xf32> to vector<2x32xf32>
    %274 = arith.negf %273 : vector<2x32xf32>
    %275 = math.exp %274 : vector<2x32xf32>
    %cst_65 = arith.constant 1.000000e+00 : f32
    %276 = vector.broadcast %cst_65 : f32 to vector<2x32xf32>
    %277 = arith.addf %276, %275 : vector<2x32xf32>
    %278 = arith.divf %276, %277 : vector<2x32xf32>
    %279 = arith.mulf %270, %255 : vector<2x32xf32>
    %280 = arith.mulf %264, %272 : vector<2x32xf32>
    %281 = arith.addf %279, %280 : vector<2x32xf32>
    %282 = math.tanh %281 : vector<2x32xf32>
    %283 = arith.mulf %278, %282 : vector<2x32xf32>
    %c14_66 = arith.constant 14 : index
    %c32 = arith.constant 32 : index
    %284 = vector.load %arg18[%c14_66, %c32] : memref<16x64xf32, #tpu.memory_space<vmem>>, vector<2x32xf32>
    tpu.vector_store %arg18[%c14_66, %c32], %283 {strides = array<i32>} : memref<16x64xf32, #tpu.memory_space<vmem>>, vector<2x32xf32>,
    %285 = vector.extract_strided_slice %19 {offsets = [12, 0], sizes = [2, 128], strides = [1, 1]} : vector<16x128xf32> to vector<2x128xf32>
    %cst_67 = arith.constant dense<0.000000e+00> : vector<2x128xf32>
    %286 = tpu.matmul %283, %12, %cst_67 {dimension_numbers = #tpu.dot_dimension_numbers<[1], [0], [0], [1], [0, 0, 1, 1], [], []>} : vector<2x32xf32>, vector<32x128xf32>, vector<2x128xf32> -> vector<2x128xf32>
    %287 = arith.addf %285, %286 : vector<2x128xf32>
    %288 = vector.extract_strided_slice %287 {offsets = [0, 0], sizes = [2, 32], strides = [1, 1]} : vector<2x128xf32> to vector<2x32xf32>
    %289 = arith.negf %288 : vector<2x32xf32>
    %290 = math.exp %289 : vector<2x32xf32>
    %cst_68 = arith.constant 1.000000e+00 : f32
    %291 = vector.broadcast %cst_68 : f32 to vector<2x32xf32>
    %292 = arith.addf %291, %290 : vector<2x32xf32>
    %293 = arith.divf %291, %292 : vector<2x32xf32>
    %294 = vector.extract_strided_slice %287 {offsets = [0, 32], sizes = [2, 32], strides = [1, 1]} : vector<2x128xf32> to vector<2x32xf32>
    %295 = arith.negf %294 : vector<2x32xf32>
    %296 = math.exp %295 : vector<2x32xf32>
    %cst_69 = arith.constant 1.000000e+00 : f32
    %297 = vector.broadcast %cst_69 : f32 to vector<2x32xf32>
    %298 = arith.addf %297, %296 : vector<2x32xf32>
    %299 = arith.divf %297, %298 : vector<2x32xf32>
    %300 = vector.extract_strided_slice %287 {offsets = [0, 64], sizes = [2, 32], strides = [1, 1]} : vector<2x128xf32> to vector<2x32xf32>
    %301 = math.tanh %300 : vector<2x32xf32>
    %302 = vector.extract_strided_slice %287 {offsets = [0, 96], sizes = [2, 32], strides = [1, 1]} : vector<2x128xf32> to vector<2x32xf32>
    %303 = arith.negf %302 : vector<2x32xf32>
    %304 = math.exp %303 : vector<2x32xf32>
    %cst_70 = arith.constant 1.000000e+00 : f32
    %305 = vector.broadcast %cst_70 : f32 to vector<2x32xf32>
    %306 = arith.addf %305, %304 : vector<2x32xf32>
    %307 = arith.divf %305, %306 : vector<2x32xf32>
    %308 = arith.mulf %299, %281 : vector<2x32xf32>
    %309 = arith.mulf %293, %301 : vector<2x32xf32>
    %310 = arith.addf %308, %309 : vector<2x32xf32>
    %311 = math.tanh %310 : vector<2x32xf32>
    %312 = arith.mulf %307, %311 : vector<2x32xf32>
    %c12_71 = arith.constant 12 : index
    %c32_72 = arith.constant 32 : index
    %313 = vector.load %arg18[%c12_71, %c32_72] : memref<16x64xf32, #tpu.memory_space<vmem>>, vector<2x32xf32>
    tpu.vector_store %arg18[%c12_71, %c32_72], %312 {strides = array<i32>} : memref<16x64xf32, #tpu.memory_space<vmem>>, vector<2x32xf32>,
    %314 = vector.extract_strided_slice %19 {offsets = [10, 0], sizes = [2, 128], strides = [1, 1]} : vector<16x128xf32> to vector<2x128xf32>
    %cst_73 = arith.constant dense<0.000000e+00> : vector<2x128xf32>
    %315 = tpu.matmul %312, %12, %cst_73 {dimension_numbers = #tpu.dot_dimension_numbers<[1], [0], [0], [1], [0, 0, 1, 1], [], []>} : vector<2x32xf32>, vector<32x128xf32>, vector<2x128xf32> -> vector<2x128xf32>
    %316 = arith.addf %314, %315 : vector<2x128xf32>
    %317 = vector.extract_strided_slice %316 {offsets = [0, 0], sizes = [2, 32], strides = [1, 1]} : vector<2x128xf32> to vector<2x32xf32>
    %318 = arith.negf %317 : vector<2x32xf32>
    %319 = math.exp %318 : vector<2x32xf32>
    %cst_74 = arith.constant 1.000000e+00 : f32
    %320 = vector.broadcast %cst_74 : f32 to vector<2x32xf32>
    %321 = arith.addf %320, %319 : vector<2x32xf32>
    %322 = arith.divf %320, %321 : vector<2x32xf32>
    %323 = vector.extract_strided_slice %316 {offsets = [0, 32], sizes = [2, 32], strides = [1, 1]} : vector<2x128xf32> to vector<2x32xf32>
    %324 = arith.negf %323 : vector<2x32xf32>
    %325 = math.exp %324 : vector<2x32xf32>
    %cst_75 = arith.constant 1.000000e+00 : f32
    %326 = vector.broadcast %cst_75 : f32 to vector<2x32xf32>
    %327 = arith.addf %326, %325 : vector<2x32xf32>
    %328 = arith.divf %326, %327 : vector<2x32xf32>
    %329 = vector.extract_strided_slice %316 {offsets = [0, 64], sizes = [2, 32], strides = [1, 1]} : vector<2x128xf32> to vector<2x32xf32>
    %330 = math.tanh %329 : vector<2x32xf32>
    %331 = vector.extract_strided_slice %316 {offsets = [0, 96], sizes = [2, 32], strides = [1, 1]} : vector<2x128xf32> to vector<2x32xf32>
    %332 = arith.negf %331 : vector<2x32xf32>
    %333 = math.exp %332 : vector<2x32xf32>
    %cst_76 = arith.constant 1.000000e+00 : f32
    %334 = vector.broadcast %cst_76 : f32 to vector<2x32xf32>
    %335 = arith.addf %334, %333 : vector<2x32xf32>
    %336 = arith.divf %334, %335 : vector<2x32xf32>
    %337 = arith.mulf %328, %310 : vector<2x32xf32>
    %338 = arith.mulf %322, %330 : vector<2x32xf32>
    %339 = arith.addf %337, %338 : vector<2x32xf32>
    %340 = math.tanh %339 : vector<2x32xf32>
    %341 = arith.mulf %336, %340 : vector<2x32xf32>
    %c10_77 = arith.constant 10 : index
    %c32_78 = arith.constant 32 : index
    %342 = vector.load %arg18[%c10_77, %c32_78] : memref<16x64xf32, #tpu.memory_space<vmem>>, vector<2x32xf32>
    tpu.vector_store %arg18[%c10_77, %c32_78], %341 {strides = array<i32>} : memref<16x64xf32, #tpu.memory_space<vmem>>, vector<2x32xf32>,
    %343 = vector.extract_strided_slice %19 {offsets = [8, 0], sizes = [2, 128], strides = [1, 1]} : vector<16x128xf32> to vector<2x128xf32>
    %cst_79 = arith.constant dense<0.000000e+00> : vector<2x128xf32>
    %344 = tpu.matmul %341, %12, %cst_79 {dimension_numbers = #tpu.dot_dimension_numbers<[1], [0], [0], [1], [0, 0, 1, 1], [], []>} : vector<2x32xf32>, vector<32x128xf32>, vector<2x128xf32> -> vector<2x128xf32>
    %345 = arith.addf %343, %344 : vector<2x128xf32>
    %346 = vector.extract_strided_slice %345 {offsets = [0, 0], sizes = [2, 32], strides = [1, 1]} : vector<2x128xf32> to vector<2x32xf32>
    %347 = arith.negf %346 : vector<2x32xf32>
    %348 = math.exp %347 : vector<2x32xf32>
    %cst_80 = arith.constant 1.000000e+00 : f32
    %349 = vector.broadcast %cst_80 : f32 to vector<2x32xf32>
    %350 = arith.addf %349, %348 : vector<2x32xf32>
    %351 = arith.divf %349, %350 : vector<2x32xf32>
    %352 = vector.extract_strided_slice %345 {offsets = [0, 32], sizes = [2, 32], strides = [1, 1]} : vector<2x128xf32> to vector<2x32xf32>
    %353 = arith.negf %352 : vector<2x32xf32>
    %354 = math.exp %353 : vector<2x32xf32>
    %cst_81 = arith.constant 1.000000e+00 : f32
    %355 = vector.broadcast %cst_81 : f32 to vector<2x32xf32>
    %356 = arith.addf %355, %354 : vector<2x32xf32>
    %357 = arith.divf %355, %356 : vector<2x32xf32>
    %358 = vector.extract_strided_slice %345 {offsets = [0, 64], sizes = [2, 32], strides = [1, 1]} : vector<2x128xf32> to vector<2x32xf32>
    %359 = math.tanh %358 : vector<2x32xf32>
    %360 = vector.extract_strided_slice %345 {offsets = [0, 96], sizes = [2, 32], strides = [1, 1]} : vector<2x128xf32> to vector<2x32xf32>
    %361 = arith.negf %360 : vector<2x32xf32>
    %362 = math.exp %361 : vector<2x32xf32>
    %cst_82 = arith.constant 1.000000e+00 : f32
    %363 = vector.broadcast %cst_82 : f32 to vector<2x32xf32>
    %364 = arith.addf %363, %362 : vector<2x32xf32>
    %365 = arith.divf %363, %364 : vector<2x32xf32>
    %366 = arith.mulf %357, %339 : vector<2x32xf32>
    %367 = arith.mulf %351, %359 : vector<2x32xf32>
    %368 = arith.addf %366, %367 : vector<2x32xf32>
    %369 = math.tanh %368 : vector<2x32xf32>
    %370 = arith.mulf %365, %369 : vector<2x32xf32>
    %c8_83 = arith.constant 8 : index
    %c32_84 = arith.constant 32 : index
    %371 = vector.load %arg18[%c8_83, %c32_84] : memref<16x64xf32, #tpu.memory_space<vmem>>, vector<2x32xf32>
    tpu.vector_store %arg18[%c8_83, %c32_84], %370 {strides = array<i32>} : memref<16x64xf32, #tpu.memory_space<vmem>>, vector<2x32xf32>,
    %372 = vector.extract_strided_slice %19 {offsets = [6, 0], sizes = [2, 128], strides = [1, 1]} : vector<16x128xf32> to vector<2x128xf32>
    %cst_85 = arith.constant dense<0.000000e+00> : vector<2x128xf32>
    %373 = tpu.matmul %370, %12, %cst_85 {dimension_numbers = #tpu.dot_dimension_numbers<[1], [0], [0], [1], [0, 0, 1, 1], [], []>} : vector<2x32xf32>, vector<32x128xf32>, vector<2x128xf32> -> vector<2x128xf32>
    %374 = arith.addf %372, %373 : vector<2x128xf32>
    %375 = vector.extract_strided_slice %374 {offsets = [0, 0], sizes = [2, 32], strides = [1, 1]} : vector<2x128xf32> to vector<2x32xf32>
    %376 = arith.negf %375 : vector<2x32xf32>
    %377 = math.exp %376 : vector<2x32xf32>
    %cst_86 = arith.constant 1.000000e+00 : f32
    %378 = vector.broadcast %cst_86 : f32 to vector<2x32xf32>
    %379 = arith.addf %378, %377 : vector<2x32xf32>
    %380 = arith.divf %378, %379 : vector<2x32xf32>
    %381 = vector.extract_strided_slice %374 {offsets = [0, 32], sizes = [2, 32], strides = [1, 1]} : vector<2x128xf32> to vector<2x32xf32>
    %382 = arith.negf %381 : vector<2x32xf32>
    %383 = math.exp %382 : vector<2x32xf32>
    %cst_87 = arith.constant 1.000000e+00 : f32
    %384 = vector.broadcast %cst_87 : f32 to vector<2x32xf32>
    %385 = arith.addf %384, %383 : vector<2x32xf32>
    %386 = arith.divf %384, %385 : vector<2x32xf32>
    %387 = vector.extract_strided_slice %374 {offsets = [0, 64], sizes = [2, 32], strides = [1, 1]} : vector<2x128xf32> to vector<2x32xf32>
    %388 = math.tanh %387 : vector<2x32xf32>
    %389 = vector.extract_strided_slice %374 {offsets = [0, 96], sizes = [2, 32], strides = [1, 1]} : vector<2x128xf32> to vector<2x32xf32>
    %390 = arith.negf %389 : vector<2x32xf32>
    %391 = math.exp %390 : vector<2x32xf32>
    %cst_88 = arith.constant 1.000000e+00 : f32
    %392 = vector.broadcast %cst_88 : f32 to vector<2x32xf32>
    %393 = arith.addf %392, %391 : vector<2x32xf32>
    %394 = arith.divf %392, %393 : vector<2x32xf32>
    %395 = arith.mulf %386, %368 : vector<2x32xf32>
    %396 = arith.mulf %380, %388 : vector<2x32xf32>
    %397 = arith.addf %395, %396 : vector<2x32xf32>
    %398 = math.tanh %397 : vector<2x32xf32>
    %399 = arith.mulf %394, %398 : vector<2x32xf32>
    %c6_89 = arith.constant 6 : index
    %c32_90 = arith.constant 32 : index
    %400 = vector.load %arg18[%c6_89, %c32_90] : memref<16x64xf32, #tpu.memory_space<vmem>>, vector<2x32xf32>
    tpu.vector_store %arg18[%c6_89, %c32_90], %399 {strides = array<i32>} : memref<16x64xf32, #tpu.memory_space<vmem>>, vector<2x32xf32>,
    %401 = vector.extract_strided_slice %19 {offsets = [4, 0], sizes = [2, 128], strides = [1, 1]} : vector<16x128xf32> to vector<2x128xf32>
    %cst_91 = arith.constant dense<0.000000e+00> : vector<2x128xf32>
    %402 = tpu.matmul %399, %12, %cst_91 {dimension_numbers = #tpu.dot_dimension_numbers<[1], [0], [0], [1], [0, 0, 1, 1], [], []>} : vector<2x32xf32>, vector<32x128xf32>, vector<2x128xf32> -> vector<2x128xf32>
    %403 = arith.addf %401, %402 : vector<2x128xf32>
    %404 = vector.extract_strided_slice %403 {offsets = [0, 0], sizes = [2, 32], strides = [1, 1]} : vector<2x128xf32> to vector<2x32xf32>
    %405 = arith.negf %404 : vector<2x32xf32>
    %406 = math.exp %405 : vector<2x32xf32>
    %cst_92 = arith.constant 1.000000e+00 : f32
    %407 = vector.broadcast %cst_92 : f32 to vector<2x32xf32>
    %408 = arith.addf %407, %406 : vector<2x32xf32>
    %409 = arith.divf %407, %408 : vector<2x32xf32>
    %410 = vector.extract_strided_slice %403 {offsets = [0, 32], sizes = [2, 32], strides = [1, 1]} : vector<2x128xf32> to vector<2x32xf32>
    %411 = arith.negf %410 : vector<2x32xf32>
    %412 = math.exp %411 : vector<2x32xf32>
    %cst_93 = arith.constant 1.000000e+00 : f32
    %413 = vector.broadcast %cst_93 : f32 to vector<2x32xf32>
    %414 = arith.addf %413, %412 : vector<2x32xf32>
    %415 = arith.divf %413, %414 : vector<2x32xf32>
    %416 = vector.extract_strided_slice %403 {offsets = [0, 64], sizes = [2, 32], strides = [1, 1]} : vector<2x128xf32> to vector<2x32xf32>
    %417 = math.tanh %416 : vector<2x32xf32>
    %418 = vector.extract_strided_slice %403 {offsets = [0, 96], sizes = [2, 32], strides = [1, 1]} : vector<2x128xf32> to vector<2x32xf32>
    %419 = arith.negf %418 : vector<2x32xf32>
    %420 = math.exp %419 : vector<2x32xf32>
    %cst_94 = arith.constant 1.000000e+00 : f32
    %421 = vector.broadcast %cst_94 : f32 to vector<2x32xf32>
    %422 = arith.addf %421, %420 : vector<2x32xf32>
    %423 = arith.divf %421, %422 : vector<2x32xf32>
    %424 = arith.mulf %415, %397 : vector<2x32xf32>
    %425 = arith.mulf %409, %417 : vector<2x32xf32>
    %426 = arith.addf %424, %425 : vector<2x32xf32>
    %427 = math.tanh %426 : vector<2x32xf32>
    %428 = arith.mulf %423, %427 : vector<2x32xf32>
    %c4_95 = arith.constant 4 : index
    %c32_96 = arith.constant 32 : index
    %429 = vector.load %arg18[%c4_95, %c32_96] : memref<16x64xf32, #tpu.memory_space<vmem>>, vector<2x32xf32>
    tpu.vector_store %arg18[%c4_95, %c32_96], %428 {strides = array<i32>} : memref<16x64xf32, #tpu.memory_space<vmem>>, vector<2x32xf32>,
    %430 = vector.extract_strided_slice %19 {offsets = [2, 0], sizes = [2, 128], strides = [1, 1]} : vector<16x128xf32> to vector<2x128xf32>
    %cst_97 = arith.constant dense<0.000000e+00> : vector<2x128xf32>
    %431 = tpu.matmul %428, %12, %cst_97 {dimension_numbers = #tpu.dot_dimension_numbers<[1], [0], [0], [1], [0, 0, 1, 1], [], []>} : vector<2x32xf32>, vector<32x128xf32>, vector<2x128xf32> -> vector<2x128xf32>
    %432 = arith.addf %430, %431 : vector<2x128xf32>
    %433 = vector.extract_strided_slice %432 {offsets = [0, 0], sizes = [2, 32], strides = [1, 1]} : vector<2x128xf32> to vector<2x32xf32>
    %434 = arith.negf %433 : vector<2x32xf32>
    %435 = math.exp %434 : vector<2x32xf32>
    %cst_98 = arith.constant 1.000000e+00 : f32
    %436 = vector.broadcast %cst_98 : f32 to vector<2x32xf32>
    %437 = arith.addf %436, %435 : vector<2x32xf32>
    %438 = arith.divf %436, %437 : vector<2x32xf32>
    %439 = vector.extract_strided_slice %432 {offsets = [0, 32], sizes = [2, 32], strides = [1, 1]} : vector<2x128xf32> to vector<2x32xf32>
    %440 = arith.negf %439 : vector<2x32xf32>
    %441 = math.exp %440 : vector<2x32xf32>
    %cst_99 = arith.constant 1.000000e+00 : f32
    %442 = vector.broadcast %cst_99 : f32 to vector<2x32xf32>
    %443 = arith.addf %442, %441 : vector<2x32xf32>
    %444 = arith.divf %442, %443 : vector<2x32xf32>
    %445 = vector.extract_strided_slice %432 {offsets = [0, 64], sizes = [2, 32], strides = [1, 1]} : vector<2x128xf32> to vector<2x32xf32>
    %446 = math.tanh %445 : vector<2x32xf32>
    %447 = vector.extract_strided_slice %432 {offsets = [0, 96], sizes = [2, 32], strides = [1, 1]} : vector<2x128xf32> to vector<2x32xf32>
    %448 = arith.negf %447 : vector<2x32xf32>
    %449 = math.exp %448 : vector<2x32xf32>
    %cst_100 = arith.constant 1.000000e+00 : f32
    %450 = vector.broadcast %cst_100 : f32 to vector<2x32xf32>
    %451 = arith.addf %450, %449 : vector<2x32xf32>
    %452 = arith.divf %450, %451 : vector<2x32xf32>
    %453 = arith.mulf %444, %426 : vector<2x32xf32>
    %454 = arith.mulf %438, %446 : vector<2x32xf32>
    %455 = arith.addf %453, %454 : vector<2x32xf32>
    %456 = math.tanh %455 : vector<2x32xf32>
    %457 = arith.mulf %452, %456 : vector<2x32xf32>
    %c2_101 = arith.constant 2 : index
    %c32_102 = arith.constant 32 : index
    %458 = vector.load %arg18[%c2_101, %c32_102] : memref<16x64xf32, #tpu.memory_space<vmem>>, vector<2x32xf32>
    tpu.vector_store %arg18[%c2_101, %c32_102], %457 {strides = array<i32>} : memref<16x64xf32, #tpu.memory_space<vmem>>, vector<2x32xf32>,
    %459 = vector.extract_strided_slice %19 {offsets = [0, 0], sizes = [2, 128], strides = [1, 1]} : vector<16x128xf32> to vector<2x128xf32>
    %cst_103 = arith.constant dense<0.000000e+00> : vector<2x128xf32>
    %460 = tpu.matmul %457, %12, %cst_103 {dimension_numbers = #tpu.dot_dimension_numbers<[1], [0], [0], [1], [0, 0, 1, 1], [], []>} : vector<2x32xf32>, vector<32x128xf32>, vector<2x128xf32> -> vector<2x128xf32>
    %461 = arith.addf %459, %460 : vector<2x128xf32>
    %462 = vector.extract_strided_slice %461 {offsets = [0, 0], sizes = [2, 32], strides = [1, 1]} : vector<2x128xf32> to vector<2x32xf32>
    %463 = arith.negf %462 : vector<2x32xf32>
    %464 = math.exp %463 : vector<2x32xf32>
    %cst_104 = arith.constant 1.000000e+00 : f32
    %465 = vector.broadcast %cst_104 : f32 to vector<2x32xf32>
    %466 = arith.addf %465, %464 : vector<2x32xf32>
    %467 = arith.divf %465, %466 : vector<2x32xf32>
    %468 = vector.extract_strided_slice %461 {offsets = [0, 32], sizes = [2, 32], strides = [1, 1]} : vector<2x128xf32> to vector<2x32xf32>
    %469 = arith.negf %468 : vector<2x32xf32>
    %470 = math.exp %469 : vector<2x32xf32>
    %cst_105 = arith.constant 1.000000e+00 : f32
    %471 = vector.broadcast %cst_105 : f32 to vector<2x32xf32>
    %472 = arith.addf %471, %470 : vector<2x32xf32>
    %473 = arith.divf %471, %472 : vector<2x32xf32>
    %474 = vector.extract_strided_slice %461 {offsets = [0, 64], sizes = [2, 32], strides = [1, 1]} : vector<2x128xf32> to vector<2x32xf32>
    %475 = math.tanh %474 : vector<2x32xf32>
    %476 = vector.extract_strided_slice %461 {offsets = [0, 96], sizes = [2, 32], strides = [1, 1]} : vector<2x128xf32> to vector<2x32xf32>
    %477 = arith.negf %476 : vector<2x32xf32>
    %478 = math.exp %477 : vector<2x32xf32>
    %cst_106 = arith.constant 1.000000e+00 : f32
    %479 = vector.broadcast %cst_106 : f32 to vector<2x32xf32>
    %480 = arith.addf %479, %478 : vector<2x32xf32>
    %481 = arith.divf %479, %480 : vector<2x32xf32>
    %482 = arith.mulf %473, %455 : vector<2x32xf32>
    %483 = arith.mulf %467, %475 : vector<2x32xf32>
    %484 = arith.addf %482, %483 : vector<2x32xf32>
    %485 = math.tanh %484 : vector<2x32xf32>
    %486 = arith.mulf %481, %485 : vector<2x32xf32>
    %c0_107 = arith.constant 0 : index
    %c32_108 = arith.constant 32 : index
    %487 = vector.load %arg18[%c0_107, %c32_108] : memref<16x64xf32, #tpu.memory_space<vmem>>, vector<2x32xf32>
    tpu.vector_store %arg18[%c0_107, %c32_108], %486 {strides = array<i32>} : memref<16x64xf32, #tpu.memory_space<vmem>>, vector<2x32xf32>,
    %c0_109 = arith.constant 0 : index
    %c0_110 = arith.constant 0 : index
    %488 = vector.load %arg18[%c0_109, %c0_110] : memref<16x64xf32, #tpu.memory_space<vmem>>, vector<16x64xf32>
    %c0_111 = arith.constant 0 : index
    %c0_112 = arith.constant 0 : index
    %489 = vector.load %arg9[%c0_111, %c0_112] : memref<64x128xf32, #tpu.memory_space<vmem>>, vector<64x128xf32>
    %c0_113 = arith.constant 0 : index
    %c0_114 = arith.constant 0 : index
    %490 = vector.load %arg10[%c0_113, %c0_114] : memref<32x128xf32, #tpu.memory_space<vmem>>, vector<32x128xf32>
    %c0_115 = arith.constant 0 : index
    %c0_116 = arith.constant 0 : index
    %491 = vector.load %arg11[%c0_115, %c0_116] : memref<1x128xf32, #tpu.memory_space<vmem>>, vector<1x128xf32>
    %c0_117 = arith.constant 0 : index
    %c0_118 = arith.constant 0 : index
    %492 = vector.load %arg12[%c0_117, %c0_118] : memref<64x128xf32, #tpu.memory_space<vmem>>, vector<64x128xf32>
    %c0_119 = arith.constant 0 : index
    %c0_120 = arith.constant 0 : index
    %493 = vector.load %arg13[%c0_119, %c0_120] : memref<32x128xf32, #tpu.memory_space<vmem>>, vector<32x128xf32>
    %c0_121 = arith.constant 0 : index
    %c0_122 = arith.constant 0 : index
    %494 = vector.load %arg14[%c0_121, %c0_122] : memref<1x128xf32, #tpu.memory_space<vmem>>, vector<1x128xf32>
    %cst_123 = arith.constant dense<0.000000e+00> : vector<16x128xf32>
    %495 = tpu.matmul %488, %489, %cst_123 {dimension_numbers = #tpu.dot_dimension_numbers<[1], [0], [0], [1], [0, 0, 1, 1], [], []>} : vector<16x64xf32>, vector<64x128xf32>, vector<16x128xf32> -> vector<16x128xf32>
    %496 = vector.broadcast %491 : vector<1x128xf32> to vector<16x128xf32>
    %497 = arith.addf %495, %496 : vector<16x128xf32>
    %cst_124 = arith.constant dense<0.000000e+00> : vector<16x128xf32>
    %498 = tpu.matmul %488, %492, %cst_124 {dimension_numbers = #tpu.dot_dimension_numbers<[1], [0], [0], [1], [0, 0, 1, 1], [], []>} : vector<16x64xf32>, vector<64x128xf32>, vector<16x128xf32> -> vector<16x128xf32>
    %499 = vector.broadcast %494 : vector<1x128xf32> to vector<16x128xf32>
    %500 = arith.addf %498, %499 : vector<16x128xf32>
    %cst_125 = arith.constant 0.000000e+00 : f32
    %501 = vector.broadcast %cst_125 : f32 to vector<2x32xf32>
    %cst_126 = arith.constant 0.000000e+00 : f32
    %502 = vector.broadcast %cst_126 : f32 to vector<2x32xf32>
    %503 = vector.extract_strided_slice %497 {offsets = [0, 0], sizes = [2, 128], strides = [1, 1]} : vector<16x128xf32> to vector<2x128xf32>
    %cst_127 = arith.constant dense<0.000000e+00> : vector<2x128xf32>
    %504 = tpu.matmul %501, %490, %cst_127 {dimension_numbers = #tpu.dot_dimension_numbers<[1], [0], [0], [1], [0, 0, 1, 1], [], []>} : vector<2x32xf32>, vector<32x128xf32>, vector<2x128xf32> -> vector<2x128xf32>
    %505 = arith.addf %503, %504 : vector<2x128xf32>
    %506 = vector.extract_strided_slice %505 {offsets = [0, 0], sizes = [2, 32], strides = [1, 1]} : vector<2x128xf32> to vector<2x32xf32>
    %507 = arith.negf %506 : vector<2x32xf32>
    %508 = math.exp %507 : vector<2x32xf32>
    %cst_128 = arith.constant 1.000000e+00 : f32
    %509 = vector.broadcast %cst_128 : f32 to vector<2x32xf32>
    %510 = arith.addf %509, %508 : vector<2x32xf32>
    %511 = arith.divf %509, %510 : vector<2x32xf32>
    %512 = vector.extract_strided_slice %505 {offsets = [0, 32], sizes = [2, 32], strides = [1, 1]} : vector<2x128xf32> to vector<2x32xf32>
    %513 = arith.negf %512 : vector<2x32xf32>
    %514 = math.exp %513 : vector<2x32xf32>
    %cst_129 = arith.constant 1.000000e+00 : f32
    %515 = vector.broadcast %cst_129 : f32 to vector<2x32xf32>
    %516 = arith.addf %515, %514 : vector<2x32xf32>
    %517 = arith.divf %515, %516 : vector<2x32xf32>
    %518 = vector.extract_strided_slice %505 {offsets = [0, 64], sizes = [2, 32], strides = [1, 1]} : vector<2x128xf32> to vector<2x32xf32>
    %519 = math.tanh %518 : vector<2x32xf32>
    %520 = vector.extract_strided_slice %505 {offsets = [0, 96], sizes = [2, 32], strides = [1, 1]} : vector<2x128xf32> to vector<2x32xf32>
    %521 = arith.negf %520 : vector<2x32xf32>
    %522 = math.exp %521 : vector<2x32xf32>
    %cst_130 = arith.constant 1.000000e+00 : f32
    %523 = vector.broadcast %cst_130 : f32 to vector<2x32xf32>
    %524 = arith.addf %523, %522 : vector<2x32xf32>
    %525 = arith.divf %523, %524 : vector<2x32xf32>
    %526 = arith.mulf %517, %502 : vector<2x32xf32>
    %527 = arith.mulf %511, %519 : vector<2x32xf32>
    %528 = arith.addf %526, %527 : vector<2x32xf32>
    %529 = math.tanh %528 : vector<2x32xf32>
    %530 = arith.mulf %525, %529 : vector<2x32xf32>
    %531 = vector.extract_strided_slice %530 {offsets = [0, 0], sizes = [1, 32], strides = [1, 1]} : vector<2x32xf32> to vector<1x32xf32>
    %c0_131 = arith.constant 0 : index
    %c0_132 = arith.constant 0 : index
    %532 = vector.load %arg19[%c0_131, %c0_132] : memref<2x512xf32, #tpu.memory_space<vmem>>, vector<1x32xf32>
    tpu.vector_store %arg19[%c0_131, %c0_132], %531 {strides = array<i32>} : memref<2x512xf32, #tpu.memory_space<vmem>>, vector<1x32xf32>,
    %533 = vector.extract_strided_slice %530 {offsets = [1, 0], sizes = [1, 32], strides = [1, 1]} : vector<2x32xf32> to vector<1x32xf32>
    %c0_133 = arith.constant 0 : index
    %c64 = arith.constant 64 : index
    %534 = vector.load %arg19[%c0_133, %c64] : memref<2x512xf32, #tpu.memory_space<vmem>>, vector<1x32xf32>
    tpu.vector_store %arg19[%c0_133, %c64], %533 {strides = array<i32>} : memref<2x512xf32, #tpu.memory_space<vmem>>, vector<1x32xf32>,
    %535 = vector.extract_strided_slice %497 {offsets = [2, 0], sizes = [2, 128], strides = [1, 1]} : vector<16x128xf32> to vector<2x128xf32>
    %cst_134 = arith.constant dense<0.000000e+00> : vector<2x128xf32>
    %536 = tpu.matmul %530, %490, %cst_134 {dimension_numbers = #tpu.dot_dimension_numbers<[1], [0], [0], [1], [0, 0, 1, 1], [], []>} : vector<2x32xf32>, vector<32x128xf32>, vector<2x128xf32> -> vector<2x128xf32>
    %537 = arith.addf %535, %536 : vector<2x128xf32>
    %538 = vector.extract_strided_slice %537 {offsets = [0, 0], sizes = [2, 32], strides = [1, 1]} : vector<2x128xf32> to vector<2x32xf32>
    %539 = arith.negf %538 : vector<2x32xf32>
    %540 = math.exp %539 : vector<2x32xf32>
    %cst_135 = arith.constant 1.000000e+00 : f32
    %541 = vector.broadcast %cst_135 : f32 to vector<2x32xf32>
    %542 = arith.addf %541, %540 : vector<2x32xf32>
    %543 = arith.divf %541, %542 : vector<2x32xf32>
    %544 = vector.extract_strided_slice %537 {offsets = [0, 32], sizes = [2, 32], strides = [1, 1]} : vector<2x128xf32> to vector<2x32xf32>
    %545 = arith.negf %544 : vector<2x32xf32>
    %546 = math.exp %545 : vector<2x32xf32>
    %cst_136 = arith.constant 1.000000e+00 : f32
    %547 = vector.broadcast %cst_136 : f32 to vector<2x32xf32>
    %548 = arith.addf %547, %546 : vector<2x32xf32>
    %549 = arith.divf %547, %548 : vector<2x32xf32>
    %550 = vector.extract_strided_slice %537 {offsets = [0, 64], sizes = [2, 32], strides = [1, 1]} : vector<2x128xf32> to vector<2x32xf32>
    %551 = math.tanh %550 : vector<2x32xf32>
    %552 = vector.extract_strided_slice %537 {offsets = [0, 96], sizes = [2, 32], strides = [1, 1]} : vector<2x128xf32> to vector<2x32xf32>
    %553 = arith.negf %552 : vector<2x32xf32>
    %554 = math.exp %553 : vector<2x32xf32>
    %cst_137 = arith.constant 1.000000e+00 : f32
    %555 = vector.broadcast %cst_137 : f32 to vector<2x32xf32>
    %556 = arith.addf %555, %554 : vector<2x32xf32>
    %557 = arith.divf %555, %556 : vector<2x32xf32>
    %558 = arith.mulf %549, %528 : vector<2x32xf32>
    %559 = arith.mulf %543, %551 : vector<2x32xf32>
    %560 = arith.addf %558, %559 : vector<2x32xf32>
    %561 = math.tanh %560 : vector<2x32xf32>
    %562 = arith.mulf %557, %561 : vector<2x32xf32>
    %563 = vector.extract_strided_slice %562 {offsets = [0, 0], sizes = [1, 32], strides = [1, 1]} : vector<2x32xf32> to vector<1x32xf32>
    %c0_138 = arith.constant 0 : index
    %c128 = arith.constant 128 : index
    %564 = vector.load %arg19[%c0_138, %c128] : memref<2x512xf32, #tpu.memory_space<vmem>>, vector<1x32xf32>
    tpu.vector_store %arg19[%c0_138, %c128], %563 {strides = array<i32>} : memref<2x512xf32, #tpu.memory_space<vmem>>, vector<1x32xf32>,
    %565 = vector.extract_strided_slice %562 {offsets = [1, 0], sizes = [1, 32], strides = [1, 1]} : vector<2x32xf32> to vector<1x32xf32>
    %c0_139 = arith.constant 0 : index
    %c192 = arith.constant 192 : index
    %566 = vector.load %arg19[%c0_139, %c192] : memref<2x512xf32, #tpu.memory_space<vmem>>, vector<1x32xf32>
    tpu.vector_store %arg19[%c0_139, %c192], %565 {strides = array<i32>} : memref<2x512xf32, #tpu.memory_space<vmem>>, vector<1x32xf32>,
    %567 = vector.extract_strided_slice %497 {offsets = [4, 0], sizes = [2, 128], strides = [1, 1]} : vector<16x128xf32> to vector<2x128xf32>
    %cst_140 = arith.constant dense<0.000000e+00> : vector<2x128xf32>
    %568 = tpu.matmul %562, %490, %cst_140 {dimension_numbers = #tpu.dot_dimension_numbers<[1], [0], [0], [1], [0, 0, 1, 1], [], []>} : vector<2x32xf32>, vector<32x128xf32>, vector<2x128xf32> -> vector<2x128xf32>
    %569 = arith.addf %567, %568 : vector<2x128xf32>
    %570 = vector.extract_strided_slice %569 {offsets = [0, 0], sizes = [2, 32], strides = [1, 1]} : vector<2x128xf32> to vector<2x32xf32>
    %571 = arith.negf %570 : vector<2x32xf32>
    %572 = math.exp %571 : vector<2x32xf32>
    %cst_141 = arith.constant 1.000000e+00 : f32
    %573 = vector.broadcast %cst_141 : f32 to vector<2x32xf32>
    %574 = arith.addf %573, %572 : vector<2x32xf32>
    %575 = arith.divf %573, %574 : vector<2x32xf32>
    %576 = vector.extract_strided_slice %569 {offsets = [0, 32], sizes = [2, 32], strides = [1, 1]} : vector<2x128xf32> to vector<2x32xf32>
    %577 = arith.negf %576 : vector<2x32xf32>
    %578 = math.exp %577 : vector<2x32xf32>
    %cst_142 = arith.constant 1.000000e+00 : f32
    %579 = vector.broadcast %cst_142 : f32 to vector<2x32xf32>
    %580 = arith.addf %579, %578 : vector<2x32xf32>
    %581 = arith.divf %579, %580 : vector<2x32xf32>
    %582 = vector.extract_strided_slice %569 {offsets = [0, 64], sizes = [2, 32], strides = [1, 1]} : vector<2x128xf32> to vector<2x32xf32>
    %583 = math.tanh %582 : vector<2x32xf32>
    %584 = vector.extract_strided_slice %569 {offsets = [0, 96], sizes = [2, 32], strides = [1, 1]} : vector<2x128xf32> to vector<2x32xf32>
    %585 = arith.negf %584 : vector<2x32xf32>
    %586 = math.exp %585 : vector<2x32xf32>
    %cst_143 = arith.constant 1.000000e+00 : f32
    %587 = vector.broadcast %cst_143 : f32 to vector<2x32xf32>
    %588 = arith.addf %587, %586 : vector<2x32xf32>
    %589 = arith.divf %587, %588 : vector<2x32xf32>
    %590 = arith.mulf %581, %560 : vector<2x32xf32>
    %591 = arith.mulf %575, %583 : vector<2x32xf32>
    %592 = arith.addf %590, %591 : vector<2x32xf32>
    %593 = math.tanh %592 : vector<2x32xf32>
    %594 = arith.mulf %589, %593 : vector<2x32xf32>
    %595 = vector.extract_strided_slice %594 {offsets = [0, 0], sizes = [1, 32], strides = [1, 1]} : vector<2x32xf32> to vector<1x32xf32>
    %c0_144 = arith.constant 0 : index
    %c256 = arith.constant 256 : index
    %596 = vector.load %arg19[%c0_144, %c256] : memref<2x512xf32, #tpu.memory_space<vmem>>, vector<1x32xf32>
    tpu.vector_store %arg19[%c0_144, %c256], %595 {strides = array<i32>} : memref<2x512xf32, #tpu.memory_space<vmem>>, vector<1x32xf32>,
    %597 = vector.extract_strided_slice %594 {offsets = [1, 0], sizes = [1, 32], strides = [1, 1]} : vector<2x32xf32> to vector<1x32xf32>
    %c0_145 = arith.constant 0 : index
    %c320 = arith.constant 320 : index
    %598 = vector.load %arg19[%c0_145, %c320] : memref<2x512xf32, #tpu.memory_space<vmem>>, vector<1x32xf32>
    tpu.vector_store %arg19[%c0_145, %c320], %597 {strides = array<i32>} : memref<2x512xf32, #tpu.memory_space<vmem>>, vector<1x32xf32>,
    %599 = vector.extract_strided_slice %497 {offsets = [6, 0], sizes = [2, 128], strides = [1, 1]} : vector<16x128xf32> to vector<2x128xf32>
    %cst_146 = arith.constant dense<0.000000e+00> : vector<2x128xf32>
    %600 = tpu.matmul %594, %490, %cst_146 {dimension_numbers = #tpu.dot_dimension_numbers<[1], [0], [0], [1], [0, 0, 1, 1], [], []>} : vector<2x32xf32>, vector<32x128xf32>, vector<2x128xf32> -> vector<2x128xf32>
    %601 = arith.addf %599, %600 : vector<2x128xf32>
    %602 = vector.extract_strided_slice %601 {offsets = [0, 0], sizes = [2, 32], strides = [1, 1]} : vector<2x128xf32> to vector<2x32xf32>
    %603 = arith.negf %602 : vector<2x32xf32>
    %604 = math.exp %603 : vector<2x32xf32>
    %cst_147 = arith.constant 1.000000e+00 : f32
    %605 = vector.broadcast %cst_147 : f32 to vector<2x32xf32>
    %606 = arith.addf %605, %604 : vector<2x32xf32>
    %607 = arith.divf %605, %606 : vector<2x32xf32>
    %608 = vector.extract_strided_slice %601 {offsets = [0, 32], sizes = [2, 32], strides = [1, 1]} : vector<2x128xf32> to vector<2x32xf32>
    %609 = arith.negf %608 : vector<2x32xf32>
    %610 = math.exp %609 : vector<2x32xf32>
    %cst_148 = arith.constant 1.000000e+00 : f32
    %611 = vector.broadcast %cst_148 : f32 to vector<2x32xf32>
    %612 = arith.addf %611, %610 : vector<2x32xf32>
    %613 = arith.divf %611, %612 : vector<2x32xf32>
    %614 = vector.extract_strided_slice %601 {offsets = [0, 64], sizes = [2, 32], strides = [1, 1]} : vector<2x128xf32> to vector<2x32xf32>
    %615 = math.tanh %614 : vector<2x32xf32>
    %616 = vector.extract_strided_slice %601 {offsets = [0, 96], sizes = [2, 32], strides = [1, 1]} : vector<2x128xf32> to vector<2x32xf32>
    %617 = arith.negf %616 : vector<2x32xf32>
    %618 = math.exp %617 : vector<2x32xf32>
    %cst_149 = arith.constant 1.000000e+00 : f32
    %619 = vector.broadcast %cst_149 : f32 to vector<2x32xf32>
    %620 = arith.addf %619, %618 : vector<2x32xf32>
    %621 = arith.divf %619, %620 : vector<2x32xf32>
    %622 = arith.mulf %613, %592 : vector<2x32xf32>
    %623 = arith.mulf %607, %615 : vector<2x32xf32>
    %624 = arith.addf %622, %623 : vector<2x32xf32>
    %625 = math.tanh %624 : vector<2x32xf32>
    %626 = arith.mulf %621, %625 : vector<2x32xf32>
    %627 = vector.extract_strided_slice %626 {offsets = [0, 0], sizes = [1, 32], strides = [1, 1]} : vector<2x32xf32> to vector<1x32xf32>
    %c0_150 = arith.constant 0 : index
    %c384 = arith.constant 384 : index
    %628 = vector.load %arg19[%c0_150, %c384] : memref<2x512xf32, #tpu.memory_space<vmem>>, vector<1x32xf32>
    tpu.vector_store %arg19[%c0_150, %c384], %627 {strides = array<i32>} : memref<2x512xf32, #tpu.memory_space<vmem>>, vector<1x32xf32>,
    %629 = vector.extract_strided_slice %626 {offsets = [1, 0], sizes = [1, 32], strides = [1, 1]} : vector<2x32xf32> to vector<1x32xf32>
    %c0_151 = arith.constant 0 : index
    %c448 = arith.constant 448 : index
    %630 = vector.load %arg19[%c0_151, %c448] : memref<2x512xf32, #tpu.memory_space<vmem>>, vector<1x32xf32>
    tpu.vector_store %arg19[%c0_151, %c448], %629 {strides = array<i32>} : memref<2x512xf32, #tpu.memory_space<vmem>>, vector<1x32xf32>,
    %631 = vector.extract_strided_slice %497 {offsets = [8, 0], sizes = [2, 128], strides = [1, 1]} : vector<16x128xf32> to vector<2x128xf32>
    %cst_152 = arith.constant dense<0.000000e+00> : vector<2x128xf32>
    %632 = tpu.matmul %626, %490, %cst_152 {dimension_numbers = #tpu.dot_dimension_numbers<[1], [0], [0], [1], [0, 0, 1, 1], [], []>} : vector<2x32xf32>, vector<32x128xf32>, vector<2x128xf32> -> vector<2x128xf32>
    %633 = arith.addf %631, %632 : vector<2x128xf32>
    %634 = vector.extract_strided_slice %633 {offsets = [0, 0], sizes = [2, 32], strides = [1, 1]} : vector<2x128xf32> to vector<2x32xf32>
    %635 = arith.negf %634 : vector<2x32xf32>
    %636 = math.exp %635 : vector<2x32xf32>
    %cst_153 = arith.constant 1.000000e+00 : f32
    %637 = vector.broadcast %cst_153 : f32 to vector<2x32xf32>
    %638 = arith.addf %637, %636 : vector<2x32xf32>
    %639 = arith.divf %637, %638 : vector<2x32xf32>
    %640 = vector.extract_strided_slice %633 {offsets = [0, 32], sizes = [2, 32], strides = [1, 1]} : vector<2x128xf32> to vector<2x32xf32>
    %641 = arith.negf %640 : vector<2x32xf32>
    %642 = math.exp %641 : vector<2x32xf32>
    %cst_154 = arith.constant 1.000000e+00 : f32
    %643 = vector.broadcast %cst_154 : f32 to vector<2x32xf32>
    %644 = arith.addf %643, %642 : vector<2x32xf32>
    %645 = arith.divf %643, %644 : vector<2x32xf32>
    %646 = vector.extract_strided_slice %633 {offsets = [0, 64], sizes = [2, 32], strides = [1, 1]} : vector<2x128xf32> to vector<2x32xf32>
    %647 = math.tanh %646 : vector<2x32xf32>
    %648 = vector.extract_strided_slice %633 {offsets = [0, 96], sizes = [2, 32], strides = [1, 1]} : vector<2x128xf32> to vector<2x32xf32>
    %649 = arith.negf %648 : vector<2x32xf32>
    %650 = math.exp %649 : vector<2x32xf32>
    %cst_155 = arith.constant 1.000000e+00 : f32
    %651 = vector.broadcast %cst_155 : f32 to vector<2x32xf32>
    %652 = arith.addf %651, %650 : vector<2x32xf32>
    %653 = arith.divf %651, %652 : vector<2x32xf32>
    %654 = arith.mulf %645, %624 : vector<2x32xf32>
    %655 = arith.mulf %639, %647 : vector<2x32xf32>
    %656 = arith.addf %654, %655 : vector<2x32xf32>
    %657 = math.tanh %656 : vector<2x32xf32>
    %658 = arith.mulf %653, %657 : vector<2x32xf32>
    %659 = vector.extract_strided_slice %658 {offsets = [0, 0], sizes = [1, 32], strides = [1, 1]} : vector<2x32xf32> to vector<1x32xf32>
    %c1 = arith.constant 1 : index
    %c0_156 = arith.constant 0 : index
    %660 = vector.load %arg19[%c1, %c0_156] : memref<2x512xf32, #tpu.memory_space<vmem>>, vector<1x32xf32>
    tpu.vector_store %arg19[%c1, %c0_156], %659 {strides = array<i32>} : memref<2x512xf32, #tpu.memory_space<vmem>>, vector<1x32xf32>,
    %661 = vector.extract_strided_slice %658 {offsets = [1, 0], sizes = [1, 32], strides = [1, 1]} : vector<2x32xf32> to vector<1x32xf32>
    %c1_157 = arith.constant 1 : index
    %c64_158 = arith.constant 64 : index
    %662 = vector.load %arg19[%c1_157, %c64_158] : memref<2x512xf32, #tpu.memory_space<vmem>>, vector<1x32xf32>
    tpu.vector_store %arg19[%c1_157, %c64_158], %661 {strides = array<i32>} : memref<2x512xf32, #tpu.memory_space<vmem>>, vector<1x32xf32>,
    %663 = vector.extract_strided_slice %497 {offsets = [10, 0], sizes = [2, 128], strides = [1, 1]} : vector<16x128xf32> to vector<2x128xf32>
    %cst_159 = arith.constant dense<0.000000e+00> : vector<2x128xf32>
    %664 = tpu.matmul %658, %490, %cst_159 {dimension_numbers = #tpu.dot_dimension_numbers<[1], [0], [0], [1], [0, 0, 1, 1], [], []>} : vector<2x32xf32>, vector<32x128xf32>, vector<2x128xf32> -> vector<2x128xf32>
    %665 = arith.addf %663, %664 : vector<2x128xf32>
    %666 = vector.extract_strided_slice %665 {offsets = [0, 0], sizes = [2, 32], strides = [1, 1]} : vector<2x128xf32> to vector<2x32xf32>
    %667 = arith.negf %666 : vector<2x32xf32>
    %668 = math.exp %667 : vector<2x32xf32>
    %cst_160 = arith.constant 1.000000e+00 : f32
    %669 = vector.broadcast %cst_160 : f32 to vector<2x32xf32>
    %670 = arith.addf %669, %668 : vector<2x32xf32>
    %671 = arith.divf %669, %670 : vector<2x32xf32>
    %672 = vector.extract_strided_slice %665 {offsets = [0, 32], sizes = [2, 32], strides = [1, 1]} : vector<2x128xf32> to vector<2x32xf32>
    %673 = arith.negf %672 : vector<2x32xf32>
    %674 = math.exp %673 : vector<2x32xf32>
    %cst_161 = arith.constant 1.000000e+00 : f32
    %675 = vector.broadcast %cst_161 : f32 to vector<2x32xf32>
    %676 = arith.addf %675, %674 : vector<2x32xf32>
    %677 = arith.divf %675, %676 : vector<2x32xf32>
    %678 = vector.extract_strided_slice %665 {offsets = [0, 64], sizes = [2, 32], strides = [1, 1]} : vector<2x128xf32> to vector<2x32xf32>
    %679 = math.tanh %678 : vector<2x32xf32>
    %680 = vector.extract_strided_slice %665 {offsets = [0, 96], sizes = [2, 32], strides = [1, 1]} : vector<2x128xf32> to vector<2x32xf32>
    %681 = arith.negf %680 : vector<2x32xf32>
    %682 = math.exp %681 : vector<2x32xf32>
    %cst_162 = arith.constant 1.000000e+00 : f32
    %683 = vector.broadcast %cst_162 : f32 to vector<2x32xf32>
    %684 = arith.addf %683, %682 : vector<2x32xf32>
    %685 = arith.divf %683, %684 : vector<2x32xf32>
    %686 = arith.mulf %677, %656 : vector<2x32xf32>
    %687 = arith.mulf %671, %679 : vector<2x32xf32>
    %688 = arith.addf %686, %687 : vector<2x32xf32>
    %689 = math.tanh %688 : vector<2x32xf32>
    %690 = arith.mulf %685, %689 : vector<2x32xf32>
    %691 = vector.extract_strided_slice %690 {offsets = [0, 0], sizes = [1, 32], strides = [1, 1]} : vector<2x32xf32> to vector<1x32xf32>
    %c1_163 = arith.constant 1 : index
    %c128_164 = arith.constant 128 : index
    %692 = vector.load %arg19[%c1_163, %c128_164] : memref<2x512xf32, #tpu.memory_space<vmem>>, vector<1x32xf32>
    tpu.vector_store %arg19[%c1_163, %c128_164], %691 {strides = array<i32>} : memref<2x512xf32, #tpu.memory_space<vmem>>, vector<1x32xf32>,
    %693 = vector.extract_strided_slice %690 {offsets = [1, 0], sizes = [1, 32], strides = [1, 1]} : vector<2x32xf32> to vector<1x32xf32>
    %c1_165 = arith.constant 1 : index
    %c192_166 = arith.constant 192 : index
    %694 = vector.load %arg19[%c1_165, %c192_166] : memref<2x512xf32, #tpu.memory_space<vmem>>, vector<1x32xf32>
    tpu.vector_store %arg19[%c1_165, %c192_166], %693 {strides = array<i32>} : memref<2x512xf32, #tpu.memory_space<vmem>>, vector<1x32xf32>,
    %695 = vector.extract_strided_slice %497 {offsets = [12, 0], sizes = [2, 128], strides = [1, 1]} : vector<16x128xf32> to vector<2x128xf32>
    %cst_167 = arith.constant dense<0.000000e+00> : vector<2x128xf32>
    %696 = tpu.matmul %690, %490, %cst_167 {dimension_numbers = #tpu.dot_dimension_numbers<[1], [0], [0], [1], [0, 0, 1, 1], [], []>} : vector<2x32xf32>, vector<32x128xf32>, vector<2x128xf32> -> vector<2x128xf32>
    %697 = arith.addf %695, %696 : vector<2x128xf32>
    %698 = vector.extract_strided_slice %697 {offsets = [0, 0], sizes = [2, 32], strides = [1, 1]} : vector<2x128xf32> to vector<2x32xf32>
    %699 = arith.negf %698 : vector<2x32xf32>
    %700 = math.exp %699 : vector<2x32xf32>
    %cst_168 = arith.constant 1.000000e+00 : f32
    %701 = vector.broadcast %cst_168 : f32 to vector<2x32xf32>
    %702 = arith.addf %701, %700 : vector<2x32xf32>
    %703 = arith.divf %701, %702 : vector<2x32xf32>
    %704 = vector.extract_strided_slice %697 {offsets = [0, 32], sizes = [2, 32], strides = [1, 1]} : vector<2x128xf32> to vector<2x32xf32>
    %705 = arith.negf %704 : vector<2x32xf32>
    %706 = math.exp %705 : vector<2x32xf32>
    %cst_169 = arith.constant 1.000000e+00 : f32
    %707 = vector.broadcast %cst_169 : f32 to vector<2x32xf32>
    %708 = arith.addf %707, %706 : vector<2x32xf32>
    %709 = arith.divf %707, %708 : vector<2x32xf32>
    %710 = vector.extract_strided_slice %697 {offsets = [0, 64], sizes = [2, 32], strides = [1, 1]} : vector<2x128xf32> to vector<2x32xf32>
    %711 = math.tanh %710 : vector<2x32xf32>
    %712 = vector.extract_strided_slice %697 {offsets = [0, 96], sizes = [2, 32], strides = [1, 1]} : vector<2x128xf32> to vector<2x32xf32>
    %713 = arith.negf %712 : vector<2x32xf32>
    %714 = math.exp %713 : vector<2x32xf32>
    %cst_170 = arith.constant 1.000000e+00 : f32
    %715 = vector.broadcast %cst_170 : f32 to vector<2x32xf32>
    %716 = arith.addf %715, %714 : vector<2x32xf32>
    %717 = arith.divf %715, %716 : vector<2x32xf32>
    %718 = arith.mulf %709, %688 : vector<2x32xf32>
    %719 = arith.mulf %703, %711 : vector<2x32xf32>
    %720 = arith.addf %718, %719 : vector<2x32xf32>
    %721 = math.tanh %720 : vector<2x32xf32>
    %722 = arith.mulf %717, %721 : vector<2x32xf32>
    %723 = vector.extract_strided_slice %722 {offsets = [0, 0], sizes = [1, 32], strides = [1, 1]} : vector<2x32xf32> to vector<1x32xf32>
    %c1_171 = arith.constant 1 : index
    %c256_172 = arith.constant 256 : index
    %724 = vector.load %arg19[%c1_171, %c256_172] : memref<2x512xf32, #tpu.memory_space<vmem>>, vector<1x32xf32>
    tpu.vector_store %arg19[%c1_171, %c256_172], %723 {strides = array<i32>} : memref<2x512xf32, #tpu.memory_space<vmem>>, vector<1x32xf32>,
    %725 = vector.extract_strided_slice %722 {offsets = [1, 0], sizes = [1, 32], strides = [1, 1]} : vector<2x32xf32> to vector<1x32xf32>
    %c1_173 = arith.constant 1 : index
    %c320_174 = arith.constant 320 : index
    %726 = vector.load %arg19[%c1_173, %c320_174] : memref<2x512xf32, #tpu.memory_space<vmem>>, vector<1x32xf32>
    tpu.vector_store %arg19[%c1_173, %c320_174], %725 {strides = array<i32>} : memref<2x512xf32, #tpu.memory_space<vmem>>, vector<1x32xf32>,
    %727 = vector.extract_strided_slice %497 {offsets = [14, 0], sizes = [2, 128], strides = [1, 1]} : vector<16x128xf32> to vector<2x128xf32>
    %cst_175 = arith.constant dense<0.000000e+00> : vector<2x128xf32>
    %728 = tpu.matmul %722, %490, %cst_175 {dimension_numbers = #tpu.dot_dimension_numbers<[1], [0], [0], [1], [0, 0, 1, 1], [], []>} : vector<2x32xf32>, vector<32x128xf32>, vector<2x128xf32> -> vector<2x128xf32>
    %729 = arith.addf %727, %728 : vector<2x128xf32>
    %730 = vector.extract_strided_slice %729 {offsets = [0, 0], sizes = [2, 32], strides = [1, 1]} : vector<2x128xf32> to vector<2x32xf32>
    %731 = arith.negf %730 : vector<2x32xf32>
    %732 = math.exp %731 : vector<2x32xf32>
    %cst_176 = arith.constant 1.000000e+00 : f32
    %733 = vector.broadcast %cst_176 : f32 to vector<2x32xf32>
    %734 = arith.addf %733, %732 : vector<2x32xf32>
    %735 = arith.divf %733, %734 : vector<2x32xf32>
    %736 = vector.extract_strided_slice %729 {offsets = [0, 32], sizes = [2, 32], strides = [1, 1]} : vector<2x128xf32> to vector<2x32xf32>
    %737 = arith.negf %736 : vector<2x32xf32>
    %738 = math.exp %737 : vector<2x32xf32>
    %cst_177 = arith.constant 1.000000e+00 : f32
    %739 = vector.broadcast %cst_177 : f32 to vector<2x32xf32>
    %740 = arith.addf %739, %738 : vector<2x32xf32>
    %741 = arith.divf %739, %740 : vector<2x32xf32>
    %742 = vector.extract_strided_slice %729 {offsets = [0, 64], sizes = [2, 32], strides = [1, 1]} : vector<2x128xf32> to vector<2x32xf32>
    %743 = math.tanh %742 : vector<2x32xf32>
    %744 = vector.extract_strided_slice %729 {offsets = [0, 96], sizes = [2, 32], strides = [1, 1]} : vector<2x128xf32> to vector<2x32xf32>
    %745 = arith.negf %744 : vector<2x32xf32>
    %746 = math.exp %745 : vector<2x32xf32>
    %cst_178 = arith.constant 1.000000e+00 : f32
    %747 = vector.broadcast %cst_178 : f32 to vector<2x32xf32>
    %748 = arith.addf %747, %746 : vector<2x32xf32>
    %749 = arith.divf %747, %748 : vector<2x32xf32>
    %750 = arith.mulf %741, %720 : vector<2x32xf32>
    %751 = arith.mulf %735, %743 : vector<2x32xf32>
    %752 = arith.addf %750, %751 : vector<2x32xf32>
    %753 = math.tanh %752 : vector<2x32xf32>
    %754 = arith.mulf %749, %753 : vector<2x32xf32>
    %755 = vector.extract_strided_slice %754 {offsets = [0, 0], sizes = [1, 32], strides = [1, 1]} : vector<2x32xf32> to vector<1x32xf32>
    %c1_179 = arith.constant 1 : index
    %c384_180 = arith.constant 384 : index
    %756 = vector.load %arg19[%c1_179, %c384_180] : memref<2x512xf32, #tpu.memory_space<vmem>>, vector<1x32xf32>
    tpu.vector_store %arg19[%c1_179, %c384_180], %755 {strides = array<i32>} : memref<2x512xf32, #tpu.memory_space<vmem>>, vector<1x32xf32>,
    %757 = vector.extract_strided_slice %754 {offsets = [1, 0], sizes = [1, 32], strides = [1, 1]} : vector<2x32xf32> to vector<1x32xf32>
    %c1_181 = arith.constant 1 : index
    %c448_182 = arith.constant 448 : index
    %758 = vector.load %arg19[%c1_181, %c448_182] : memref<2x512xf32, #tpu.memory_space<vmem>>, vector<1x32xf32>
    tpu.vector_store %arg19[%c1_181, %c448_182], %757 {strides = array<i32>} : memref<2x512xf32, #tpu.memory_space<vmem>>, vector<1x32xf32>,
    %cst_183 = arith.constant 0.000000e+00 : f32
    %759 = vector.broadcast %cst_183 : f32 to vector<2x32xf32>
    %cst_184 = arith.constant 0.000000e+00 : f32
    %760 = vector.broadcast %cst_184 : f32 to vector<2x32xf32>
    %761 = vector.extract_strided_slice %500 {offsets = [14, 0], sizes = [2, 128], strides = [1, 1]} : vector<16x128xf32> to vector<2x128xf32>
    %cst_185 = arith.constant dense<0.000000e+00> : vector<2x128xf32>
    %762 = tpu.matmul %759, %493, %cst_185 {dimension_numbers = #tpu.dot_dimension_numbers<[1], [0], [0], [1], [0, 0, 1, 1], [], []>} : vector<2x32xf32>, vector<32x128xf32>, vector<2x128xf32> -> vector<2x128xf32>
    %763 = arith.addf %761, %762 : vector<2x128xf32>
    %764 = vector.extract_strided_slice %763 {offsets = [0, 0], sizes = [2, 32], strides = [1, 1]} : vector<2x128xf32> to vector<2x32xf32>
    %765 = arith.negf %764 : vector<2x32xf32>
    %766 = math.exp %765 : vector<2x32xf32>
    %cst_186 = arith.constant 1.000000e+00 : f32
    %767 = vector.broadcast %cst_186 : f32 to vector<2x32xf32>
    %768 = arith.addf %767, %766 : vector<2x32xf32>
    %769 = arith.divf %767, %768 : vector<2x32xf32>
    %770 = vector.extract_strided_slice %763 {offsets = [0, 32], sizes = [2, 32], strides = [1, 1]} : vector<2x128xf32> to vector<2x32xf32>
    %771 = arith.negf %770 : vector<2x32xf32>
    %772 = math.exp %771 : vector<2x32xf32>
    %cst_187 = arith.constant 1.000000e+00 : f32
    %773 = vector.broadcast %cst_187 : f32 to vector<2x32xf32>
    %774 = arith.addf %773, %772 : vector<2x32xf32>
    %775 = arith.divf %773, %774 : vector<2x32xf32>
    %776 = vector.extract_strided_slice %763 {offsets = [0, 64], sizes = [2, 32], strides = [1, 1]} : vector<2x128xf32> to vector<2x32xf32>
    %777 = math.tanh %776 : vector<2x32xf32>
    %778 = vector.extract_strided_slice %763 {offsets = [0, 96], sizes = [2, 32], strides = [1, 1]} : vector<2x128xf32> to vector<2x32xf32>
    %779 = arith.negf %778 : vector<2x32xf32>
    %780 = math.exp %779 : vector<2x32xf32>
    %cst_188 = arith.constant 1.000000e+00 : f32
    %781 = vector.broadcast %cst_188 : f32 to vector<2x32xf32>
    %782 = arith.addf %781, %780 : vector<2x32xf32>
    %783 = arith.divf %781, %782 : vector<2x32xf32>
    %784 = arith.mulf %775, %760 : vector<2x32xf32>
    %785 = arith.mulf %769, %777 : vector<2x32xf32>
    %786 = arith.addf %784, %785 : vector<2x32xf32>
    %787 = math.tanh %786 : vector<2x32xf32>
    %788 = arith.mulf %783, %787 : vector<2x32xf32>
    %789 = vector.extract_strided_slice %788 {offsets = [0, 0], sizes = [1, 32], strides = [1, 1]} : vector<2x32xf32> to vector<1x32xf32>
    %c1_189 = arith.constant 1 : index
    %c416 = arith.constant 416 : index
    %790 = vector.load %arg19[%c1_189, %c416] : memref<2x512xf32, #tpu.memory_space<vmem>>, vector<1x32xf32>
    tpu.vector_store %arg19[%c1_189, %c416], %789 {strides = array<i32>} : memref<2x512xf32, #tpu.memory_space<vmem>>, vector<1x32xf32>,
    %791 = vector.extract_strided_slice %788 {offsets = [1, 0], sizes = [1, 32], strides = [1, 1]} : vector<2x32xf32> to vector<1x32xf32>
    %c1_190 = arith.constant 1 : index
    %c480 = arith.constant 480 : index
    %792 = vector.load %arg19[%c1_190, %c480] : memref<2x512xf32, #tpu.memory_space<vmem>>, vector<1x32xf32>
    tpu.vector_store %arg19[%c1_190, %c480], %791 {strides = array<i32>} : memref<2x512xf32, #tpu.memory_space<vmem>>, vector<1x32xf32>,
    %793 = vector.extract_strided_slice %500 {offsets = [12, 0], sizes = [2, 128], strides = [1, 1]} : vector<16x128xf32> to vector<2x128xf32>
    %cst_191 = arith.constant dense<0.000000e+00> : vector<2x128xf32>
    %794 = tpu.matmul %788, %493, %cst_191 {dimension_numbers = #tpu.dot_dimension_numbers<[1], [0], [0], [1], [0, 0, 1, 1], [], []>} : vector<2x32xf32>, vector<32x128xf32>, vector<2x128xf32> -> vector<2x128xf32>
    %795 = arith.addf %793, %794 : vector<2x128xf32>
    %796 = vector.extract_strided_slice %795 {offsets = [0, 0], sizes = [2, 32], strides = [1, 1]} : vector<2x128xf32> to vector<2x32xf32>
    %797 = arith.negf %796 : vector<2x32xf32>
    %798 = math.exp %797 : vector<2x32xf32>
    %cst_192 = arith.constant 1.000000e+00 : f32
    %799 = vector.broadcast %cst_192 : f32 to vector<2x32xf32>
    %800 = arith.addf %799, %798 : vector<2x32xf32>
    %801 = arith.divf %799, %800 : vector<2x32xf32>
    %802 = vector.extract_strided_slice %795 {offsets = [0, 32], sizes = [2, 32], strides = [1, 1]} : vector<2x128xf32> to vector<2x32xf32>
    %803 = arith.negf %802 : vector<2x32xf32>
    %804 = math.exp %803 : vector<2x32xf32>
    %cst_193 = arith.constant 1.000000e+00 : f32
    %805 = vector.broadcast %cst_193 : f32 to vector<2x32xf32>
    %806 = arith.addf %805, %804 : vector<2x32xf32>
    %807 = arith.divf %805, %806 : vector<2x32xf32>
    %808 = vector.extract_strided_slice %795 {offsets = [0, 64], sizes = [2, 32], strides = [1, 1]} : vector<2x128xf32> to vector<2x32xf32>
    %809 = math.tanh %808 : vector<2x32xf32>
    %810 = vector.extract_strided_slice %795 {offsets = [0, 96], sizes = [2, 32], strides = [1, 1]} : vector<2x128xf32> to vector<2x32xf32>
    %811 = arith.negf %810 : vector<2x32xf32>
    %812 = math.exp %811 : vector<2x32xf32>
    %cst_194 = arith.constant 1.000000e+00 : f32
    %813 = vector.broadcast %cst_194 : f32 to vector<2x32xf32>
    %814 = arith.addf %813, %812 : vector<2x32xf32>
    %815 = arith.divf %813, %814 : vector<2x32xf32>
    %816 = arith.mulf %807, %786 : vector<2x32xf32>
    %817 = arith.mulf %801, %809 : vector<2x32xf32>
    %818 = arith.addf %816, %817 : vector<2x32xf32>
    %819 = math.tanh %818 : vector<2x32xf32>
    %820 = arith.mulf %815, %819 : vector<2x32xf32>
    %821 = vector.extract_strided_slice %820 {offsets = [0, 0], sizes = [1, 32], strides = [1, 1]} : vector<2x32xf32> to vector<1x32xf32>
    %c1_195 = arith.constant 1 : index
    %c288 = arith.constant 288 : index
    %822 = vector.load %arg19[%c1_195, %c288] : memref<2x512xf32, #tpu.memory_space<vmem>>, vector<1x32xf32>
    tpu.vector_store %arg19[%c1_195, %c288], %821 {strides = array<i32>} : memref<2x512xf32, #tpu.memory_space<vmem>>, vector<1x32xf32>,
    %823 = vector.extract_strided_slice %820 {offsets = [1, 0], sizes = [1, 32], strides = [1, 1]} : vector<2x32xf32> to vector<1x32xf32>
    %c1_196 = arith.constant 1 : index
    %c352 = arith.constant 352 : index
    %824 = vector.load %arg19[%c1_196, %c352] : memref<2x512xf32, #tpu.memory_space<vmem>>, vector<1x32xf32>
    tpu.vector_store %arg19[%c1_196, %c352], %823 {strides = array<i32>} : memref<2x512xf32, #tpu.memory_space<vmem>>, vector<1x32xf32>,
    %825 = vector.extract_strided_slice %500 {offsets = [10, 0], sizes = [2, 128], strides = [1, 1]} : vector<16x128xf32> to vector<2x128xf32>
    %cst_197 = arith.constant dense<0.000000e+00> : vector<2x128xf32>
    %826 = tpu.matmul %820, %493, %cst_197 {dimension_numbers = #tpu.dot_dimension_numbers<[1], [0], [0], [1], [0, 0, 1, 1], [], []>} : vector<2x32xf32>, vector<32x128xf32>, vector<2x128xf32> -> vector<2x128xf32>
    %827 = arith.addf %825, %826 : vector<2x128xf32>
    %828 = vector.extract_strided_slice %827 {offsets = [0, 0], sizes = [2, 32], strides = [1, 1]} : vector<2x128xf32> to vector<2x32xf32>
    %829 = arith.negf %828 : vector<2x32xf32>
    %830 = math.exp %829 : vector<2x32xf32>
    %cst_198 = arith.constant 1.000000e+00 : f32
    %831 = vector.broadcast %cst_198 : f32 to vector<2x32xf32>
    %832 = arith.addf %831, %830 : vector<2x32xf32>
    %833 = arith.divf %831, %832 : vector<2x32xf32>
    %834 = vector.extract_strided_slice %827 {offsets = [0, 32], sizes = [2, 32], strides = [1, 1]} : vector<2x128xf32> to vector<2x32xf32>
    %835 = arith.negf %834 : vector<2x32xf32>
    %836 = math.exp %835 : vector<2x32xf32>
    %cst_199 = arith.constant 1.000000e+00 : f32
    %837 = vector.broadcast %cst_199 : f32 to vector<2x32xf32>
    %838 = arith.addf %837, %836 : vector<2x32xf32>
    %839 = arith.divf %837, %838 : vector<2x32xf32>
    %840 = vector.extract_strided_slice %827 {offsets = [0, 64], sizes = [2, 32], strides = [1, 1]} : vector<2x128xf32> to vector<2x32xf32>
    %841 = math.tanh %840 : vector<2x32xf32>
    %842 = vector.extract_strided_slice %827 {offsets = [0, 96], sizes = [2, 32], strides = [1, 1]} : vector<2x128xf32> to vector<2x32xf32>
    %843 = arith.negf %842 : vector<2x32xf32>
    %844 = math.exp %843 : vector<2x32xf32>
    %cst_200 = arith.constant 1.000000e+00 : f32
    %845 = vector.broadcast %cst_200 : f32 to vector<2x32xf32>
    %846 = arith.addf %845, %844 : vector<2x32xf32>
    %847 = arith.divf %845, %846 : vector<2x32xf32>
    %848 = arith.mulf %839, %818 : vector<2x32xf32>
    %849 = arith.mulf %833, %841 : vector<2x32xf32>
    %850 = arith.addf %848, %849 : vector<2x32xf32>
    %851 = math.tanh %850 : vector<2x32xf32>
    %852 = arith.mulf %847, %851 : vector<2x32xf32>
    %853 = vector.extract_strided_slice %852 {offsets = [0, 0], sizes = [1, 32], strides = [1, 1]} : vector<2x32xf32> to vector<1x32xf32>
    %c1_201 = arith.constant 1 : index
    %c160 = arith.constant 160 : index
    %854 = vector.load %arg19[%c1_201, %c160] : memref<2x512xf32, #tpu.memory_space<vmem>>, vector<1x32xf32>
    tpu.vector_store %arg19[%c1_201, %c160], %853 {strides = array<i32>} : memref<2x512xf32, #tpu.memory_space<vmem>>, vector<1x32xf32>,
    %855 = vector.extract_strided_slice %852 {offsets = [1, 0], sizes = [1, 32], strides = [1, 1]} : vector<2x32xf32> to vector<1x32xf32>
    %c1_202 = arith.constant 1 : index
    %c224 = arith.constant 224 : index
    %856 = vector.load %arg19[%c1_202, %c224] : memref<2x512xf32, #tpu.memory_space<vmem>>, vector<1x32xf32>
    tpu.vector_store %arg19[%c1_202, %c224], %855 {strides = array<i32>} : memref<2x512xf32, #tpu.memory_space<vmem>>, vector<1x32xf32>,
    %857 = vector.extract_strided_slice %500 {offsets = [8, 0], sizes = [2, 128], strides = [1, 1]} : vector<16x128xf32> to vector<2x128xf32>
    %cst_203 = arith.constant dense<0.000000e+00> : vector<2x128xf32>
    %858 = tpu.matmul %852, %493, %cst_203 {dimension_numbers = #tpu.dot_dimension_numbers<[1], [0], [0], [1], [0, 0, 1, 1], [], []>} : vector<2x32xf32>, vector<32x128xf32>, vector<2x128xf32> -> vector<2x128xf32>
    %859 = arith.addf %857, %858 : vector<2x128xf32>
    %860 = vector.extract_strided_slice %859 {offsets = [0, 0], sizes = [2, 32], strides = [1, 1]} : vector<2x128xf32> to vector<2x32xf32>
    %861 = arith.negf %860 : vector<2x32xf32>
    %862 = math.exp %861 : vector<2x32xf32>
    %cst_204 = arith.constant 1.000000e+00 : f32
    %863 = vector.broadcast %cst_204 : f32 to vector<2x32xf32>
    %864 = arith.addf %863, %862 : vector<2x32xf32>
    %865 = arith.divf %863, %864 : vector<2x32xf32>
    %866 = vector.extract_strided_slice %859 {offsets = [0, 32], sizes = [2, 32], strides = [1, 1]} : vector<2x128xf32> to vector<2x32xf32>
    %867 = arith.negf %866 : vector<2x32xf32>
    %868 = math.exp %867 : vector<2x32xf32>
    %cst_205 = arith.constant 1.000000e+00 : f32
    %869 = vector.broadcast %cst_205 : f32 to vector<2x32xf32>
    %870 = arith.addf %869, %868 : vector<2x32xf32>
    %871 = arith.divf %869, %870 : vector<2x32xf32>
    %872 = vector.extract_strided_slice %859 {offsets = [0, 64], sizes = [2, 32], strides = [1, 1]} : vector<2x128xf32> to vector<2x32xf32>
    %873 = math.tanh %872 : vector<2x32xf32>
    %874 = vector.extract_strided_slice %859 {offsets = [0, 96], sizes = [2, 32], strides = [1, 1]} : vector<2x128xf32> to vector<2x32xf32>
    %875 = arith.negf %874 : vector<2x32xf32>
    %876 = math.exp %875 : vector<2x32xf32>
    %cst_206 = arith.constant 1.000000e+00 : f32
    %877 = vector.broadcast %cst_206 : f32 to vector<2x32xf32>
    %878 = arith.addf %877, %876 : vector<2x32xf32>
    %879 = arith.divf %877, %878 : vector<2x32xf32>
    %880 = arith.mulf %871, %850 : vector<2x32xf32>
    %881 = arith.mulf %865, %873 : vector<2x32xf32>
    %882 = arith.addf %880, %881 : vector<2x32xf32>
    %883 = math.tanh %882 : vector<2x32xf32>
    %884 = arith.mulf %879, %883 : vector<2x32xf32>
    %885 = vector.extract_strided_slice %884 {offsets = [0, 0], sizes = [1, 32], strides = [1, 1]} : vector<2x32xf32> to vector<1x32xf32>
    %c1_207 = arith.constant 1 : index
    %c32_208 = arith.constant 32 : index
    %886 = vector.load %arg19[%c1_207, %c32_208] : memref<2x512xf32, #tpu.memory_space<vmem>>, vector<1x32xf32>
    tpu.vector_store %arg19[%c1_207, %c32_208], %885 {strides = array<i32>} : memref<2x512xf32, #tpu.memory_space<vmem>>, vector<1x32xf32>,
    %887 = vector.extract_strided_slice %884 {offsets = [1, 0], sizes = [1, 32], strides = [1, 1]} : vector<2x32xf32> to vector<1x32xf32>
    %c1_209 = arith.constant 1 : index
    %c96 = arith.constant 96 : index
    %888 = vector.load %arg19[%c1_209, %c96] : memref<2x512xf32, #tpu.memory_space<vmem>>, vector<1x32xf32>
    tpu.vector_store %arg19[%c1_209, %c96], %887 {strides = array<i32>} : memref<2x512xf32, #tpu.memory_space<vmem>>, vector<1x32xf32>,
    %889 = vector.extract_strided_slice %500 {offsets = [6, 0], sizes = [2, 128], strides = [1, 1]} : vector<16x128xf32> to vector<2x128xf32>
    %cst_210 = arith.constant dense<0.000000e+00> : vector<2x128xf32>
    %890 = tpu.matmul %884, %493, %cst_210 {dimension_numbers = #tpu.dot_dimension_numbers<[1], [0], [0], [1], [0, 0, 1, 1], [], []>} : vector<2x32xf32>, vector<32x128xf32>, vector<2x128xf32> -> vector<2x128xf32>
    %891 = arith.addf %889, %890 : vector<2x128xf32>
    %892 = vector.extract_strided_slice %891 {offsets = [0, 0], sizes = [2, 32], strides = [1, 1]} : vector<2x128xf32> to vector<2x32xf32>
    %893 = arith.negf %892 : vector<2x32xf32>
    %894 = math.exp %893 : vector<2x32xf32>
    %cst_211 = arith.constant 1.000000e+00 : f32
    %895 = vector.broadcast %cst_211 : f32 to vector<2x32xf32>
    %896 = arith.addf %895, %894 : vector<2x32xf32>
    %897 = arith.divf %895, %896 : vector<2x32xf32>
    %898 = vector.extract_strided_slice %891 {offsets = [0, 32], sizes = [2, 32], strides = [1, 1]} : vector<2x128xf32> to vector<2x32xf32>
    %899 = arith.negf %898 : vector<2x32xf32>
    %900 = math.exp %899 : vector<2x32xf32>
    %cst_212 = arith.constant 1.000000e+00 : f32
    %901 = vector.broadcast %cst_212 : f32 to vector<2x32xf32>
    %902 = arith.addf %901, %900 : vector<2x32xf32>
    %903 = arith.divf %901, %902 : vector<2x32xf32>
    %904 = vector.extract_strided_slice %891 {offsets = [0, 64], sizes = [2, 32], strides = [1, 1]} : vector<2x128xf32> to vector<2x32xf32>
    %905 = math.tanh %904 : vector<2x32xf32>
    %906 = vector.extract_strided_slice %891 {offsets = [0, 96], sizes = [2, 32], strides = [1, 1]} : vector<2x128xf32> to vector<2x32xf32>
    %907 = arith.negf %906 : vector<2x32xf32>
    %908 = math.exp %907 : vector<2x32xf32>
    %cst_213 = arith.constant 1.000000e+00 : f32
    %909 = vector.broadcast %cst_213 : f32 to vector<2x32xf32>
    %910 = arith.addf %909, %908 : vector<2x32xf32>
    %911 = arith.divf %909, %910 : vector<2x32xf32>
    %912 = arith.mulf %903, %882 : vector<2x32xf32>
    %913 = arith.mulf %897, %905 : vector<2x32xf32>
    %914 = arith.addf %912, %913 : vector<2x32xf32>
    %915 = math.tanh %914 : vector<2x32xf32>
    %916 = arith.mulf %911, %915 : vector<2x32xf32>
    %917 = vector.extract_strided_slice %916 {offsets = [0, 0], sizes = [1, 32], strides = [1, 1]} : vector<2x32xf32> to vector<1x32xf32>
    %c0_214 = arith.constant 0 : index
    %c416_215 = arith.constant 416 : index
    %918 = vector.load %arg19[%c0_214, %c416_215] : memref<2x512xf32, #tpu.memory_space<vmem>>, vector<1x32xf32>
    tpu.vector_store %arg19[%c0_214, %c416_215], %917 {strides = array<i32>} : memref<2x512xf32, #tpu.memory_space<vmem>>, vector<1x32xf32>,
    %919 = vector.extract_strided_slice %916 {offsets = [1, 0], sizes = [1, 32], strides = [1, 1]} : vector<2x32xf32> to vector<1x32xf32>
    %c0_216 = arith.constant 0 : index
    %c480_217 = arith.constant 480 : index
    %920 = vector.load %arg19[%c0_216, %c480_217] : memref<2x512xf32, #tpu.memory_space<vmem>>, vector<1x32xf32>
    tpu.vector_store %arg19[%c0_216, %c480_217], %919 {strides = array<i32>} : memref<2x512xf32, #tpu.memory_space<vmem>>, vector<1x32xf32>,
    %921 = vector.extract_strided_slice %500 {offsets = [4, 0], sizes = [2, 128], strides = [1, 1]} : vector<16x128xf32> to vector<2x128xf32>
    %cst_218 = arith.constant dense<0.000000e+00> : vector<2x128xf32>
    %922 = tpu.matmul %916, %493, %cst_218 {dimension_numbers = #tpu.dot_dimension_numbers<[1], [0], [0], [1], [0, 0, 1, 1], [], []>} : vector<2x32xf32>, vector<32x128xf32>, vector<2x128xf32> -> vector<2x128xf32>
    %923 = arith.addf %921, %922 : vector<2x128xf32>
    %924 = vector.extract_strided_slice %923 {offsets = [0, 0], sizes = [2, 32], strides = [1, 1]} : vector<2x128xf32> to vector<2x32xf32>
    %925 = arith.negf %924 : vector<2x32xf32>
    %926 = math.exp %925 : vector<2x32xf32>
    %cst_219 = arith.constant 1.000000e+00 : f32
    %927 = vector.broadcast %cst_219 : f32 to vector<2x32xf32>
    %928 = arith.addf %927, %926 : vector<2x32xf32>
    %929 = arith.divf %927, %928 : vector<2x32xf32>
    %930 = vector.extract_strided_slice %923 {offsets = [0, 32], sizes = [2, 32], strides = [1, 1]} : vector<2x128xf32> to vector<2x32xf32>
    %931 = arith.negf %930 : vector<2x32xf32>
    %932 = math.exp %931 : vector<2x32xf32>
    %cst_220 = arith.constant 1.000000e+00 : f32
    %933 = vector.broadcast %cst_220 : f32 to vector<2x32xf32>
    %934 = arith.addf %933, %932 : vector<2x32xf32>
    %935 = arith.divf %933, %934 : vector<2x32xf32>
    %936 = vector.extract_strided_slice %923 {offsets = [0, 64], sizes = [2, 32], strides = [1, 1]} : vector<2x128xf32> to vector<2x32xf32>
    %937 = math.tanh %936 : vector<2x32xf32>
    %938 = vector.extract_strided_slice %923 {offsets = [0, 96], sizes = [2, 32], strides = [1, 1]} : vector<2x128xf32> to vector<2x32xf32>
    %939 = arith.negf %938 : vector<2x32xf32>
    %940 = math.exp %939 : vector<2x32xf32>
    %cst_221 = arith.constant 1.000000e+00 : f32
    %941 = vector.broadcast %cst_221 : f32 to vector<2x32xf32>
    %942 = arith.addf %941, %940 : vector<2x32xf32>
    %943 = arith.divf %941, %942 : vector<2x32xf32>
    %944 = arith.mulf %935, %914 : vector<2x32xf32>
    %945 = arith.mulf %929, %937 : vector<2x32xf32>
    %946 = arith.addf %944, %945 : vector<2x32xf32>
    %947 = math.tanh %946 : vector<2x32xf32>
    %948 = arith.mulf %943, %947 : vector<2x32xf32>
    %949 = vector.extract_strided_slice %948 {offsets = [0, 0], sizes = [1, 32], strides = [1, 1]} : vector<2x32xf32> to vector<1x32xf32>
    %c0_222 = arith.constant 0 : index
    %c288_223 = arith.constant 288 : index
    %950 = vector.load %arg19[%c0_222, %c288_223] : memref<2x512xf32, #tpu.memory_space<vmem>>, vector<1x32xf32>
    tpu.vector_store %arg19[%c0_222, %c288_223], %949 {strides = array<i32>} : memref<2x512xf32, #tpu.memory_space<vmem>>, vector<1x32xf32>,
    %951 = vector.extract_strided_slice %948 {offsets = [1, 0], sizes = [1, 32], strides = [1, 1]} : vector<2x32xf32> to vector<1x32xf32>
    %c0_224 = arith.constant 0 : index
    %c352_225 = arith.constant 352 : index
    %952 = vector.load %arg19[%c0_224, %c352_225] : memref<2x512xf32, #tpu.memory_space<vmem>>, vector<1x32xf32>
    tpu.vector_store %arg19[%c0_224, %c352_225], %951 {strides = array<i32>} : memref<2x512xf32, #tpu.memory_space<vmem>>, vector<1x32xf32>,
    %953 = vector.extract_strided_slice %500 {offsets = [2, 0], sizes = [2, 128], strides = [1, 1]} : vector<16x128xf32> to vector<2x128xf32>
    %cst_226 = arith.constant dense<0.000000e+00> : vector<2x128xf32>
    %954 = tpu.matmul %948, %493, %cst_226 {dimension_numbers = #tpu.dot_dimension_numbers<[1], [0], [0], [1], [0, 0, 1, 1], [], []>} : vector<2x32xf32>, vector<32x128xf32>, vector<2x128xf32> -> vector<2x128xf32>
    %955 = arith.addf %953, %954 : vector<2x128xf32>
    %956 = vector.extract_strided_slice %955 {offsets = [0, 0], sizes = [2, 32], strides = [1, 1]} : vector<2x128xf32> to vector<2x32xf32>
    %957 = arith.negf %956 : vector<2x32xf32>
    %958 = math.exp %957 : vector<2x32xf32>
    %cst_227 = arith.constant 1.000000e+00 : f32
    %959 = vector.broadcast %cst_227 : f32 to vector<2x32xf32>
    %960 = arith.addf %959, %958 : vector<2x32xf32>
    %961 = arith.divf %959, %960 : vector<2x32xf32>
    %962 = vector.extract_strided_slice %955 {offsets = [0, 32], sizes = [2, 32], strides = [1, 1]} : vector<2x128xf32> to vector<2x32xf32>
    %963 = arith.negf %962 : vector<2x32xf32>
    %964 = math.exp %963 : vector<2x32xf32>
    %cst_228 = arith.constant 1.000000e+00 : f32
    %965 = vector.broadcast %cst_228 : f32 to vector<2x32xf32>
    %966 = arith.addf %965, %964 : vector<2x32xf32>
    %967 = arith.divf %965, %966 : vector<2x32xf32>
    %968 = vector.extract_strided_slice %955 {offsets = [0, 64], sizes = [2, 32], strides = [1, 1]} : vector<2x128xf32> to vector<2x32xf32>
    %969 = math.tanh %968 : vector<2x32xf32>
    %970 = vector.extract_strided_slice %955 {offsets = [0, 96], sizes = [2, 32], strides = [1, 1]} : vector<2x128xf32> to vector<2x32xf32>
    %971 = arith.negf %970 : vector<2x32xf32>
    %972 = math.exp %971 : vector<2x32xf32>
    %cst_229 = arith.constant 1.000000e+00 : f32
    %973 = vector.broadcast %cst_229 : f32 to vector<2x32xf32>
    %974 = arith.addf %973, %972 : vector<2x32xf32>
    %975 = arith.divf %973, %974 : vector<2x32xf32>
    %976 = arith.mulf %967, %946 : vector<2x32xf32>
    %977 = arith.mulf %961, %969 : vector<2x32xf32>
    %978 = arith.addf %976, %977 : vector<2x32xf32>
    %979 = math.tanh %978 : vector<2x32xf32>
    %980 = arith.mulf %975, %979 : vector<2x32xf32>
    %981 = vector.extract_strided_slice %980 {offsets = [0, 0], sizes = [1, 32], strides = [1, 1]} : vector<2x32xf32> to vector<1x32xf32>
    %c0_230 = arith.constant 0 : index
    %c160_231 = arith.constant 160 : index
    %982 = vector.load %arg19[%c0_230, %c160_231] : memref<2x512xf32, #tpu.memory_space<vmem>>, vector<1x32xf32>
    tpu.vector_store %arg19[%c0_230, %c160_231], %981 {strides = array<i32>} : memref<2x512xf32, #tpu.memory_space<vmem>>, vector<1x32xf32>,
    %983 = vector.extract_strided_slice %980 {offsets = [1, 0], sizes = [1, 32], strides = [1, 1]} : vector<2x32xf32> to vector<1x32xf32>
    %c0_232 = arith.constant 0 : index
    %c224_233 = arith.constant 224 : index
    %984 = vector.load %arg19[%c0_232, %c224_233] : memref<2x512xf32, #tpu.memory_space<vmem>>, vector<1x32xf32>
    tpu.vector_store %arg19[%c0_232, %c224_233], %983 {strides = array<i32>} : memref<2x512xf32, #tpu.memory_space<vmem>>, vector<1x32xf32>,
    %985 = vector.extract_strided_slice %500 {offsets = [0, 0], sizes = [2, 128], strides = [1, 1]} : vector<16x128xf32> to vector<2x128xf32>
    %cst_234 = arith.constant dense<0.000000e+00> : vector<2x128xf32>
    %986 = tpu.matmul %980, %493, %cst_234 {dimension_numbers = #tpu.dot_dimension_numbers<[1], [0], [0], [1], [0, 0, 1, 1], [], []>} : vector<2x32xf32>, vector<32x128xf32>, vector<2x128xf32> -> vector<2x128xf32>
    %987 = arith.addf %985, %986 : vector<2x128xf32>
    %988 = vector.extract_strided_slice %987 {offsets = [0, 0], sizes = [2, 32], strides = [1, 1]} : vector<2x128xf32> to vector<2x32xf32>
    %989 = arith.negf %988 : vector<2x32xf32>
    %990 = math.exp %989 : vector<2x32xf32>
    %cst_235 = arith.constant 1.000000e+00 : f32
    %991 = vector.broadcast %cst_235 : f32 to vector<2x32xf32>
    %992 = arith.addf %991, %990 : vector<2x32xf32>
    %993 = arith.divf %991, %992 : vector<2x32xf32>
    %994 = vector.extract_strided_slice %987 {offsets = [0, 32], sizes = [2, 32], strides = [1, 1]} : vector<2x128xf32> to vector<2x32xf32>
    %995 = arith.negf %994 : vector<2x32xf32>
    %996 = math.exp %995 : vector<2x32xf32>
    %cst_236 = arith.constant 1.000000e+00 : f32
    %997 = vector.broadcast %cst_236 : f32 to vector<2x32xf32>
    %998 = arith.addf %997, %996 : vector<2x32xf32>
    %999 = arith.divf %997, %998 : vector<2x32xf32>
    %1000 = vector.extract_strided_slice %987 {offsets = [0, 64], sizes = [2, 32], strides = [1, 1]} : vector<2x128xf32> to vector<2x32xf32>
    %1001 = math.tanh %1000 : vector<2x32xf32>
    %1002 = vector.extract_strided_slice %987 {offsets = [0, 96], sizes = [2, 32], strides = [1, 1]} : vector<2x128xf32> to vector<2x32xf32>
    %1003 = arith.negf %1002 : vector<2x32xf32>
    %1004 = math.exp %1003 : vector<2x32xf32>
    %cst_237 = arith.constant 1.000000e+00 : f32
    %1005 = vector.broadcast %cst_237 : f32 to vector<2x32xf32>
    %1006 = arith.addf %1005, %1004 : vector<2x32xf32>
    %1007 = arith.divf %1005, %1006 : vector<2x32xf32>
    %1008 = arith.mulf %999, %978 : vector<2x32xf32>
    %1009 = arith.mulf %993, %1001 : vector<2x32xf32>
    %1010 = arith.addf %1008, %1009 : vector<2x32xf32>
    %1011 = math.tanh %1010 : vector<2x32xf32>
    %1012 = arith.mulf %1007, %1011 : vector<2x32xf32>
    %1013 = vector.extract_strided_slice %1012 {offsets = [0, 0], sizes = [1, 32], strides = [1, 1]} : vector<2x32xf32> to vector<1x32xf32>
    %c0_238 = arith.constant 0 : index
    %c32_239 = arith.constant 32 : index
    %1014 = vector.load %arg19[%c0_238, %c32_239] : memref<2x512xf32, #tpu.memory_space<vmem>>, vector<1x32xf32>
    tpu.vector_store %arg19[%c0_238, %c32_239], %1013 {strides = array<i32>} : memref<2x512xf32, #tpu.memory_space<vmem>>, vector<1x32xf32>,
    %1015 = vector.extract_strided_slice %1012 {offsets = [1, 0], sizes = [1, 32], strides = [1, 1]} : vector<2x32xf32> to vector<1x32xf32>
    %c0_240 = arith.constant 0 : index
    %c96_241 = arith.constant 96 : index
    %1016 = vector.load %arg19[%c0_240, %c96_241] : memref<2x512xf32, #tpu.memory_space<vmem>>, vector<1x32xf32>
    tpu.vector_store %arg19[%c0_240, %c96_241], %1015 {strides = array<i32>} : memref<2x512xf32, #tpu.memory_space<vmem>>, vector<1x32xf32>,
    %c0_242 = arith.constant 0 : index
    %c0_243 = arith.constant 0 : index
    %1017 = vector.load %arg19[%c0_242, %c0_243] : memref<2x512xf32, #tpu.memory_space<vmem>>, vector<2x512xf32>
    %c0_244 = arith.constant 0 : index
    %c0_245 = arith.constant 0 : index
    %1018 = vector.load %arg15[%c0_244, %c0_245] : memref<512x4xf32, #tpu.memory_space<vmem>>, vector<512x4xf32>
    %cst_246 = arith.constant dense<0.000000e+00> : vector<2x4xf32>
    %1019 = tpu.matmul %1017, %1018, %cst_246 {dimension_numbers = #tpu.dot_dimension_numbers<[1], [0], [0], [1], [0, 0, 1, 1], [], []>} : vector<2x512xf32>, vector<512x4xf32>, vector<2x4xf32> -> vector<2x4xf32>
    %c0_247 = arith.constant 0 : index
    %c0_248 = arith.constant 0 : index
    %1020 = vector.load %arg16[%c0_247, %c0_248] : memref<1x4xf32, #tpu.memory_space<vmem>>, vector<1x4xf32>
    %1021 = vector.broadcast %1020 : vector<1x4xf32> to vector<2x4xf32>
    %1022 = arith.addf %1019, %1021 : vector<2x4xf32>
    %1023 = arith.negf %1022 : vector<2x4xf32>
    %1024 = math.exp %1023 : vector<2x4xf32>
    %cst_249 = arith.constant 1.000000e+00 : f32
    %1025 = vector.broadcast %cst_249 : f32 to vector<2x4xf32>
    %1026 = arith.addf %1025, %1024 : vector<2x4xf32>
    %1027 = arith.divf %1025, %1026 : vector<2x4xf32>
    %c0_250 = arith.constant 0 : index
    %c0_251 = arith.constant 0 : index
    %1028 = vector.load %arg17[%c0_250, %c0_251] : memref<2x4xf32, #tpu.memory_space<vmem>>, vector<2x4xf32>
    tpu.vector_store %arg17[%c0_250, %c0_251], %1027 {strides = array<i32>} : memref<2x4xf32, #tpu.memory_space<vmem>>, vector<2x4xf32>,
    return
  }
  func.func @transform_0(%arg0: i32) -> (i32, i32) {
    %c0_i32 = arith.constant 0 : i32
    %c0_i32_0 = arith.constant 0 : i32
    %c0_i32_1 = arith.constant 0 : i32
    return %c0_i32, %c0_i32_0 : i32, i32
  }
  func.func @transform_1(%arg0: i32) -> (i32, i32) {
    %c0_i32 = arith.constant 0 : i32
    %c0_i32_0 = arith.constant 0 : i32
    %c0_i32_1 = arith.constant 0 : i32
    return %c0_i32, %c0_i32_0 : i32, i32
  }
  func.func @transform_2(%arg0: i32) -> (i32, i32) {
    %c0_i32 = arith.constant 0 : i32
    %c0_i32_0 = arith.constant 0 : i32
    %c0_i32_1 = arith.constant 0 : i32
    return %c0_i32, %c0_i32_0 : i32, i32
  }
  func.func @transform_3(%arg0: i32) -> (i32, i32) {
    %c0_i32 = arith.constant 0 : i32
    %c0_i32_0 = arith.constant 0 : i32
    %c0_i32_1 = arith.constant 0 : i32
    return %c0_i32, %c0_i32_0 : i32, i32
  }
  func.func @transform_4(%arg0: i32) -> (i32, i32) {
    %c0_i32 = arith.constant 0 : i32
    %c0_i32_0 = arith.constant 0 : i32
    %c0_i32_1 = arith.constant 0 : i32
    return %c0_i32, %c0_i32_0 : i32, i32
  }
  func.func @transform_5(%arg0: i32) -> (i32, i32) {
    %c0_i32 = arith.constant 0 : i32
    %c0_i32_0 = arith.constant 0 : i32
    %c0_i32_1 = arith.constant 0 : i32
    return %c0_i32, %c0_i32_0 : i32, i32
  }
  func.func @transform_6(%arg0: i32) -> (i32, i32) {
    %c0_i32 = arith.constant 0 : i32
    %c0_i32_0 = arith.constant 0 : i32
    %c0_i32_1 = arith.constant 0 : i32
    return %c0_i32, %c0_i32_0 : i32, i32
  }
  func.func @transform_7(%arg0: i32) -> (i32, i32) {
    %c0_i32 = arith.constant 0 : i32
    %c0_i32_0 = arith.constant 0 : i32
    %c0_i32_1 = arith.constant 0 : i32
    return %c0_i32, %c0_i32_0 : i32, i32
  }
  func.func @transform_8(%arg0: i32) -> (i32, i32) {
    %c0_i32 = arith.constant 0 : i32
    %c0_i32_0 = arith.constant 0 : i32
    %c0_i32_1 = arith.constant 0 : i32
    return %c0_i32, %c0_i32_0 : i32, i32
  }
  func.func @transform_9(%arg0: i32) -> (i32, i32) {
    %c0_i32 = arith.constant 0 : i32
    %c0_i32_0 = arith.constant 0 : i32
    %c0_i32_1 = arith.constant 0 : i32
    return %c0_i32, %c0_i32_0 : i32, i32
  }
  func.func @transform_10(%arg0: i32) -> (i32, i32) {
    %c0_i32 = arith.constant 0 : i32
    %c0_i32_0 = arith.constant 0 : i32
    %c0_i32_1 = arith.constant 0 : i32
    return %c0_i32, %c0_i32_0 : i32, i32
  }
  func.func @transform_11(%arg0: i32) -> (i32, i32) {
    %c0_i32 = arith.constant 0 : i32
    %c0_i32_0 = arith.constant 0 : i32
    %c0_i32_1 = arith.constant 0 : i32
    return %c0_i32, %c0_i32_0 : i32, i32
  }
  func.func @transform_12(%arg0: i32) -> (i32, i32) {
    %c0_i32 = arith.constant 0 : i32
    %c0_i32_0 = arith.constant 0 : i32
    %c0_i32_1 = arith.constant 0 : i32
    return %c0_i32, %c0_i32_0 : i32, i32
  }
  func.func @transform_13(%arg0: i32) -> (i32, i32) {
    %c0_i32 = arith.constant 0 : i32
    %c0_i32_0 = arith.constant 0 : i32
    %c0_i32_1 = arith.constant 0 : i32
    return %c0_i32, %c0_i32_0 : i32, i32
  }
  func.func @transform_14(%arg0: i32) -> (i32, i32) {
    %c0_i32 = arith.constant 0 : i32
    %c0_i32_0 = arith.constant 0 : i32
    %c0_i32_1 = arith.constant 0 : i32
    return %c0_i32, %c0_i32_0 : i32, i32
  }
  func.func @transform_15(%arg0: i32) -> (i32, i32) {
    %c0_i32 = arith.constant 0 : i32
    %c0_i32_0 = arith.constant 0 : i32
    %c0_i32_1 = arith.constant 0 : i32
    return %c0_i32, %c0_i32_0 : i32, i32
  }
  func.func @transform_16(%arg0: i32) -> (i32, i32) {
    %c0_i32 = arith.constant 0 : i32
    %c0_i32_0 = arith.constant 0 : i32
    %c0_i32_1 = arith.constant 0 : i32
    return %c0_i32, %c0_i32_0 : i32, i32
  }
}

</mosaic_0001>

<llo_original>
// kernel: tpu_custom_call.1
$region0: #{tpu_custom_call.1}
  #allocation0 [shape = 'u32[]', space=smem, size = 0x4, offset = 0x4, fixed_abs, tag = 'smem constant byte address 0x4 - core index']
  #allocation1 [shape = 'u32[144,128]{1,0:T(1,128)}', space=vmem, size = 0x12000, scoped, tag = 'internal scratch']
  #allocation2 [shape = 'f32[16,64]{1,0:T(8,128)}', space=vmem, size = 0x2000, scoped, tag = 'scratch operand']
  #allocation3 [shape = 'f32[2,512]{1,0:T(2,128)}', space=vmem, size = 0x1000, scoped, tag = 'scratch operand']
  %s0 = inlined_call_operand.vmem [shape: s32[16,1], index: 0, kind: input, shape index: {}]
  %s1 = inlined_call_operand.vmem [shape: f32[50,16], index: 1, kind: input, shape index: {}]
  %s2 = inlined_call_operand.vmem [shape: f32[16,128], index: 2, kind: input, shape index: {}]
  %s3 = inlined_call_operand.vmem [shape: f32[32,128], index: 3, kind: input, shape index: {}]
  %s4 = inlined_call_operand.vmem [shape: f32[1,128], index: 4, kind: input, shape index: {}]
  %s5 = inlined_call_operand.vmem [shape: f32[16,128], index: 5, kind: input, shape index: {}]
  %s6 = inlined_call_operand.vmem [shape: f32[32,128], index: 6, kind: input, shape index: {}]
  %s7 = inlined_call_operand.vmem [shape: f32[1,128], index: 7, kind: input, shape index: {}]
  %s8 = inlined_call_operand.vmem [shape: f32[64,128], index: 8, kind: input, shape index: {}]
  %s9 = inlined_call_operand.vmem [shape: f32[32,128], index: 9, kind: input, shape index: {}]
  %s10 = inlined_call_operand.vmem [shape: f32[1,128], index: 10, kind: input, shape index: {}]
  %s11 = inlined_call_operand.vmem [shape: f32[64,128], index: 11, kind: input, shape index: {}]
  %s12 = inlined_call_operand.vmem [shape: f32[32,128], index: 12, kind: input, shape index: {}]
  %s13 = inlined_call_operand.vmem [shape: f32[1,128], index: 13, kind: input, shape index: {}]
  %s14 = inlined_call_operand.vmem [shape: f32[512,4], index: 14, kind: input, shape index: {}]
  %s15 = inlined_call_operand.vmem [shape: f32[1,4], index: 15, kind: input, shape index: {}]
  %s16 = inlined_call_operand.hbm [shape: f32[2,4], index: 16, kind: output, shape index: {}]
  %s17 = sld [smem:[#allocation0]]
  $region74: #{tpu_custom_call.1} parent=0
    _
  %s19 = ssub.s32 1, %s17
  %s20 = scalar_select 0, %s19, %s17
  $region1: #{tpu_custom_call.1} parent=0
    #allocation4 [shape = 'u8[1024]{0}', space=vmem, size = 0x400, scoped, tag = 'output window, operand 0, single buffered']
    #allocation5 [shape = 's32[1]{0}', space=sflag, size = 0x4, scoped, tag = 'scoped memory for tpu_custom_call.1']
    %21 = vsyncpa [#allocation5], 0
    // Predicated region
    $region2: #{tpu_custom_call.1} parent=1 // pred_check
      _
    $region3: #{tpu_custom_call.1} parent=1 // pred_check_branch
      %23 = sbr.rel (0) target = $region5
    $region4: #{tpu_custom_call.1} parent=1 // pred_region
      _
    $region5: #{tpu_custom_call.1} parent=1 // pred_fallthru
      _
    // Predicated region
    $region6: #{tpu_custom_call.1} parent=1 // pred_check
      _
    $region7: #{tpu_custom_call.1} parent=1 // pred_check_branch
      %25 = sbr.rel (0) target = $region9
    $region8: #{tpu_custom_call.1} parent=1 // pred_region
      _
    $region9: #{tpu_custom_call.1} parent=1 // pred_fallthru
      _
    // Predicated region
    $region10: #{tpu_custom_call.1} parent=1 // pred_check
      _
    $region11: #{tpu_custom_call.1} parent=1 // pred_check_branch
      %27 = sbr.rel (0) target = $region13
    $region12: #{tpu_custom_call.1} parent=1 // pred_region
      _
    $region13: #{tpu_custom_call.1} parent=1 // pred_fallthru
      _
    // Predicated region
    $region14: #{tpu_custom_call.1} parent=1 // pred_check
      _
    $region15: #{tpu_custom_call.1} parent=1 // pred_check_branch
      %29 = sbr.rel (0) target = $region17
    $region16: #{tpu_custom_call.1} parent=1 // pred_region
      _
    $region17: #{tpu_custom_call.1} parent=1 // pred_fallthru
      _
    // Predicated region
    $region18: #{tpu_custom_call.1} parent=1 // pred_check
      _
    $region19: #{tpu_custom_call.1} parent=1 // pred_check_branch
      %31 = sbr.rel (0) target = $region21
    $region20: #{tpu_custom_call.1} parent=1 // pred_region
      _
    $region21: #{tpu_custom_call.1} parent=1 // pred_fallthru
      _
    // Predicated region
    $region22: #{tpu_custom_call.1} parent=1 // pred_check
      _
    $region23: #{tpu_custom_call.1} parent=1 // pred_check_branch
      %33 = sbr.rel (0) target = $region25
    $region24: #{tpu_custom_call.1} parent=1 // pred_region
      _
    $region25: #{tpu_custom_call.1} parent=1 // pred_fallthru
      _
    // Predicated region
    $region26: #{tpu_custom_call.1} parent=1 // pred_check
      _
    $region27: #{tpu_custom_call.1} parent=1 // pred_check_branch
      %35 = sbr.rel (0) target = $region29
    $region28: #{tpu_custom_call.1} parent=1 // pred_region
      _
    $region29: #{tpu_custom_call.1} parent=1 // pred_fallthru
      _
    // Predicated region
    $region30: #{tpu_custom_call.1} parent=1 // pred_check
      _
    $region31: #{tpu_custom_call.1} parent=1 // pred_check_branch
      %37 = sbr.rel (0) target = $region33
    $region32: #{tpu_custom_call.1} parent=1 // pred_region
      _
    $region33: #{tpu_custom_call.1} parent=1 // pred_fallthru
      _
    // Predicated region
    $region34: #{tpu_custom_call.1} parent=1 // pred_check
      _
    $region35: #{tpu_custom_call.1} parent=1 // pred_check_branch
      %39 = sbr.rel (0) target = $region37
    $region36: #{tpu_custom_call.1} parent=1 // pred_region
      _
    $region37: #{tpu_custom_call.1} parent=1 // pred_fallthru
      _
    // Predicated region
    $region38: #{tpu_custom_call.1} parent=1 // pred_check
      _
    $region39: #{tpu_custom_call.1} parent=1 // pred_check_branch
      %41 = sbr.rel (0) target = $region41
    $region40: #{tpu_custom_call.1} parent=1 // pred_region
      _
    $region41: #{tpu_custom_call.1} parent=1 // pred_fallthru
      _
    // Predicated region
    $region42: #{tpu_custom_call.1} parent=1 // pred_check
      _
    $region43: #{tpu_custom_call.1} parent=1 // pred_check_branch
      %43 = sbr.rel (0) target = $region45
    $region44: #{tpu_custom_call.1} parent=1 // pred_region
      _
    $region45: #{tpu_custom_call.1} parent=1 // pred_fallthru
      _
    // Predicated region
    $region46: #{tpu_custom_call.1} parent=1 // pred_check
      _
    $region47: #{tpu_custom_call.1} parent=1 // pred_check_branch
      %45 = sbr.rel (0) target = $region49
    $region48: #{tpu_custom_call.1} parent=1 // pred_region
      _
    $region49: #{tpu_custom_call.1} parent=1 // pred_fallthru
      _
    // Predicated region
    $region50: #{tpu_custom_call.1} parent=1 // pred_check
      _
    $region51: #{tpu_custom_call.1} parent=1 // pred_check_branch
      %47 = sbr.rel (0) target = $region53
    $region52: #{tpu_custom_call.1} parent=1 // pred_region
      _
    $region53: #{tpu_custom_call.1} parent=1 // pred_fallthru
      _
    // Predicated region
    $region54: #{tpu_custom_call.1} parent=1 // pred_check
      _
    $region55: #{tpu_custom_call.1} parent=1 // pred_check_branch
      %49 = sbr.rel (0) target = $region57
    $region56: #{tpu_custom_call.1} parent=1 // pred_region
      _
    $region57: #{tpu_custom_call.1} parent=1 // pred_fallthru
      _
    // Predicated region
    $region58: #{tpu_custom_call.1} parent=1 // pred_check
      _
    $region59: #{tpu_custom_call.1} parent=1 // pred_check_branch
      %51 = sbr.rel (0) target = $region61
    $region60: #{tpu_custom_call.1} parent=1 // pred_region
      _
    $region61: #{tpu_custom_call.1} parent=1 // pred_fallthru
      _
    // Predicated region
    $region62: #{tpu_custom_call.1} parent=1 // pred_check
      _
    $region63: #{tpu_custom_call.1} parent=1 // pred_check_branch
      %53 = sbr.rel (0) target = $region65
    $region64: #{tpu_custom_call.1} parent=1 // pred_region
      _
    $region65: #{tpu_custom_call.1} parent=1 // pred_fallthru
      _
    %v54 = vld [vmem:[%s0] sm:$0xff]
    %v55 = vld [vmem:[%s0 + $0x8] sm:$0xff]
    %v56 = vlaneseq
    %v57 = vand.u32 %v56, 127
    %58 = vset.pattern.permute.xlu0 0
    %59 = vperm.xlu0 %58, %v54
    %v60 = vpop.permute.xlu0 %59
    %61 = vset.pattern.permute.xlu0 0
    %62 = vperm.xlu0 %61, %v55
    %v63 = vpop.permute.xlu0 %62
    %vm64 = vcmp.eq.s32.totalorder %v60, %v57
    %vm65 = vcmp.eq.s32.totalorder %v63, %v57
    %v66 = vsel %vm64, 1, 0
    %v67 = vsel %vm65, 1, 0
    %v68 = vcvt.s32.f32 %v66
    %v69 = vcvt.s32.f32 %v67
    %v70 = vld [vmem:[%s1] sm:$0xff]
    %v71 = vld [vmem:[%s1 + $0x8] sm:$0xff]
    %v72 = vld [vmem:[%s1 + $0x10] sm:$0xff]
    %v73 = vld [vmem:[%s1 + $0x18] sm:$0xff]
    %v74 = vld [vmem:[%s1 + $0x20] sm:$0xff]
    %v75 = vld [vmem:[%s1 + $0x28] sm:$0xff]
    %v76 = vld [vmem:[%s1 + $0x30] sm:$0x3]
    %vm77 = vcmask 408576
    %v79 = vsel %vm77, %v68, 0
    %v82 = vsel %vm77, %v69, 0
    %vm84 = vcmask 1041408
    %v86 = vsel %vm84, %v76, 0
    %88 = vmatprep.subr.mxu0 0.0
    %89 = vmatpush1.msra.mxu0 %v70
    %90 = vmatprep.subr.mxu0 0.0
    %91 = vmatpush1.msra.mxu0 %v71
    %92 = vmatprep.subr.mxu0 0.0
    %93 = vmatpush1.msra.mxu0 %v72
    %94 = vmatprep.subr.mxu0 0.0
    %95 = vmatpush1.msra.mxu0 %v73
    %96 = vmatprep.subr.mxu0 0.0
    %97 = vmatpush1.msra.mxu0 %v74
    %98 = vmatprep.subr.mxu0 0.0
    %99 = vmatpush1.msra.mxu0 %v75
    %100 = vmatprep.subr.mxu0 0.0
    %101 = vmatpush1.msra.mxu0 %v86
    %102 = vmatprep.subr.mxu0 0.0
    %103 = vmatpush1.msra.mxu0 0.0
    %104 = vmatprep.subr.mxu0 0.0
    %105 = vmatpush1.msra.mxu0 0.0
    %106 = vmatprep.subr.mxu0 0.0
    %107 = vmatpush1.msra.mxu0 0.0
    %108 = vmatprep.subr.mxu0 0.0
    %109 = vmatpush1.msra.mxu0 0.0
    %110 = vmatprep.subr.mxu0 0.0
    %111 = vmatpush1.msra.mxu0 0.0
    %112 = vmatprep.subr.mxu0 0.0
    %113 = vmatpush1.msra.mxu0 0.0
    %114 = vmatprep.subr.mxu0 0.0
    %115 = vmatpush1.msra.mxu0 0.0
    %116 = vmatprep.subr.mxu0 0.0
    %117 = vmatpush1.msra.mxu0 0.0
    %118 = vmatprep.subr.mxu0 0.0
    %119 = vmatpush1.msra.mxu0 0.0
    %120 = vmatprep.subr.mxu0 0.0
    %121 = vmatpush1.msra.mxu0 0.0
    %122 = vmatprep.subr.mxu0 0.0
    %123 = vmatpush1.msra.mxu0 0.0
    %124 = vmatprep.subr.mxu0 0.0
    %125 = vmatpush1.msra.mxu0 0.0
    %126 = vmatprep.subr.mxu0 0.0
    %127 = vmatpush1.msra.mxu0 0.0
    %128 = vmatprep.subr.mxu0 0.0
    %129 = vmatpush1.msra.mxu0 0.0
    %130 = vmatprep.subr.mxu0 0.0
    %131 = vmatpush1.msra.mxu0 0.0
    %132 = vmatprep.subr.mxu0 0.0
    %133 = vmatpush1.msra.mxu0 0.0
    %134 = vmatprep.subr.mxu0 0.0
    %135 = vmatpush1.msra.mxu0 0.0
    %136 = vmatprep.subr.mxu0 0.0
    %137 = vmatpush1.msra.mxu0 0.0
    %138 = vmatprep.subr.mxu0 0.0
    %139 = vmatpush1.msra.mxu0 0.0
    %140 = vmatprep.subr.mxu0 0.0
    %141 = vmatpush1.msra.mxu0 0.0
    %142 = vmatprep.subr.mxu0 0.0
    %143 = vmatpush1.msra.mxu0 0.0
    %144 = vmatprep.subr.mxu0 0.0
    %145 = vmatpush1.msra.mxu0 0.0
    %146 = vmatprep.subr.mxu0 0.0
    %147 = vmatpush1.msra.mxu0 0.0
    %148 = vmatprep.subr.mxu0 0.0
    %149 = vmatpush1.msra.mxu0 0.0
    %150 = vmatprep.subr.mxu0 0.0
    %151 = vmatpush1.msra.mxu0 0.0
    %152 = vmatprep.mubr.f32.mxu0 0.0
    %153 = vmatmul.mubr.f32.gmra.mrb[0].mxu0 %v79
    %v154 = vpop.f32.mrb[0].mxu0
    %v155 = vadd.f32 0.0, %v154
    %v156 = vpop.f32.mrb[0].mxu0
    %157 = vmatprep.mubr.f32.mxu0 0.0
    %158 = vmatmul.mubr.f32.gmra.mrb[0].mxu0 %v82
    %v159 = vpop.f32.mrb[0].mxu0
    %v160 = vadd.f32 0.0, %v159
    %v161 = vpop.f32.mrb[0].mxu0
    %162 = vdwg.mxu0
    %v163 = vld [vmem:[%s2] sm:$0xff]
    %v164 = vld [vmem:[%s2 + $0x8] sm:$0xff]
    %v165 = vld [vmem:[%s3] sm:$0xff]
    %v166 = vld [vmem:[%s3 + $0x8] sm:$0xff]
    %v167 = vld [vmem:[%s3 + $0x10] sm:$0xff]
    %v168 = vld [vmem:[%s3 + $0x18] sm:$0xff]
    %v169 = vld [vmem:[%s4] sm:$0x1]
    %v170 = vld [vmem:[%s5] sm:$0xff]
    %v171 = vld [vmem:[%s5 + $0x8] sm:$0xff]
    %v172 = vld [vmem:[%s6] sm:$0xff]
    %v173 = vld [vmem:[%s6 + $0x8] sm:$0xff]
    %v174 = vld [vmem:[%s6 + $0x10] sm:$0xff]
    %v175 = vld [vmem:[%s6 + $0x18] sm:$0xff]
    %v176 = vld [vmem:[%s7] sm:$0x1]
    %v178 = vlaneseq
    %v179 = vshrl.u32 %v178, 7
    %v180 = vsub.s32 0, %v179
    %v181 = vrot.slane %v169, %v180
    %vm183 = vcmask 130048
    %v185 = vsel %vm183, %v155, 0
    %v188 = vsel %vm183, %v160, 0
    %190 = vmatprep.subr.mxu0 0.0
    %191 = vmatpush1.msra.mxu0 %v163
    %192 = vmatprep.subr.mxu0 0.0
    %193 = vmatpush1.msra.mxu0 %v164
    %194 = vmatprep.subr.mxu0 0.0
    %195 = vmatpush1.msra.mxu0 0.0
    %196 = vmatprep.subr.mxu0 0.0
    %197 = vmatpush1.msra.mxu0 0.0
    %198 = vmatprep.subr.mxu0 0.0
    %199 = vmatpush1.msra.mxu0 0.0
    %200 = vmatprep.subr.mxu0 0.0
    %201 = vmatpush1.msra.mxu0 0.0
    %202 = vmatprep.subr.mxu0 0.0
    %203 = vmatpush1.msra.mxu0 0.0
    %204 = vmatprep.subr.mxu0 0.0
    %205 = vmatpush1.msra.mxu0 0.0
    %206 = vmatprep.subr.mxu0 0.0
    %207 = vmatpush1.msra.mxu0 0.0
    %208 = vmatprep.subr.mxu0 0.0
    %209 = vmatpush1.msra.mxu0 0.0
    %210 = vmatprep.subr.mxu0 0.0
    %211 = vmatpush1.msra.mxu0 0.0
    %212 = vmatprep.subr.mxu0 0.0
    %213 = vmatpush1.msra.mxu0 0.0
    %214 = vmatprep.subr.mxu0 0.0
    %215 = vmatpush1.msra.mxu0 0.0
    %216 = vmatprep.subr.mxu0 0.0
    %217 = vmatpush1.msra.mxu0 0.0
    %218 = vmatprep.subr.mxu0 0.0
    %219 = vmatpush1.msra.mxu0 0.0
    %220 = vmatprep.subr.mxu0 0.0
    %221 = vmatpush1.msra.mxu0 0.0
    %222 = vmatprep.subr.mxu0 0.0
    %223 = vmatpush1.msra.mxu0 0.0
    %224 = vmatprep.subr.mxu0 0.0
    %225 = vmatpush1.msra.mxu0 0.0
    %226 = vmatprep.subr.mxu0 0.0
    %227 = vmatpush1.msra.mxu0 0.0
    %228 = vmatprep.subr.mxu0 0.0
    %229 = vmatpush1.msra.mxu0 0.0
    %230 = vmatprep.subr.mxu0 0.0
    %231 = vmatpush1.msra.mxu0 0.0
    %232 = vmatprep.subr.mxu0 0.0
    %233 = vmatpush1.msra.mxu0 0.0
    %234 = vmatprep.subr.mxu0 0.0
    %235 = vmatpush1.msra.mxu0 0.0
    %236 = vmatprep.subr.mxu0 0.0
    %237 = vmatpush1.msra.mxu0 0.0
    %238 = vmatprep.subr.mxu0 0.0
    %239 = vmatpush1.msra.mxu0 0.0
    %240 = vmatprep.subr.mxu0 0.0
    %241 = vmatpush1.msra.mxu0 0.0
    %242 = vmatprep.subr.mxu0 0.0
    %243 = vmatpush1.msra.mxu0 0.0
    %244 = vmatprep.subr.mxu0 0.0
    %245 = vmatpush1.msra.mxu0 0.0
    %246 = vmatprep.subr.mxu0 0.0
    %247 = vmatpush1.msra.mxu0 0.0
    %248 = vmatprep.subr.mxu0 0.0
    %249 = vmatpush1.msra.mxu0 0.0
    %250 = vmatprep.subr.mxu0 0.0
    %251 = vmatpush1.msra.mxu0 0.0
    %252 = vmatprep.subr.mxu0 0.0
    %253 = vmatpush1.msra.mxu0 0.0
    %254 = vmatprep.mubr.f32.mxu0 0.0
    %255 = vmatmul.mubr.f32.gmra.mrb[0].mxu0 %v185
    %v256 = vpop.f32.mrb[0].mxu0
    %v257 = vadd.f32 %v181, %v256
    %v258 = vpop.f32.mrb[0].mxu0
    %259 = vmatprep.mubr.f32.mxu0 0.0
    %260 = vmatmul.mubr.f32.gmra.mrb[0].mxu0 %v188
    %v261 = vpop.f32.mrb[0].mxu0
    %v262 = vadd.f32 %v181, %v261
    %v263 = vpop.f32.mrb[0].mxu0
    %264 = vdwg.mxu0
    %v266 = vlaneseq
    %v267 = vshrl.u32 %v266, 7
    %v268 = vsub.s32 0, %v267
    %v269 = vrot.slane %v176, %v268
    %271 = vmatprep.subr.mxu0 0.0
    %272 = vmatpush1.msra.mxu0 %v170
    %273 = vmatprep.subr.mxu0 0.0
    %274 = vmatpush1.msra.mxu0 %v171
    %275 = vmatprep.subr.mxu0 0.0
    %276 = vmatpush1.msra.mxu0 0.0
    %277 = vmatprep.subr.mxu0 0.0
    %278 = vmatpush1.msra.mxu0 0.0
    %279 = vmatprep.subr.mxu0 0.0
    %280 = vmatpush1.msra.mxu0 0.0
    %281 = vmatprep.subr.mxu0 0.0
    %282 = vmatpush1.msra.mxu0 0.0
    %283 = vmatprep.subr.mxu0 0.0
    %284 = vmatpush1.msra.mxu0 0.0
    %285 = vmatprep.subr.mxu0 0.0
    %286 = vmatpush1.msra.mxu0 0.0
    %287 = vmatprep.subr.mxu0 0.0
    %288 = vmatpush1.msra.mxu0 0.0
    %289 = vmatprep.subr.mxu0 0.0
    %290 = vmatpush1.msra.mxu0 0.0
    %291 = vmatprep.subr.mxu0 0.0
    %292 = vmatpush1.msra.mxu0 0.0
    %293 = vmatprep.subr.mxu0 0.0
    %294 = vmatpush1.msra.mxu0 0.0
    %295 = vmatprep.subr.mxu0 0.0
    %296 = vmatpush1.msra.mxu0 0.0
    %297 = vmatprep.subr.mxu0 0.0
    %298 = vmatpush1.msra.mxu0 0.0
    %299 = vmatprep.subr.mxu0 0.0
    %300 = vmatpush1.msra.mxu0 0.0
    %301 = vmatprep.subr.mxu0 0.0
    %302 = vmatpush1.msra.mxu0 0.0
    %303 = vmatprep.subr.mxu0 0.0
    %304 = vmatpush1.msra.mxu0 0.0
    %305 = vmatprep.subr.mxu0 0.0
    %306 = vmatpush1.msra.mxu0 0.0
    %307 = vmatprep.subr.mxu0 0.0
    %308 = vmatpush1.msra.mxu0 0.0
    %309 = vmatprep.subr.mxu0 0.0
    %310 = vmatpush1.msra.mxu0 0.0
    %311 = vmatprep.subr.mxu0 0.0
    %312 = vmatpush1.msra.mxu0 0.0
    %313 = vmatprep.subr.mxu0 0.0
    %314 = vmatpush1.msra.mxu0 0.0
    %315 = vmatprep.subr.mxu0 0.0
    %316 = vmatpush1.msra.mxu0 0.0
    %317 = vmatprep.subr.mxu0 0.0
    %318 = vmatpush1.msra.mxu0 0.0
    %319 = vmatprep.subr.mxu0 0.0
    %320 = vmatpush1.msra.mxu0 0.0
    %321 = vmatprep.subr.mxu0 0.0
    %322 = vmatpush1.msra.mxu0 0.0
    %323 = vmatprep.subr.mxu0 0.0
    %324 = vmatpush1.msra.mxu0 0.0
    %325 = vmatprep.subr.mxu0 0.0
    %326 = vmatpush1.msra.mxu0 0.0
    %327 = vmatprep.subr.mxu0 0.0
    %328 = vmatpush1.msra.mxu0 0.0
    %329 = vmatprep.subr.mxu0 0.0
    %330 = vmatpush1.msra.mxu0 0.0
    %331 = vmatprep.subr.mxu0 0.0
    %332 = vmatpush1.msra.mxu0 0.0
    %333 = vmatprep.subr.mxu0 0.0
    %334 = vmatpush1.msra.mxu0 0.0
    %335 = vmatprep.mubr.f32.mxu0 0.0
    %336 = vmatmul.mubr.f32.gmra.mrb[0].mxu0 %v185
    %v337 = vpop.f32.mrb[0].mxu0
    %v338 = vadd.f32 %v269, %v337
    %v339 = vpop.f32.mrb[0].mxu0
    %340 = vmatprep.mubr.f32.mxu0 0.0
    %341 = vmatmul.mubr.f32.gmra.mrb[0].mxu0 %v188
    %v342 = vpop.f32.mrb[0].mxu0
    %v343 = vadd.f32 %v269, %v342
    %v344 = vpop.f32.mrb[0].mxu0
    %345 = vdwg.mxu0
    %vm346 = vcmask 261120
    %v348 = vsel %vm346, 0.0, 0
    %350 = vmatprep.subr.mxu0 0.0
    %351 = vmatpush1.msra.mxu0 %v165
    %352 = vmatprep.subr.mxu0 0.0
    %353 = vmatpush1.msra.mxu0 %v166
    %354 = vmatprep.subr.mxu0 0.0
    %355 = vmatpush1.msra.mxu0 %v167
    %356 = vmatprep.subr.mxu0 0.0
    %357 = vmatpush1.msra.mxu0 %v168
    %358 = vmatprep.subr.mxu0 0.0
    %359 = vmatpush1.msra.mxu0 0.0
    %360 = vmatprep.subr.mxu0 0.0
    %361 = vmatpush1.msra.mxu0 0.0
    %362 = vmatprep.subr.mxu0 0.0
    %363 = vmatpush1.msra.mxu0 0.0
    %364 = vmatprep.subr.mxu0 0.0
    %365 = vmatpush1.msra.mxu0 0.0
    %366 = vmatprep.subr.mxu0 0.0
    %367 = vmatpush1.msra.mxu0 0.0
    %368 = vmatprep.subr.mxu0 0.0
    %369 = vmatpush1.msra.mxu0 0.0
    %370 = vmatprep.subr.mxu0 0.0
    %371 = vmatpush1.msra.mxu0 0.0
    %372 = vmatprep.subr.mxu0 0.0
    %373 = vmatpush1.msra.mxu0 0.0
    %374 = vmatprep.subr.mxu0 0.0
    %375 = vmatpush1.msra.mxu0 0.0
    %376 = vmatprep.subr.mxu0 0.0
    %377 = vmatpush1.msra.mxu0 0.0
    %378 = vmatprep.subr.mxu0 0.0
    %379 = vmatpush1.msra.mxu0 0.0
    %380 = vmatprep.subr.mxu0 0.0
    %381 = vmatpush1.msra.mxu0 0.0
    %382 = vmatprep.subr.mxu0 0.0
    %383 = vmatpush1.msra.mxu0 0.0
    %384 = vmatprep.subr.mxu0 0.0
    %385 = vmatpush1.msra.mxu0 0.0
    %386 = vmatprep.subr.mxu0 0.0
    %387 = vmatpush1.msra.mxu0 0.0
    %388 = vmatprep.subr.mxu0 0.0
    %389 = vmatpush1.msra.mxu0 0.0
    %390 = vmatprep.subr.mxu0 0.0
    %391 = vmatpush1.msra.mxu0 0.0
    %392 = vmatprep.subr.mxu0 0.0
    %393 = vmatpush1.msra.mxu0 0.0
    %394 = vmatprep.subr.mxu0 0.0
    %395 = vmatpush1.msra.mxu0 0.0
    %396 = vmatprep.subr.mxu0 0.0
    %397 = vmatpush1.msra.mxu0 0.0
    %398 = vmatprep.subr.mxu0 0.0
    %399 = vmatpush1.msra.mxu0 0.0
    %400 = vmatprep.subr.mxu0 0.0
    %401 = vmatpush1.msra.mxu0 0.0
    %402 = vmatprep.subr.mxu0 0.0
    %403 = vmatpush1.msra.mxu0 0.0
    %404 = vmatprep.subr.mxu0 0.0
    %405 = vmatpush1.msra.mxu0 0.0
    %406 = vmatprep.subr.mxu0 0.0
    %407 = vmatpush1.msra.mxu0 0.0
    %408 = vmatprep.subr.mxu0 0.0
    %409 = vmatpush1.msra.mxu0 0.0
    %410 = vmatprep.subr.mxu0 0.0
    %411 = vmatpush1.msra.mxu0 0.0
    %412 = vmatprep.subr.mxu0 0.0
    %413 = vmatpush1.msra.mxu0 0.0
    %414 = vmatprep.mubr.f32.mxu0 0.0
    %415 = vmatmul.mubr.f32.gmra.mrb[0].mxu0 %v348
    %v416 = vpop.f32.mrb[0].mxu0
    %v417 = vadd.f32 0.0, %v416
    %v418 = vpop.f32.mrb[0].mxu0
    %419 = vdwg.mxu0
    %v420 = vadd.f32 %v257, %v417
    %v421 = vxor.u32 %v420, 2147483648
    %v422 = vmul.f32 %v421, 1.442695
    %v423 = vpow.pop %v422
    %v424 = vadd.f32 %v423, 1.0
    %v425 = vrcp.pop %v424
    %v426 = vmul.f32 1.0, %v425
    %v427 = vtanh.pop %v420
    %v428 = vmul.f32 %v426, 0.0
    %430 = vrot.lane.b32.xlu0 %v427, 64
    %v431 = vpop.permute.xlu0 %430
    %v433 = vmul.f32 %v426, %v431
    %435 = vrot.lane.b32.xlu0 %v433, 32
    %v436 = vpop.permute.xlu0 %435
    %v438 = vadd.f32 %v428, %v436
    %v439 = vtanh.pop %v438
    %441 = vrot.lane.b32.xlu0 %v439, 64
    %v442 = vpop.permute.xlu0 %441
    %v444 = vmul.f32 %v426, %v442
    %446 = vrot.lane.b32.xlu0 %v444, 32
    %v447 = vpop.permute.xlu0 %446
    %vm449 = vcmask 254976
    %450 = vst.msk [vmem:[#allocation2] sm:$0x3] %vm449, %v447
    %v451 = vsel %vm346, %v447, 0
    %453 = vmatprep.subr.mxu0 0.0
    %454 = vmatpush1.msra.mxu0 %v165
    %455 = vmatprep.subr.mxu0 0.0
    %456 = vmatpush1.msra.mxu0 %v166
    %457 = vmatprep.subr.mxu0 0.0
    %458 = vmatpush1.msra.mxu0 %v167
    %459 = vmatprep.subr.mxu0 0.0
    %460 = vmatpush1.msra.mxu0 %v168
    %461 = vmatprep.subr.mxu0 0.0
    %462 = vmatpush1.msra.mxu0 0.0
    %463 = vmatprep.subr.mxu0 0.0
    %464 = vmatpush1.msra.mxu0 0.0
    %465 = vmatprep.subr.mxu0 0.0
    %466 = vmatpush1.msra.mxu0 0.0
    %467 = vmatprep.subr.mxu0 0.0
    %468 = vmatpush1.msra.mxu0 0.0
    %469 = vmatprep.subr.mxu0 0.0
    %470 = vmatpush1.msra.mxu0 0.0
    %471 = vmatprep.subr.mxu0 0.0
    %472 = vmatpush1.msra.mxu0 0.0
    %473 = vmatprep.subr.mxu0 0.0
    %474 = vmatpush1.msra.mxu0 0.0
    %475 = vmatprep.subr.mxu0 0.0
    %476 = vmatpush1.msra.mxu0 0.0
    %477 = vmatprep.subr.mxu0 0.0
    %478 = vmatpush1.msra.mxu0 0.0
    %479 = vmatprep.subr.mxu0 0.0
    %480 = vmatpush1.msra.mxu0 0.0
    %481 = vmatprep.subr.mxu0 0.0
    %482 = vmatpush1.msra.mxu0 0.0
    %483 = vmatprep.subr.mxu0 0.0
    %484 = vmatpush1.msra.mxu0 0.0
    %485 = vmatprep.subr.mxu0 0.0
    %486 = vmatpush1.msra.mxu0 0.0
    %487 = vmatprep.subr.mxu0 0.0
    %488 = vmatpush1.msra.mxu0 0.0
    %489 = vmatprep.subr.mxu0 0.0
    %490 = vmatpush1.msra.mxu0 0.0
    %491 = vmatprep.subr.mxu0 0.0
    %492 = vmatpush1.msra.mxu0 0.0
    %493 = vmatprep.subr.mxu0 0.0
    %494 = vmatpush1.msra.mxu0 0.0
    %495 = vmatprep.subr.mxu0 0.0
    %496 = vmatpush1.msra.mxu0 0.0
    %497 = vmatprep.subr.mxu0 0.0
    %498 = vmatpush1.msra.mxu0 0.0
    %499 = vmatprep.subr.mxu0 0.0
    %500 = vmatpush1.msra.mxu0 0.0
    %501 = vmatprep.subr.mxu0 0.0
    %502 = vmatpush1.msra.mxu0 0.0
    %503 = vmatprep.subr.mxu0 0.0
    %504 = vmatpush1.msra.mxu0 0.0
    %505 = vmatprep.subr.mxu0 0.0
    %506 = vmatpush1.msra.mxu0 0.0
    %507 = vmatprep.subr.mxu0 0.0
    %508 = vmatpush1.msra.mxu0 0.0
    %509 = vmatprep.subr.mxu0 0.0
    %510 = vmatpush1.msra.mxu0 0.0
    %511 = vmatprep.subr.mxu0 0.0
    %512 = vmatpush1.msra.mxu0 0.0
    %513 = vmatprep.subr.mxu0 0.0
    %514 = vmatpush1.msra.mxu0 0.0
    %515 = vmatprep.subr.mxu0 0.0
    %516 = vmatpush1.msra.mxu0 0.0
    %517 = vmatprep.mubr.f32.mxu0 0.0
    %518 = vmatmul.mubr.f32.gmra.mrb[0].mxu0 %v451
    %v519 = vpop.f32.mrb[0].mxu0
    %v520 = vadd.f32 0.0, %v519
    %v521 = vpop.f32.mrb[0].mxu0
    %522 = vdwg.mxu0
    %v524 = vrot.slane %v520, 6
    %v526 = vadd.f32 %v257, %v524
    %v527 = vxor.u32 %v526, 2147483648
    %v528 = vmul.f32 %v527, 1.442695
    %v529 = vpow.pop %v528
    %v530 = vadd.f32 %v529, 1.0
    %v531 = vrcp.pop %v530
    %v532 = vmul.f32 1.0, %v531
    %v533 = vtanh.pop %v526
    %v535 = vrot.slane %v438, 6
    %v537 = vmul.f32 %v532, %v535
    %539 = vrot.lane.b32.xlu0 %v533, 64
    %v540 = vpop.permute.xlu0 %539
    %v542 = vmul.f32 %v532, %v540
    %544 = vrot.lane.b32.xlu0 %v542, 32
    %v545 = vpop.permute.xlu0 %544
    %v547 = vadd.f32 %v537, %v545
    %v548 = vtanh.pop %v547
    %550 = vrot.lane.b32.xlu0 %v548, 64
    %v551 = vpop.permute.xlu0 %550
    %v553 = vmul.f32 %v532, %v551
    %555 = vrot.lane.b32.xlu0 %v553, 32
    %v556 = vpop.permute.xlu0 %555
    %vm558 = vcmask 257026
    %559 = vst.msk [vmem:[#allocation2] sm:$0xc] %vm558, %v556
    %v560 = vrot.slane %v553, 2
    %561 = vrot.lane.b32.xlu0 %v560, 32
    %v562 = vpop.permute.xlu0 %561
    %v563 = vsel %vm346, %v562, 0
    %565 = vmatprep.subr.mxu0 0.0
    %566 = vmatpush1.msra.mxu0 %v165
    %567 = vmatprep.subr.mxu0 0.0
    %568 = vmatpush1.msra.mxu0 %v166
    %569 = vmatprep.subr.mxu0 0.0
    %570 = vmatpush1.msra.mxu0 %v167
    %571 = vmatprep.subr.mxu0 0.0
    %572 = vmatpush1.msra.mxu0 %v168
    %573 = vmatprep.subr.mxu0 0.0
    %574 = vmatpush1.msra.mxu0 0.0
    %575 = vmatprep.subr.mxu0 0.0
    %576 = vmatpush1.msra.mxu0 0.0
    %577 = vmatprep.subr.mxu0 0.0
    %578 = vmatpush1.msra.mxu0 0.0
    %579 = vmatprep.subr.mxu0 0.0
    %580 = vmatpush1.msra.mxu0 0.0
    %581 = vmatprep.subr.mxu0 0.0
    %582 = vmatpush1.msra.mxu0 0.0
    %583 = vmatprep.subr.mxu0 0.0
    %584 = vmatpush1.msra.mxu0 0.0
    %585 = vmatprep.subr.mxu0 0.0
    %586 = vmatpush1.msra.mxu0 0.0
    %587 = vmatprep.subr.mxu0 0.0
    %588 = vmatpush1.msra.mxu0 0.0
    %589 = vmatprep.subr.mxu0 0.0
    %590 = vmatpush1.msra.mxu0 0.0
    %591 = vmatprep.subr.mxu0 0.0
    %592 = vmatpush1.msra.mxu0 0.0
    %593 = vmatprep.subr.mxu0 0.0
    %594 = vmatpush1.msra.mxu0 0.0
    %595 = vmatprep.subr.mxu0 0.0
    %596 = vmatpush1.msra.mxu0 0.0
    %597 = vmatprep.subr.mxu0 0.0
    %598 = vmatpush1.msra.mxu0 0.0
    %599 = vmatprep.subr.mxu0 0.0
    %600 = vmatpush1.msra.mxu0 0.0
    %601 = vmatprep.subr.mxu0 0.0
    %602 = vmatpush1.msra.mxu0 0.0
    %603 = vmatprep.subr.mxu0 0.0
    %604 = vmatpush1.msra.mxu0 0.0
    %605 = vmatprep.subr.mxu0 0.0
    %606 = vmatpush1.msra.mxu0 0.0
    %607 = vmatprep.subr.mxu0 0.0
    %608 = vmatpush1.msra.mxu0 0.0
    %609 = vmatprep.subr.mxu0 0.0
    %610 = vmatpush1.msra.mxu0 0.0
    %611 = vmatprep.subr.mxu0 0.0
    %612 = vmatpush1.msra.mxu0 0.0
    %613 = vmatprep.subr.mxu0 0.0
    %614 = vmatpush1.msra.mxu0 0.0
    %615 = vmatprep.subr.mxu0 0.0
    %616 = vmatpush1.msra.mxu0 0.0
    %617 = vmatprep.subr.mxu0 0.0
    %618 = vmatpush1.msra.mxu0 0.0
    %619 = vmatprep.subr.mxu0 0.0
    %620 = vmatpush1.msra.mxu0 0.0
    %621 = vmatprep.subr.mxu0 0.0
    %622 = vmatpush1.msra.mxu0 0.0
    %623 = vmatprep.subr.mxu0 0.0
    %624 = vmatpush1.msra.mxu0 0.0
    %625 = vmatprep.subr.mxu0 0.0
    %626 = vmatpush1.msra.mxu0 0.0
    %627 = vmatprep.subr.mxu0 0.0
    %628 = vmatpush1.msra.mxu0 0.0
    %629 = vmatprep.mubr.f32.mxu0 0.0
    %630 = vmatmul.mubr.f32.gmra.mrb[0].mxu0 %v563
    %v631 = vpop.f32.mrb[0].mxu0
    %v632 = vadd.f32 0.0, %v631
    %v633 = vpop.f32.mrb[0].mxu0
    %634 = vdwg.mxu0
    %v636 = vrot.slane %v632, 4
    %v638 = vadd.f32 %v257, %v636
    %v639 = vxor.u32 %v638, 2147483648
    %v640 = vmul.f32 %v639, 1.442695
    %v641 = vpow.pop %v640
    %v642 = vadd.f32 %v641, 1.0
    %v643 = vrcp.pop %v642
    %v644 = vmul.f32 1.0, %v643
    %v645 = vtanh.pop %v638
    %v647 = vrot.slane %v547, 6
    %v649 = vmul.f32 %v644, %v647
    %651 = vrot.lane.b32.xlu0 %v645, 64
    %v652 = vpop.permute.xlu0 %651
    %v654 = vmul.f32 %v644, %v652
    %656 = vrot.lane.b32.xlu0 %v654, 32
    %v657 = vpop.permute.xlu0 %656
    %v659 = vadd.f32 %v649, %v657
    %v660 = vtanh.pop %v659
    %662 = vrot.lane.b32.xlu0 %v660, 64
    %v663 = vpop.permute.xlu0 %662
    %v665 = vmul.f32 %v644, %v663
    %667 = vrot.lane.b32.xlu0 %v665, 32
    %v668 = vpop.permute.xlu0 %667
    %vm670 = vcmask 259076
    %671 = vst.msk [vmem:[#allocation2] sm:$0x30] %vm670, %v668
    %v672 = vrot.slane %v665, 4
    %673 = vrot.lane.b32.xlu0 %v672, 32
    %v674 = vpop.permute.xlu0 %673
    %v675 = vsel %vm346, %v674, 0
    %677 = vmatprep.subr.mxu0 0.0
    %678 = vmatpush1.msra.mxu0 %v165
    %679 = vmatprep.subr.mxu0 0.0
    %680 = vmatpush1.msra.mxu0 %v166
    %681 = vmatprep.subr.mxu0 0.0
    %682 = vmatpush1.msra.mxu0 %v167
    %683 = vmatprep.subr.mxu0 0.0
    %684 = vmatpush1.msra.mxu0 %v168
    %685 = vmatprep.subr.mxu0 0.0
    %686 = vmatpush1.msra.mxu0 0.0
    %687 = vmatprep.subr.mxu0 0.0
    %688 = vmatpush1.msra.mxu0 0.0
    %689 = vmatprep.subr.mxu0 0.0
    %690 = vmatpush1.msra.mxu0 0.0
    %691 = vmatprep.subr.mxu0 0.0
    %692 = vmatpush1.msra.mxu0 0.0
    %693 = vmatprep.subr.mxu0 0.0
    %694 = vmatpush1.msra.mxu0 0.0
    %695 = vmatprep.subr.mxu0 0.0
    %696 = vmatpush1.msra.mxu0 0.0
    %697 = vmatprep.subr.mxu0 0.0
    %698 = vmatpush1.msra.mxu0 0.0
    %699 = vmatprep.subr.mxu0 0.0
    %700 = vmatpush1.msra.mxu0 0.0
    %701 = vmatprep.subr.mxu0 0.0
    %702 = vmatpush1.msra.mxu0 0.0
    %703 = vmatprep.subr.mxu0 0.0
    %704 = vmatpush1.msra.mxu0 0.0
    %705 = vmatprep.subr.mxu0 0.0
    %706 = vmatpush1.msra.mxu0 0.0
    %707 = vmatprep.subr.mxu0 0.0
    %708 = vmatpush1.msra.mxu0 0.0
    %709 = vmatprep.subr.mxu0 0.0
    %710 = vmatpush1.msra.mxu0 0.0
    %711 = vmatprep.subr.mxu0 0.0
    %712 = vmatpush1.msra.mxu0 0.0
    %713 = vmatprep.subr.mxu0 0.0
    %714 = vmatpush1.msra.mxu0 0.0
    %715 = vmatprep.subr.mxu0 0.0
    %716 = vmatpush1.msra.mxu0 0.0
    %717 = vmatprep.subr.mxu0 0.0
    %718 = vmatpush1.msra.mxu0 0.0
    %719 = vmatprep.subr.mxu0 0.0
    %720 = vmatpush1.msra.mxu0 0.0
    %721 = vmatprep.subr.mxu0 0.0
    %722 = vmatpush1.msra.mxu0 0.0
    %723 = vmatprep.subr.mxu0 0.0
    %724 = vmatpush1.msra.mxu0 0.0
    %725 = vmatprep.subr.mxu0 0.0
    %726 = vmatpush1.msra.mxu0 0.0
    %727 = vmatprep.subr.mxu0 0.0
    %728 = vmatpush1.msra.mxu0 0.0
    %729 = vmatprep.subr.mxu0 0.0
    %730 = vmatpush1.msra.mxu0 0.0
    %731 = vmatprep.subr.mxu0 0.0
    %732 = vmatpush1.msra.mxu0 0.0
    %733 = vmatprep.subr.mxu0 0.0
    %734 = vmatpush1.msra.mxu0 0.0
    %735 = vmatprep.subr.mxu0 0.0
    %736 = vmatpush1.msra.mxu0 0.0
    %737 = vmatprep.subr.mxu0 0.0
    %738 = vmatpush1.msra.mxu0 0.0
    %739 = vmatprep.subr.mxu0 0.0
    %740 = vmatpush1.msra.mxu0 0.0
    %741 = vmatprep.mubr.f32.mxu0 0.0
    %742 = vmatmul.mubr.f32.gmra.mrb[0].mxu0 %v675
    %v743 = vpop.f32.mrb[0].mxu0
    %v744 = vadd.f32 0.0, %v743
    %v745 = vpop.f32.mrb[0].mxu0
    %746 = vdwg.mxu0
    %v748 = vrot.slane %v744, 2
    %v750 = vadd.f32 %v257, %v748
    %v751 = vxor.u32 %v750, 2147483648
    %v752 = vmul.f32 %v751, 1.442695
    %v753 = vpow.pop %v752
    %v754 = vadd.f32 %v753, 1.0
    %v755 = vrcp.pop %v754
    %v756 = vmul.f32 1.0, %v755
    %v757 = vtanh.pop %v750
    %v759 = vrot.slane %v659, 6
    %v761 = vmul.f32 %v756, %v759
    %763 = vrot.lane.b32.xlu0 %v757, 64
    %v764 = vpop.permute.xlu0 %763
    %v766 = vmul.f32 %v756, %v764
    %768 = vrot.lane.b32.xlu0 %v766, 32
    %v769 = vpop.permute.xlu0 %768
    %v771 = vadd.f32 %v761, %v769
    %v772 = vtanh.pop %v771
    %774 = vrot.lane.b32.xlu0 %v772, 64
    %v775 = vpop.permute.xlu0 %774
    %v777 = vmul.f32 %v756, %v775
    %779 = vrot.lane.b32.xlu0 %v777, 32
    %v780 = vpop.permute.xlu0 %779
    %vm782 = vcmask 261126
    %783 = vst.msk [vmem:[#allocation2] sm:$0xc0] %vm782, %v780
    %v784 = vrot.slane %v777, 6
    %785 = vrot.lane.b32.xlu0 %v784, 32
    %v786 = vpop.permute.xlu0 %785
    %v787 = vsel %vm346, %v786, 0
    %789 = vmatprep.subr.mxu0 0.0
    %790 = vmatpush1.msra.mxu0 %v165
    %791 = vmatprep.subr.mxu0 0.0
    %792 = vmatpush1.msra.mxu0 %v166
    %793 = vmatprep.subr.mxu0 0.0
    %794 = vmatpush1.msra.mxu0 %v167
    %795 = vmatprep.subr.mxu0 0.0
    %796 = vmatpush1.msra.mxu0 %v168
    %797 = vmatprep.subr.mxu0 0.0
    %798 = vmatpush1.msra.mxu0 0.0
    %799 = vmatprep.subr.mxu0 0.0
    %800 = vmatpush1.msra.mxu0 0.0
    %801 = vmatprep.subr.mxu0 0.0
    %802 = vmatpush1.msra.mxu0 0.0
    %803 = vmatprep.subr.mxu0 0.0
    %804 = vmatpush1.msra.mxu0 0.0
    %805 = vmatprep.subr.mxu0 0.0
    %806 = vmatpush1.msra.mxu0 0.0
    %807 = vmatprep.subr.mxu0 0.0
    %808 = vmatpush1.msra.mxu0 0.0
    %809 = vmatprep.subr.mxu0 0.0
    %810 = vmatpush1.msra.mxu0 0.0
    %811 = vmatprep.subr.mxu0 0.0
    %812 = vmatpush1.msra.mxu0 0.0
    %813 = vmatprep.subr.mxu0 0.0
    %814 = vmatpush1.msra.mxu0 0.0
    %815 = vmatprep.subr.mxu0 0.0
    %816 = vmatpush1.msra.mxu0 0.0
    %817 = vmatprep.subr.mxu0 0.0
    %818 = vmatpush1.msra.mxu0 0.0
    %819 = vmatprep.subr.mxu0 0.0
    %820 = vmatpush1.msra.mxu0 0.0
    %821 = vmatprep.subr.mxu0 0.0
    %822 = vmatpush1.msra.mxu0 0.0
    %823 = vmatprep.subr.mxu0 0.0
    %824 = vmatpush1.msra.mxu0 0.0
    %825 = vmatprep.subr.mxu0 0.0
    %826 = vmatpush1.msra.mxu0 0.0
    %827 = vmatprep.subr.mxu0 0.0
    %828 = vmatpush1.msra.mxu0 0.0
    %829 = vmatprep.subr.mxu0 0.0
    %830 = vmatpush1.msra.mxu0 0.0
    %831 = vmatprep.subr.mxu0 0.0
    %832 = vmatpush1.msra.mxu0 0.0
    %833 = vmatprep.subr.mxu0 0.0
    %834 = vmatpush1.msra.mxu0 0.0
    %835 = vmatprep.subr.mxu0 0.0
    %836 = vmatpush1.msra.mxu0 0.0
    %837 = vmatprep.subr.mxu0 0.0
    %838 = vmatpush1.msra.mxu0 0.0
    %839 = vmatprep.subr.mxu0 0.0
    %840 = vmatpush1.msra.mxu0 0.0
    %841 = vmatprep.subr.mxu0 0.0
    %842 = vmatpush1.msra.mxu0 0.0
    %843 = vmatprep.subr.mxu0 0.0
    %844 = vmatpush1.msra.mxu0 0.0
    %845 = vmatprep.subr.mxu0 0.0
    %846 = vmatpush1.msra.mxu0 0.0
    %847 = vmatprep.subr.mxu0 0.0
    %848 = vmatpush1.msra.mxu0 0.0
    %849 = vmatprep.subr.mxu0 0.0
    %850 = vmatpush1.msra.mxu0 0.0
    %851 = vmatprep.subr.mxu0 0.0
    %852 = vmatpush1.msra.mxu0 0.0
    %853 = vmatprep.mubr.f32.mxu0 0.0
    %854 = vmatmul.mubr.f32.gmra.mrb[0].mxu0 %v787
    %v855 = vpop.f32.mrb[0].mxu0
    %v856 = vadd.f32 0.0, %v855
    %v857 = vpop.f32.mrb[0].mxu0
    %858 = vdwg.mxu0
    %v859 = vadd.f32 %v262, %v856
    %v860 = vxor.u32 %v859, 2147483648
    %v861 = vmul.f32 %v860, 1.442695
    %v862 = vpow.pop %v861
    %v863 = vadd.f32 %v862, 1.0
    %v864 = vrcp.pop %v863
    %v865 = vmul.f32 1.0, %v864
    %v866 = vtanh.pop %v859
    %v868 = vrot.slane %v771, 6
    %v870 = vmul.f32 %v865, %v868
    %872 = vrot.lane.b32.xlu0 %v866, 64
    %v873 = vpop.permute.xlu0 %872
    %v875 = vmul.f32 %v865, %v873
    %877 = vrot.lane.b32.xlu0 %v875, 32
    %v878 = vpop.permute.xlu0 %877
    %v880 = vadd.f32 %v870, %v878
    %v881 = vtanh.pop %v880
    %883 = vrot.lane.b32.xlu0 %v881, 64
    %v884 = vpop.permute.xlu0 %883
    %v886 = vmul.f32 %v865, %v884
    %888 = vrot.lane.b32.xlu0 %v886, 32
    %v889 = vpop.permute.xlu0 %888
    %891 = vst.msk [vmem:[#allocation2 + $0x8] sm:$0x3] %vm449, %v889
    %v892 = vsel %vm346, %v889, 0
    %894 = vmatprep.subr.mxu0 0.0
    %895 = vmatpush1.msra.mxu0 %v165
    %896 = vmatprep.subr.mxu0 0.0
    %897 = vmatpush1.msra.mxu0 %v166
    %898 = vmatprep.subr.mxu0 0.0
    %899 = vmatpush1.msra.mxu0 %v167
    %900 = vmatprep.subr.mxu0 0.0
    %901 = vmatpush1.msra.mxu0 %v168
    %902 = vmatprep.subr.mxu0 0.0
    %903 = vmatpush1.msra.mxu0 0.0
    %904 = vmatprep.subr.mxu0 0.0
    %905 = vmatpush1.msra.mxu0 0.0
    %906 = vmatprep.subr.mxu0 0.0
    %907 = vmatpush1.msra.mxu0 0.0
    %908 = vmatprep.subr.mxu0 0.0
    %909 = vmatpush1.msra.mxu0 0.0
    %910 = vmatprep.subr.mxu0 0.0
    %911 = vmatpush1.msra.mxu0 0.0
    %912 = vmatprep.subr.mxu0 0.0
    %913 = vmatpush1.msra.mxu0 0.0
    %914 = vmatprep.subr.mxu0 0.0
    %915 = vmatpush1.msra.mxu0 0.0
    %916 = vmatprep.subr.mxu0 0.0
    %917 = vmatpush1.msra.mxu0 0.0
    %918 = vmatprep.subr.mxu0 0.0
    %919 = vmatpush1.msra.mxu0 0.0
    %920 = vmatprep.subr.mxu0 0.0
    %921 = vmatpush1.msra.mxu0 0.0
    %922 = vmatprep.subr.mxu0 0.0
    %923 = vmatpush1.msra.mxu0 0.0
    %924 = vmatprep.subr.mxu0 0.0
    %925 = vmatpush1.msra.mxu0 0.0
    %926 = vmatprep.subr.mxu0 0.0
    %927 = vmatpush1.msra.mxu0 0.0
    %928 = vmatprep.subr.mxu0 0.0
    %929 = vmatpush1.msra.mxu0 0.0
    %930 = vmatprep.subr.mxu0 0.0
    %931 = vmatpush1.msra.mxu0 0.0
    %932 = vmatprep.subr.mxu0 0.0
    %933 = vmatpush1.msra.mxu0 0.0
    %934 = vmatprep.subr.mxu0 0.0
    %935 = vmatpush1.msra.mxu0 0.0
    %936 = vmatprep.subr.mxu0 0.0
    %937 = vmatpush1.msra.mxu0 0.0
    %938 = vmatprep.subr.mxu0 0.0
    %939 = vmatpush1.msra.mxu0 0.0
    %940 = vmatprep.subr.mxu0 0.0
    %941 = vmatpush1.msra.mxu0 0.0
    %942 = vmatprep.subr.mxu0 0.0
    %943 = vmatpush1.msra.mxu0 0.0
    %944 = vmatprep.subr.mxu0 0.0
    %945 = vmatpush1.msra.mxu0 0.0
    %946 = vmatprep.subr.mxu0 0.0
    %947 = vmatpush1.msra.mxu0 0.0
    %948 = vmatprep.subr.mxu0 0.0
    %949 = vmatpush1.msra.mxu0 0.0
    %950 = vmatprep.subr.mxu0 0.0
    %951 = vmatpush1.msra.mxu0 0.0
    %952 = vmatprep.subr.mxu0 0.0
    %953 = vmatpush1.msra.mxu0 0.0
    %954 = vmatprep.subr.mxu0 0.0
    %955 = vmatpush1.msra.mxu0 0.0
    %956 = vmatprep.subr.mxu0 0.0
    %957 = vmatpush1.msra.mxu0 0.0
    %958 = vmatprep.mubr.f32.mxu0 0.0
    %959 = vmatmul.mubr.f32.gmra.mrb[0].mxu0 %v892
    %v960 = vpop.f32.mrb[0].mxu0
    %v961 = vadd.f32 0.0, %v960
    %v962 = vpop.f32.mrb[0].mxu0
    %963 = vdwg.mxu0
    %v965 = vrot.slane %v961, 6
    %v967 = vadd.f32 %v262, %v965
    %v968 = vxor.u32 %v967, 2147483648
    %v969 = vmul.f32 %v968, 1.442695
    %v970 = vpow.pop %v969
    %v971 = vadd.f32 %v970, 1.0
    %v972 = vrcp.pop %v971
    %v973 = vmul.f32 1.0, %v972
    %v974 = vtanh.pop %v967
    %v976 = vrot.slane %v880, 6
    %v978 = vmul.f32 %v973, %v976
    %980 = vrot.lane.b32.xlu0 %v974, 64
    %v981 = vpop.permute.xlu0 %980
    %v983 = vmul.f32 %v973, %v981
    %985 = vrot.lane.b32.xlu0 %v983, 32
    %v986 = vpop.permute.xlu0 %985
    %v988 = vadd.f32 %v978, %v986
    %v989 = vtanh.pop %v988
    %991 = vrot.lane.b32.xlu0 %v989, 64
    %v992 = vpop.permute.xlu0 %991
    %v994 = vmul.f32 %v973, %v992
    %996 = vrot.lane.b32.xlu0 %v994, 32
    %v997 = vpop.permute.xlu0 %996
    %999 = vst.msk [vmem:[#allocation2 + $0x8] sm:$0xc] %vm558, %v997
    %v1000 = vrot.slane %v994, 2
    %1001 = vrot.lane.b32.xlu0 %v1000, 32
    %v1002 = vpop.permute.xlu0 %1001
    %v1003 = vsel %vm346, %v1002, 0
    %1005 = vmatprep.subr.mxu0 0.0
    %1006 = vmatpush1.msra.mxu0 %v165
    %1007 = vmatprep.subr.mxu0 0.0
    %1008 = vmatpush1.msra.mxu0 %v166
    %1009 = vmatprep.subr.mxu0 0.0
    %1010 = vmatpush1.msra.mxu0 %v167
    %1011 = vmatprep.subr.mxu0 0.0
    %1012 = vmatpush1.msra.mxu0 %v168
    %1013 = vmatprep.subr.mxu0 0.0
    %1014 = vmatpush1.msra.mxu0 0.0
    %1015 = vmatprep.subr.mxu0 0.0
    %1016 = vmatpush1.msra.mxu0 0.0
    %1017 = vmatprep.subr.mxu0 0.0
    %1018 = vmatpush1.msra.mxu0 0.0
    %1019 = vmatprep.subr.mxu0 0.0
    %1020 = vmatpush1.msra.mxu0 0.0
    %1021 = vmatprep.subr.mxu0 0.0
    %1022 = vmatpush1.msra.mxu0 0.0
    %1023 = vmatprep.subr.mxu0 0.0
    %1024 = vmatpush1.msra.mxu0 0.0
    %1025 = vmatprep.subr.mxu0 0.0
    %1026 = vmatpush1.msra.mxu0 0.0
    %1027 = vmatprep.subr.mxu0 0.0
    %1028 = vmatpush1.msra.mxu0 0.0
    %1029 = vmatprep.subr.mxu0 0.0
    %1030 = vmatpush1.msra.mxu0 0.0
    %1031 = vmatprep.subr.mxu0 0.0
    %1032 = vmatpush1.msra.mxu0 0.0
    %1033 = vmatprep.subr.mxu0 0.0
    %1034 = vmatpush1.msra.mxu0 0.0
    %1035 = vmatprep.subr.mxu0 0.0
    %1036 = vmatpush1.msra.mxu0 0.0
    %1037 = vmatprep.subr.mxu0 0.0
    %1038 = vmatpush1.msra.mxu0 0.0
    %1039 = vmatprep.subr.mxu0 0.0
    %1040 = vmatpush1.msra.mxu0 0.0
    %1041 = vmatprep.subr.mxu0 0.0
    %1042 = vmatpush1.msra.mxu0 0.0
    %1043 = vmatprep.subr.mxu0 0.0
    %1044 = vmatpush1.msra.mxu0 0.0
    %1045 = vmatprep.subr.mxu0 0.0
    %1046 = vmatpush1.msra.mxu0 0.0
    %1047 = vmatprep.subr.mxu0 0.0
    %1048 = vmatpush1.msra.mxu0 0.0
    %1049 = vmatprep.subr.mxu0 0.0
    %1050 = vmatpush1.msra.mxu0 0.0
    %1051 = vmatprep.subr.mxu0 0.0
    %1052 = vmatpush1.msra.mxu0 0.0
    %1053 = vmatprep.subr.mxu0 0.0
    %1054 = vmatpush1.msra.mxu0 0.0
    %1055 = vmatprep.subr.mxu0 0.0
    %1056 = vmatpush1.msra.mxu0 0.0
    %1057 = vmatprep.subr.mxu0 0.0
    %1058 = vmatpush1.msra.mxu0 0.0
    %1059 = vmatprep.subr.mxu0 0.0
    %1060 = vmatpush1.msra.mxu0 0.0
    %1061 = vmatprep.subr.mxu0 0.0
    %1062 = vmatpush1.msra.mxu0 0.0
    %1063 = vmatprep.subr.mxu0 0.0
    %1064 = vmatpush1.msra.mxu0 0.0
    %1065 = vmatprep.subr.mxu0 0.0
    %1066 = vmatpush1.msra.mxu0 0.0
    %1067 = vmatprep.subr.mxu0 0.0
    %1068 = vmatpush1.msra.mxu0 0.0
    %1069 = vmatprep.mubr.f32.mxu0 0.0
    %1070 = vmatmul.mubr.f32.gmra.mrb[0].mxu0 %v1003
    %v1071 = vpop.f32.mrb[0].mxu0
    %v1072 = vadd.f32 0.0, %v1071
    %v1073 = vpop.f32.mrb[0].mxu0
    %1074 = vdwg.mxu0
    %v1076 = vrot.slane %v1072, 4
    %v1078 = vadd.f32 %v262, %v1076
    %v1079 = vxor.u32 %v1078, 2147483648
    %v1080 = vmul.f32 %v1079, 1.442695
    %v1081 = vpow.pop %v1080
    %v1082 = vadd.f32 %v1081, 1.0
    %v1083 = vrcp.pop %v1082
    %v1084 = vmul.f32 1.0, %v1083
    %v1085 = vtanh.pop %v1078
    %v1087 = vrot.slane %v988, 6
    %v1089 = vmul.f32 %v1084, %v1087
    %1091 = vrot.lane.b32.xlu0 %v1085, 64
    %v1092 = vpop.permute.xlu0 %1091
    %v1094 = vmul.f32 %v1084, %v1092
    %1096 = vrot.lane.b32.xlu0 %v1094, 32
    %v1097 = vpop.permute.xlu0 %1096
    %v1099 = vadd.f32 %v1089, %v1097
    %v1100 = vtanh.pop %v1099
    %1102 = vrot.lane.b32.xlu0 %v1100, 64
    %v1103 = vpop.permute.xlu0 %1102
    %v1105 = vmul.f32 %v1084, %v1103
    %1107 = vrot.lane.b32.xlu0 %v1105, 32
    %v1108 = vpop.permute.xlu0 %1107
    %1110 = vst.msk [vmem:[#allocation2 + $0x8] sm:$0x30] %vm670, %v1108
    %v1111 = vrot.slane %v1105, 4
    %1112 = vrot.lane.b32.xlu0 %v1111, 32
    %v1113 = vpop.permute.xlu0 %1112
    %v1114 = vsel %vm346, %v1113, 0
    %1116 = vmatprep.subr.mxu0 0.0
    %1117 = vmatpush1.msra.mxu0 %v165
    %1118 = vmatprep.subr.mxu0 0.0
    %1119 = vmatpush1.msra.mxu0 %v166
    %1120 = vmatprep.subr.mxu0 0.0
    %1121 = vmatpush1.msra.mxu0 %v167
    %1122 = vmatprep.subr.mxu0 0.0
    %1123 = vmatpush1.msra.mxu0 %v168
    %1124 = vmatprep.subr.mxu0 0.0
    %1125 = vmatpush1.msra.mxu0 0.0
    %1126 = vmatprep.subr.mxu0 0.0
    %1127 = vmatpush1.msra.mxu0 0.0
    %1128 = vmatprep.subr.mxu0 0.0
    %1129 = vmatpush1.msra.mxu0 0.0
    %1130 = vmatprep.subr.mxu0 0.0
    %1131 = vmatpush1.msra.mxu0 0.0
    %1132 = vmatprep.subr.mxu0 0.0
    %1133 = vmatpush1.msra.mxu0 0.0
    %1134 = vmatprep.subr.mxu0 0.0
    %1135 = vmatpush1.msra.mxu0 0.0
    %1136 = vmatprep.subr.mxu0 0.0
    %1137 = vmatpush1.msra.mxu0 0.0
    %1138 = vmatprep.subr.mxu0 0.0
    %1139 = vmatpush1.msra.mxu0 0.0
    %1140 = vmatprep.subr.mxu0 0.0
    %1141 = vmatpush1.msra.mxu0 0.0
    %1142 = vmatprep.subr.mxu0 0.0
    %1143 = vmatpush1.msra.mxu0 0.0
    %1144 = vmatprep.subr.mxu0 0.0
    %1145 = vmatpush1.msra.mxu0 0.0
    %1146 = vmatprep.subr.mxu0 0.0
    %1147 = vmatpush1.msra.mxu0 0.0
    %1148 = vmatprep.subr.mxu0 0.0
    %1149 = vmatpush1.msra.mxu0 0.0
    %1150 = vmatprep.subr.mxu0 0.0
    %1151 = vmatpush1.msra.mxu0 0.0
    %1152 = vmatprep.subr.mxu0 0.0
    %1153 = vmatpush1.msra.mxu0 0.0
    %1154 = vmatprep.subr.mxu0 0.0
    %1155 = vmatpush1.msra.mxu0 0.0
    %1156 = vmatprep.subr.mxu0 0.0
    %1157 = vmatpush1.msra.mxu0 0.0
    %1158 = vmatprep.subr.mxu0 0.0
    %1159 = vmatpush1.msra.mxu0 0.0
    %1160 = vmatprep.subr.mxu0 0.0
    %1161 = vmatpush1.msra.mxu0 0.0
    %1162 = vmatprep.subr.mxu0 0.0
    %1163 = vmatpush1.msra.mxu0 0.0
    %1164 = vmatprep.subr.mxu0 0.0
    %1165 = vmatpush1.msra.mxu0 0.0
    %1166 = vmatprep.subr.mxu0 0.0
    %1167 = vmatpush1.msra.mxu0 0.0
    %1168 = vmatprep.subr.mxu0 0.0
    %1169 = vmatpush1.msra.mxu0 0.0
    %1170 = vmatprep.subr.mxu0 0.0
    %1171 = vmatpush1.msra.mxu0 0.0
    %1172 = vmatprep.subr.mxu0 0.0
    %1173 = vmatpush1.msra.mxu0 0.0
    %1174 = vmatprep.subr.mxu0 0.0
    %1175 = vmatpush1.msra.mxu0 0.0
    %1176 = vmatprep.subr.mxu0 0.0
    %1177 = vmatpush1.msra.mxu0 0.0
    %1178 = vmatprep.subr.mxu0 0.0
    %1179 = vmatpush1.msra.mxu0 0.0
    %1180 = vmatprep.mubr.f32.mxu0 0.0
    %1181 = vmatmul.mubr.f32.gmra.mrb[0].mxu0 %v1114
    %v1182 = vpop.f32.mrb[0].mxu0
    %v1183 = vadd.f32 0.0, %v1182
    %v1184 = vpop.f32.mrb[0].mxu0
    %1185 = vdwg.mxu0
    %v1187 = vrot.slane %v1183, 2
    %v1189 = vadd.f32 %v262, %v1187
    %v1190 = vxor.u32 %v1189, 2147483648
    %v1191 = vmul.f32 %v1190, 1.442695
    %v1192 = vpow.pop %v1191
    %v1193 = vadd.f32 %v1192, 1.0
    %v1194 = vrcp.pop %v1193
    %v1195 = vmul.f32 1.0, %v1194
    %v1196 = vtanh.pop %v1189
    %v1198 = vrot.slane %v1099, 6
    %v1200 = vmul.f32 %v1195, %v1198
    %1202 = vrot.lane.b32.xlu0 %v1196, 64
    %v1203 = vpop.permute.xlu0 %1202
    %v1205 = vmul.f32 %v1195, %v1203
    %1207 = vrot.lane.b32.xlu0 %v1205, 32
    %v1208 = vpop.permute.xlu0 %1207
    %v1210 = vadd.f32 %v1200, %v1208
    %v1211 = vtanh.pop %v1210
    %1213 = vrot.lane.b32.xlu0 %v1211, 64
    %v1214 = vpop.permute.xlu0 %1213
    %v1216 = vmul.f32 %v1195, %v1214
    %1218 = vrot.lane.b32.xlu0 %v1216, 32
    %v1219 = vpop.permute.xlu0 %1218
    %1221 = vst.msk [vmem:[#allocation2 + $0x8] sm:$0xc0] %vm782, %v1219
    %1222 = vmatprep.subr.mxu0 0.0
    %1223 = vmatpush1.msra.mxu0 %v172
    %1224 = vmatprep.subr.mxu0 0.0
    %1225 = vmatpush1.msra.mxu0 %v173
    %1226 = vmatprep.subr.mxu0 0.0
    %1227 = vmatpush1.msra.mxu0 %v174
    %1228 = vmatprep.subr.mxu0 0.0
    %1229 = vmatpush1.msra.mxu0 %v175
    %1230 = vmatprep.subr.mxu0 0.0
    %1231 = vmatpush1.msra.mxu0 0.0
    %1232 = vmatprep.subr.mxu0 0.0
    %1233 = vmatpush1.msra.mxu0 0.0
    %1234 = vmatprep.subr.mxu0 0.0
    %1235 = vmatpush1.msra.mxu0 0.0
    %1236 = vmatprep.subr.mxu0 0.0
    %1237 = vmatpush1.msra.mxu0 0.0
    %1238 = vmatprep.subr.mxu0 0.0
    %1239 = vmatpush1.msra.mxu0 0.0
    %1240 = vmatprep.subr.mxu0 0.0
    %1241 = vmatpush1.msra.mxu0 0.0
    %1242 = vmatprep.subr.mxu0 0.0
    %1243 = vmatpush1.msra.mxu0 0.0
    %1244 = vmatprep.subr.mxu0 0.0
    %1245 = vmatpush1.msra.mxu0 0.0
    %1246 = vmatprep.subr.mxu0 0.0
    %1247 = vmatpush1.msra.mxu0 0.0
    %1248 = vmatprep.subr.mxu0 0.0
    %1249 = vmatpush1.msra.mxu0 0.0
    %1250 = vmatprep.subr.mxu0 0.0
    %1251 = vmatpush1.msra.mxu0 0.0
    %1252 = vmatprep.subr.mxu0 0.0
    %1253 = vmatpush1.msra.mxu0 0.0
    %1254 = vmatprep.subr.mxu0 0.0
    %1255 = vmatpush1.msra.mxu0 0.0
    %1256 = vmatprep.subr.mxu0 0.0
    %1257 = vmatpush1.msra.mxu0 0.0
    %1258 = vmatprep.subr.mxu0 0.0
    %1259 = vmatpush1.msra.mxu0 0.0
    %1260 = vmatprep.subr.mxu0 0.0
    %1261 = vmatpush1.msra.mxu0 0.0
    %1262 = vmatprep.subr.mxu0 0.0
    %1263 = vmatpush1.msra.mxu0 0.0
    %1264 = vmatprep.subr.mxu0 0.0
    %1265 = vmatpush1.msra.mxu0 0.0
    %1266 = vmatprep.subr.mxu0 0.0
    %1267 = vmatpush1.msra.mxu0 0.0
    %1268 = vmatprep.subr.mxu0 0.0
    %1269 = vmatpush1.msra.mxu0 0.0
    %1270 = vmatprep.subr.mxu0 0.0
    %1271 = vmatpush1.msra.mxu0 0.0
    %1272 = vmatprep.subr.mxu0 0.0
    %1273 = vmatpush1.msra.mxu0 0.0
    %1274 = vmatprep.subr.mxu0 0.0
    %1275 = vmatpush1.msra.mxu0 0.0
    %1276 = vmatprep.subr.mxu0 0.0
    %1277 = vmatpush1.msra.mxu0 0.0
    %1278 = vmatprep.subr.mxu0 0.0
    %1279 = vmatpush1.msra.mxu0 0.0
    %1280 = vmatprep.subr.mxu0 0.0
    %1281 = vmatpush1.msra.mxu0 0.0
    %1282 = vmatprep.subr.mxu0 0.0
    %1283 = vmatpush1.msra.mxu0 0.0
    %1284 = vmatprep.subr.mxu0 0.0
    %1285 = vmatpush1.msra.mxu0 0.0
    %1286 = vmatprep.mubr.f32.mxu0 0.0
    %1287 = vmatmul.mubr.f32.gmra.mrb[0].mxu0 %v348
    %v1288 = vpop.f32.mrb[0].mxu0
    %v1289 = vadd.f32 0.0, %v1288
    %v1290 = vpop.f32.mrb[0].mxu0
    %1291 = vdwg.mxu0
    %v1293 = vrot.slane %v1289, 2
    %v1295 = vadd.f32 %v343, %v1293
    %v1296 = vxor.u32 %v1295, 2147483648
    %v1297 = vmul.f32 %v1296, 1.442695
    %v1298 = vpow.pop %v1297
    %v1299 = vadd.f32 %v1298, 1.0
    %v1300 = vrcp.pop %v1299
    %v1301 = vmul.f32 1.0, %v1300
    %v1302 = vtanh.pop %v1295
    %v1303 = vmul.f32 %v1301, 0.0
    %1305 = vrot.lane.b32.xlu0 %v1302, 64
    %v1306 = vpop.permute.xlu0 %1305
    %v1308 = vmul.f32 %v1301, %v1306
    %1310 = vrot.lane.b32.xlu0 %v1308, 32
    %v1311 = vpop.permute.xlu0 %1310
    %v1313 = vadd.f32 %v1303, %v1311
    %v1314 = vtanh.pop %v1313
    %1316 = vrot.lane.b32.xlu0 %v1314, 64
    %v1317 = vpop.permute.xlu0 %1316
    %v1319 = vmul.f32 %v1301, %v1317
    %1321 = vrot.lane.b32.xlu0 %v1319, 64
    %v1322 = vpop.permute.xlu0 %1321
    %vm1324 = vcmask 523526
    %1325 = vst.msk [vmem:[#allocation2 + $0x8] sm:$0xc0] %vm1324, %v1322
    %v1326 = vrot.slane %v1319, 6
    %1327 = vrot.lane.b32.xlu0 %v1326, 32
    %v1328 = vpop.permute.xlu0 %1327
    %v1329 = vsel %vm346, %v1328, 0
    %1331 = vmatprep.subr.mxu0 0.0
    %1332 = vmatpush1.msra.mxu0 %v172
    %1333 = vmatprep.subr.mxu0 0.0
    %1334 = vmatpush1.msra.mxu0 %v173
    %1335 = vmatprep.subr.mxu0 0.0
    %1336 = vmatpush1.msra.mxu0 %v174
    %1337 = vmatprep.subr.mxu0 0.0
    %1338 = vmatpush1.msra.mxu0 %v175
    %1339 = vmatprep.subr.mxu0 0.0
    %1340 = vmatpush1.msra.mxu0 0.0
    %1341 = vmatprep.subr.mxu0 0.0
    %1342 = vmatpush1.msra.mxu0 0.0
    %1343 = vmatprep.subr.mxu0 0.0
    %1344 = vmatpush1.msra.mxu0 0.0
    %1345 = vmatprep.subr.mxu0 0.0
    %1346 = vmatpush1.msra.mxu0 0.0
    %1347 = vmatprep.subr.mxu0 0.0
    %1348 = vmatpush1.msra.mxu0 0.0
    %1349 = vmatprep.subr.mxu0 0.0
    %1350 = vmatpush1.msra.mxu0 0.0
    %1351 = vmatprep.subr.mxu0 0.0
    %1352 = vmatpush1.msra.mxu0 0.0
    %1353 = vmatprep.subr.mxu0 0.0
    %1354 = vmatpush1.msra.mxu0 0.0
    %1355 = vmatprep.subr.mxu0 0.0
    %1356 = vmatpush1.msra.mxu0 0.0
    %1357 = vmatprep.subr.mxu0 0.0
    %1358 = vmatpush1.msra.mxu0 0.0
    %1359 = vmatprep.subr.mxu0 0.0
    %1360 = vmatpush1.msra.mxu0 0.0
    %1361 = vmatprep.subr.mxu0 0.0
    %1362 = vmatpush1.msra.mxu0 0.0
    %1363 = vmatprep.subr.mxu0 0.0
    %1364 = vmatpush1.msra.mxu0 0.0
    %1365 = vmatprep.subr.mxu0 0.0
    %1366 = vmatpush1.msra.mxu0 0.0
    %1367 = vmatprep.subr.mxu0 0.0
    %1368 = vmatpush1.msra.mxu0 0.0
    %1369 = vmatprep.subr.mxu0 0.0
    %1370 = vmatpush1.msra.mxu0 0.0
    %1371 = vmatprep.subr.mxu0 0.0
    %1372 = vmatpush1.msra.mxu0 0.0
    %1373 = vmatprep.subr.mxu0 0.0
    %1374 = vmatpush1.msra.mxu0 0.0
    %1375 = vmatprep.subr.mxu0 0.0
    %1376 = vmatpush1.msra.mxu0 0.0
    %1377 = vmatprep.subr.mxu0 0.0
    %1378 = vmatpush1.msra.mxu0 0.0
    %1379 = vmatprep.subr.mxu0 0.0
    %1380 = vmatpush1.msra.mxu0 0.0
    %1381 = vmatprep.subr.mxu0 0.0
    %1382 = vmatpush1.msra.mxu0 0.0
    %1383 = vmatprep.subr.mxu0 0.0
    %1384 = vmatpush1.msra.mxu0 0.0
    %1385 = vmatprep.subr.mxu0 0.0
    %1386 = vmatpush1.msra.mxu0 0.0
    %1387 = vmatprep.subr.mxu0 0.0
    %1388 = vmatpush1.msra.mxu0 0.0
    %1389 = vmatprep.subr.mxu0 0.0
    %1390 = vmatpush1.msra.mxu0 0.0
    %1391 = vmatprep.subr.mxu0 0.0
    %1392 = vmatpush1.msra.mxu0 0.0
    %1393 = vmatprep.subr.mxu0 0.0
    %1394 = vmatpush1.msra.mxu0 0.0
    %1395 = vmatprep.mubr.f32.mxu0 0.0
    %1396 = vmatmul.mubr.f32.gmra.mrb[0].mxu0 %v1329
    %v1397 = vpop.f32.mrb[0].mxu0
    %v1398 = vadd.f32 0.0, %v1397
    %v1399 = vpop.f32.mrb[0].mxu0
    %1400 = vdwg.mxu0
    %v1402 = vrot.slane %v1398, 4
    %v1404 = vadd.f32 %v343, %v1402
    %v1405 = vxor.u32 %v1404, 2147483648
    %v1406 = vmul.f32 %v1405, 1.442695
    %v1407 = vpow.pop %v1406
    %v1408 = vadd.f32 %v1407, 1.0
    %v1409 = vrcp.pop %v1408
    %v1410 = vmul.f32 1.0, %v1409
    %v1411 = vtanh.pop %v1404
    %v1413 = vrot.slane %v1313, 2
    %v1415 = vmul.f32 %v1410, %v1413
    %1417 = vrot.lane.b32.xlu0 %v1411, 64
    %v1418 = vpop.permute.xlu0 %1417
    %v1420 = vmul.f32 %v1410, %v1418
    %1422 = vrot.lane.b32.xlu0 %v1420, 32
    %v1423 = vpop.permute.xlu0 %1422
    %v1425 = vadd.f32 %v1415, %v1423
    %v1426 = vtanh.pop %v1425
    %1428 = vrot.lane.b32.xlu0 %v1426, 64
    %v1429 = vpop.permute.xlu0 %1428
    %v1431 = vmul.f32 %v1410, %v1429
    %1433 = vrot.lane.b32.xlu0 %v1431, 64
    %v1434 = vpop.permute.xlu0 %1433
    %vm1436 = vcmask 521476
    %1437 = vst.msk [vmem:[#allocation2 + $0x8] sm:$0x30] %vm1436, %v1434
    %v1438 = vrot.slane %v1431, 4
    %1439 = vrot.lane.b32.xlu0 %v1438, 32
    %v1440 = vpop.permute.xlu0 %1439
    %v1441 = vsel %vm346, %v1440, 0
    %1443 = vmatprep.subr.mxu0 0.0
    %1444 = vmatpush1.msra.mxu0 %v172
    %1445 = vmatprep.subr.mxu0 0.0
    %1446 = vmatpush1.msra.mxu0 %v173
    %1447 = vmatprep.subr.mxu0 0.0
    %1448 = vmatpush1.msra.mxu0 %v174
    %1449 = vmatprep.subr.mxu0 0.0
    %1450 = vmatpush1.msra.mxu0 %v175
    %1451 = vmatprep.subr.mxu0 0.0
    %1452 = vmatpush1.msra.mxu0 0.0
    %1453 = vmatprep.subr.mxu0 0.0
    %1454 = vmatpush1.msra.mxu0 0.0
    %1455 = vmatprep.subr.mxu0 0.0
    %1456 = vmatpush1.msra.mxu0 0.0
    %1457 = vmatprep.subr.mxu0 0.0
    %1458 = vmatpush1.msra.mxu0 0.0
    %1459 = vmatprep.subr.mxu0 0.0
    %1460 = vmatpush1.msra.mxu0 0.0
    %1461 = vmatprep.subr.mxu0 0.0
    %1462 = vmatpush1.msra.mxu0 0.0
    %1463 = vmatprep.subr.mxu0 0.0
    %1464 = vmatpush1.msra.mxu0 0.0
    %1465 = vmatprep.subr.mxu0 0.0
    %1466 = vmatpush1.msra.mxu0 0.0
    %1467 = vmatprep.subr.mxu0 0.0
    %1468 = vmatpush1.msra.mxu0 0.0
    %1469 = vmatprep.subr.mxu0 0.0
    %1470 = vmatpush1.msra.mxu0 0.0
    %1471 = vmatprep.subr.mxu0 0.0
    %1472 = vmatpush1.msra.mxu0 0.0
    %1473 = vmatprep.subr.mxu0 0.0
    %1474 = vmatpush1.msra.mxu0 0.0
    %1475 = vmatprep.subr.mxu0 0.0
    %1476 = vmatpush1.msra.mxu0 0.0
    %1477 = vmatprep.subr.mxu0 0.0
    %1478 = vmatpush1.msra.mxu0 0.0
    %1479 = vmatprep.subr.mxu0 0.0
    %1480 = vmatpush1.msra.mxu0 0.0
    %1481 = vmatprep.subr.mxu0 0.0
    %1482 = vmatpush1.msra.mxu0 0.0
    %1483 = vmatprep.subr.mxu0 0.0
    %1484 = vmatpush1.msra.mxu0 0.0
    %1485 = vmatprep.subr.mxu0 0.0
    %1486 = vmatpush1.msra.mxu0 0.0
    %1487 = vmatprep.subr.mxu0 0.0
    %1488 = vmatpush1.msra.mxu0 0.0
    %1489 = vmatprep.subr.mxu0 0.0
    %1490 = vmatpush1.msra.mxu0 0.0
    %1491 = vmatprep.subr.mxu0 0.0
    %1492 = vmatpush1.msra.mxu0 0.0
    %1493 = vmatprep.subr.mxu0 0.0
    %1494 = vmatpush1.msra.mxu0 0.0
    %1495 = vmatprep.subr.mxu0 0.0
    %1496 = vmatpush1.msra.mxu0 0.0
    %1497 = vmatprep.subr.mxu0 0.0
    %1498 = vmatpush1.msra.mxu0 0.0
    %1499 = vmatprep.subr.mxu0 0.0
    %1500 = vmatpush1.msra.mxu0 0.0
    %1501 = vmatprep.subr.mxu0 0.0
    %1502 = vmatpush1.msra.mxu0 0.0
    %1503 = vmatprep.subr.mxu0 0.0
    %1504 = vmatpush1.msra.mxu0 0.0
    %1505 = vmatprep.subr.mxu0 0.0
    %1506 = vmatpush1.msra.mxu0 0.0
    %1507 = vmatprep.mubr.f32.mxu0 0.0
    %1508 = vmatmul.mubr.f32.gmra.mrb[0].mxu0 %v1441
    %v1509 = vpop.f32.mrb[0].mxu0
    %v1510 = vadd.f32 0.0, %v1509
    %v1511 = vpop.f32.mrb[0].mxu0
    %1512 = vdwg.mxu0
    %v1514 = vrot.slane %v1510, 6
    %v1516 = vadd.f32 %v343, %v1514
    %v1517 = vxor.u32 %v1516, 2147483648
    %v1518 = vmul.f32 %v1517, 1.442695
    %v1519 = vpow.pop %v1518
    %v1520 = vadd.f32 %v1519, 1.0
    %v1521 = vrcp.pop %v1520
    %v1522 = vmul.f32 1.0, %v1521
    %v1523 = vtanh.pop %v1516
    %v1525 = vrot.slane %v1425, 2
    %v1527 = vmul.f32 %v1522, %v1525
    %1529 = vrot.lane.b32.xlu0 %v1523, 64
    %v1530 = vpop.permute.xlu0 %1529
    %v1532 = vmul.f32 %v1522, %v1530
    %1534 = vrot.lane.b32.xlu0 %v1532, 32
    %v1535 = vpop.permute.xlu0 %1534
    %v1537 = vadd.f32 %v1527, %v1535
    %v1538 = vtanh.pop %v1537
    %1540 = vrot.lane.b32.xlu0 %v1538, 64
    %v1541 = vpop.permute.xlu0 %1540
    %v1543 = vmul.f32 %v1522, %v1541
    %1545 = vrot.lane.b32.xlu0 %v1543, 64
    %v1546 = vpop.permute.xlu0 %1545
    %vm1548 = vcmask 519426
    %1549 = vst.msk [vmem:[#allocation2 + $0x8] sm:$0xc] %vm1548, %v1546
    %v1550 = vrot.slane %v1543, 2
    %1551 = vrot.lane.b32.xlu0 %v1550, 32
    %v1552 = vpop.permute.xlu0 %1551
    %v1553 = vsel %vm346, %v1552, 0
    %1555 = vmatprep.subr.mxu0 0.0
    %1556 = vmatpush1.msra.mxu0 %v172
    %1557 = vmatprep.subr.mxu0 0.0
    %1558 = vmatpush1.msra.mxu0 %v173
    %1559 = vmatprep.subr.mxu0 0.0
    %1560 = vmatpush1.msra.mxu0 %v174
    %1561 = vmatprep.subr.mxu0 0.0
    %1562 = vmatpush1.msra.mxu0 %v175
    %1563 = vmatprep.subr.mxu0 0.0
    %1564 = vmatpush1.msra.mxu0 0.0
    %1565 = vmatprep.subr.mxu0 0.0
    %1566 = vmatpush1.msra.mxu0 0.0
    %1567 = vmatprep.subr.mxu0 0.0
    %1568 = vmatpush1.msra.mxu0 0.0
    %1569 = vmatprep.subr.mxu0 0.0
    %1570 = vmatpush1.msra.mxu0 0.0
    %1571 = vmatprep.subr.mxu0 0.0
    %1572 = vmatpush1.msra.mxu0 0.0
    %1573 = vmatprep.subr.mxu0 0.0
    %1574 = vmatpush1.msra.mxu0 0.0
    %1575 = vmatprep.subr.mxu0 0.0
    %1576 = vmatpush1.msra.mxu0 0.0
    %1577 = vmatprep.subr.mxu0 0.0
    %1578 = vmatpush1.msra.mxu0 0.0
    %1579 = vmatprep.subr.mxu0 0.0
    %1580 = vmatpush1.msra.mxu0 0.0
    %1581 = vmatprep.subr.mxu0 0.0
    %1582 = vmatpush1.msra.mxu0 0.0
    %1583 = vmatprep.subr.mxu0 0.0
    %1584 = vmatpush1.msra.mxu0 0.0
    %1585 = vmatprep.subr.mxu0 0.0
    %1586 = vmatpush1.msra.mxu0 0.0
    %1587 = vmatprep.subr.mxu0 0.0
    %1588 = vmatpush1.msra.mxu0 0.0
    %1589 = vmatprep.subr.mxu0 0.0
    %1590 = vmatpush1.msra.mxu0 0.0
    %1591 = vmatprep.subr.mxu0 0.0
    %1592 = vmatpush1.msra.mxu0 0.0
    %1593 = vmatprep.subr.mxu0 0.0
    %1594 = vmatpush1.msra.mxu0 0.0
    %1595 = vmatprep.subr.mxu0 0.0
    %1596 = vmatpush1.msra.mxu0 0.0
    %1597 = vmatprep.subr.mxu0 0.0
    %1598 = vmatpush1.msra.mxu0 0.0
    %1599 = vmatprep.subr.mxu0 0.0
    %1600 = vmatpush1.msra.mxu0 0.0
    %1601 = vmatprep.subr.mxu0 0.0
    %1602 = vmatpush1.msra.mxu0 0.0
    %1603 = vmatprep.subr.mxu0 0.0
    %1604 = vmatpush1.msra.mxu0 0.0
    %1605 = vmatprep.subr.mxu0 0.0
    %1606 = vmatpush1.msra.mxu0 0.0
    %1607 = vmatprep.subr.mxu0 0.0
    %1608 = vmatpush1.msra.mxu0 0.0
    %1609 = vmatprep.subr.mxu0 0.0
    %1610 = vmatpush1.msra.mxu0 0.0
    %1611 = vmatprep.subr.mxu0 0.0
    %1612 = vmatpush1.msra.mxu0 0.0
    %1613 = vmatprep.subr.mxu0 0.0
    %1614 = vmatpush1.msra.mxu0 0.0
    %1615 = vmatprep.subr.mxu0 0.0
    %1616 = vmatpush1.msra.mxu0 0.0
    %1617 = vmatprep.subr.mxu0 0.0
    %1618 = vmatpush1.msra.mxu0 0.0
    %1619 = vmatprep.mubr.f32.mxu0 0.0
    %1620 = vmatmul.mubr.f32.gmra.mrb[0].mxu0 %v1553
    %v1621 = vpop.f32.mrb[0].mxu0
    %v1622 = vadd.f32 0.0, %v1621
    %v1623 = vpop.f32.mrb[0].mxu0
    %1624 = vdwg.mxu0
    %v1625 = vadd.f32 %v343, %v1622
    %v1626 = vxor.u32 %v1625, 2147483648
    %v1627 = vmul.f32 %v1626, 1.442695
    %v1628 = vpow.pop %v1627
    %v1629 = vadd.f32 %v1628, 1.0
    %v1630 = vrcp.pop %v1629
    %v1631 = vmul.f32 1.0, %v1630
    %v1632 = vtanh.pop %v1625
    %v1634 = vrot.slane %v1537, 2
    %v1636 = vmul.f32 %v1631, %v1634
    %1638 = vrot.lane.b32.xlu0 %v1632, 64
    %v1639 = vpop.permute.xlu0 %1638
    %v1641 = vmul.f32 %v1631, %v1639
    %1643 = vrot.lane.b32.xlu0 %v1641, 32
    %v1644 = vpop.permute.xlu0 %1643
    %v1646 = vadd.f32 %v1636, %v1644
    %v1647 = vtanh.pop %v1646
    %1649 = vrot.lane.b32.xlu0 %v1647, 64
    %v1650 = vpop.permute.xlu0 %1649
    %v1652 = vmul.f32 %v1631, %v1650
    %1654 = vrot.lane.b32.xlu0 %v1652, 64
    %v1655 = vpop.permute.xlu0 %1654
    %vm1657 = vcmask 517376
    %1658 = vst.msk [vmem:[#allocation2 + $0x8] sm:$0x3] %vm1657, %v1655
    %1659 = vrot.lane.b32.xlu0 %v1652, 32
    %v1660 = vpop.permute.xlu0 %1659
    %v1661 = vsel %vm346, %v1660, 0
    %1663 = vmatprep.subr.mxu0 0.0
    %1664 = vmatpush1.msra.mxu0 %v172
    %1665 = vmatprep.subr.mxu0 0.0
    %1666 = vmatpush1.msra.mxu0 %v173
    %1667 = vmatprep.subr.mxu0 0.0
    %1668 = vmatpush1.msra.mxu0 %v174
    %1669 = vmatprep.subr.mxu0 0.0
    %1670 = vmatpush1.msra.mxu0 %v175
    %1671 = vmatprep.subr.mxu0 0.0
    %1672 = vmatpush1.msra.mxu0 0.0
    %1673 = vmatprep.subr.mxu0 0.0
    %1674 = vmatpush1.msra.mxu0 0.0
    %1675 = vmatprep.subr.mxu0 0.0
    %1676 = vmatpush1.msra.mxu0 0.0
    %1677 = vmatprep.subr.mxu0 0.0
    %1678 = vmatpush1.msra.mxu0 0.0
    %1679 = vmatprep.subr.mxu0 0.0
    %1680 = vmatpush1.msra.mxu0 0.0
    %1681 = vmatprep.subr.mxu0 0.0
    %1682 = vmatpush1.msra.mxu0 0.0
    %1683 = vmatprep.subr.mxu0 0.0
    %1684 = vmatpush1.msra.mxu0 0.0
    %1685 = vmatprep.subr.mxu0 0.0
    %1686 = vmatpush1.msra.mxu0 0.0
    %1687 = vmatprep.subr.mxu0 0.0
    %1688 = vmatpush1.msra.mxu0 0.0
    %1689 = vmatprep.subr.mxu0 0.0
    %1690 = vmatpush1.msra.mxu0 0.0
    %1691 = vmatprep.subr.mxu0 0.0
    %1692 = vmatpush1.msra.mxu0 0.0
    %1693 = vmatprep.subr.mxu0 0.0
    %1694 = vmatpush1.msra.mxu0 0.0
    %1695 = vmatprep.subr.mxu0 0.0
    %1696 = vmatpush1.msra.mxu0 0.0
    %1697 = vmatprep.subr.mxu0 0.0
    %1698 = vmatpush1.msra.mxu0 0.0
    %1699 = vmatprep.subr.mxu0 0.0
    %1700 = vmatpush1.msra.mxu0 0.0
    %1701 = vmatprep.subr.mxu0 0.0
    %1702 = vmatpush1.msra.mxu0 0.0
    %1703 = vmatprep.subr.mxu0 0.0
    %1704 = vmatpush1.msra.mxu0 0.0
    %1705 = vmatprep.subr.mxu0 0.0
    %1706 = vmatpush1.msra.mxu0 0.0
    %1707 = vmatprep.subr.mxu0 0.0
    %1708 = vmatpush1.msra.mxu0 0.0
    %1709 = vmatprep.subr.mxu0 0.0
    %1710 = vmatpush1.msra.mxu0 0.0
    %1711 = vmatprep.subr.mxu0 0.0
    %1712 = vmatpush1.msra.mxu0 0.0
    %1713 = vmatprep.subr.mxu0 0.0
    %1714 = vmatpush1.msra.mxu0 0.0
    %1715 = vmatprep.subr.mxu0 0.0
    %1716 = vmatpush1.msra.mxu0 0.0
    %1717 = vmatprep.subr.mxu0 0.0
    %1718 = vmatpush1.msra.mxu0 0.0
    %1719 = vmatprep.subr.mxu0 0.0
    %1720 = vmatpush1.msra.mxu0 0.0
    %1721 = vmatprep.subr.mxu0 0.0
    %1722 = vmatpush1.msra.mxu0 0.0
    %1723 = vmatprep.subr.mxu0 0.0
    %1724 = vmatpush1.msra.mxu0 0.0
    %1725 = vmatprep.subr.mxu0 0.0
    %1726 = vmatpush1.msra.mxu0 0.0
    %1727 = vmatprep.mubr.f32.mxu0 0.0
    %1728 = vmatmul.mubr.f32.gmra.mrb[0].mxu0 %v1661
    %v1729 = vpop.f32.mrb[0].mxu0
    %v1730 = vadd.f32 0.0, %v1729
    %v1731 = vpop.f32.mrb[0].mxu0
    %1732 = vdwg.mxu0
    %v1734 = vrot.slane %v1730, 2
    %v1736 = vadd.f32 %v338, %v1734
    %v1737 = vxor.u32 %v1736, 2147483648
    %v1738 = vmul.f32 %v1737, 1.442695
    %v1739 = vpow.pop %v1738
    %v1740 = vadd.f32 %v1739, 1.0
    %v1741 = vrcp.pop %v1740
    %v1742 = vmul.f32 1.0, %v1741
    %v1743 = vtanh.pop %v1736
    %v1745 = vrot.slane %v1646, 2
    %v1747 = vmul.f32 %v1742, %v1745
    %1749 = vrot.lane.b32.xlu0 %v1743, 64
    %v1750 = vpop.permute.xlu0 %1749
    %v1752 = vmul.f32 %v1742, %v1750
    %1754 = vrot.lane.b32.xlu0 %v1752, 32
    %v1755 = vpop.permute.xlu0 %1754
    %v1757 = vadd.f32 %v1747, %v1755
    %v1758 = vtanh.pop %v1757
    %1760 = vrot.lane.b32.xlu0 %v1758, 64
    %v1761 = vpop.permute.xlu0 %1760
    %v1763 = vmul.f32 %v1742, %v1761
    %1765 = vrot.lane.b32.xlu0 %v1763, 64
    %v1766 = vpop.permute.xlu0 %1765
    %1768 = vst.msk [vmem:[#allocation2] sm:$0xc0] %vm1324, %v1766
    %v1769 = vrot.slane %v1763, 6
    %1770 = vrot.lane.b32.xlu0 %v1769, 32
    %v1771 = vpop.permute.xlu0 %1770
    %v1772 = vsel %vm346, %v1771, 0
    %1774 = vmatprep.subr.mxu0 0.0
    %1775 = vmatpush1.msra.mxu0 %v172
    %1776 = vmatprep.subr.mxu0 0.0
    %1777 = vmatpush1.msra.mxu0 %v173
    %1778 = vmatprep.subr.mxu0 0.0
    %1779 = vmatpush1.msra.mxu0 %v174
    %1780 = vmatprep.subr.mxu0 0.0
    %1781 = vmatpush1.msra.mxu0 %v175
    %1782 = vmatprep.subr.mxu0 0.0
    %1783 = vmatpush1.msra.mxu0 0.0
    %1784 = vmatprep.subr.mxu0 0.0
    %1785 = vmatpush1.msra.mxu0 0.0
    %1786 = vmatprep.subr.mxu0 0.0
    %1787 = vmatpush1.msra.mxu0 0.0
    %1788 = vmatprep.subr.mxu0 0.0
    %1789 = vmatpush1.msra.mxu0 0.0
    %1790 = vmatprep.subr.mxu0 0.0
    %1791 = vmatpush1.msra.mxu0 0.0
    %1792 = vmatprep.subr.mxu0 0.0
    %1793 = vmatpush1.msra.mxu0 0.0
    %1794 = vmatprep.subr.mxu0 0.0
    %1795 = vmatpush1.msra.mxu0 0.0
    %1796 = vmatprep.subr.mxu0 0.0
    %1797 = vmatpush1.msra.mxu0 0.0
    %1798 = vmatprep.subr.mxu0 0.0
    %1799 = vmatpush1.msra.mxu0 0.0
    %1800 = vmatprep.subr.mxu0 0.0
    %1801 = vmatpush1.msra.mxu0 0.0
    %1802 = vmatprep.subr.mxu0 0.0
    %1803 = vmatpush1.msra.mxu0 0.0
    %1804 = vmatprep.subr.mxu0 0.0
    %1805 = vmatpush1.msra.mxu0 0.0
    %1806 = vmatprep.subr.mxu0 0.0
    %1807 = vmatpush1.msra.mxu0 0.0
    %1808 = vmatprep.subr.mxu0 0.0
    %1809 = vmatpush1.msra.mxu0 0.0
    %1810 = vmatprep.subr.mxu0 0.0
    %1811 = vmatpush1.msra.mxu0 0.0
    %1812 = vmatprep.subr.mxu0 0.0
    %1813 = vmatpush1.msra.mxu0 0.0
    %1814 = vmatprep.subr.mxu0 0.0
    %1815 = vmatpush1.msra.mxu0 0.0
    %1816 = vmatprep.subr.mxu0 0.0
    %1817 = vmatpush1.msra.mxu0 0.0
    %1818 = vmatprep.subr.mxu0 0.0
    %1819 = vmatpush1.msra.mxu0 0.0
    %1820 = vmatprep.subr.mxu0 0.0
    %1821 = vmatpush1.msra.mxu0 0.0
    %1822 = vmatprep.subr.mxu0 0.0
    %1823 = vmatpush1.msra.mxu0 0.0
    %1824 = vmatprep.subr.mxu0 0.0
    %1825 = vmatpush1.msra.mxu0 0.0
    %1826 = vmatprep.subr.mxu0 0.0
    %1827 = vmatpush1.msra.mxu0 0.0
    %1828 = vmatprep.subr.mxu0 0.0
    %1829 = vmatpush1.msra.mxu0 0.0
    %1830 = vmatprep.subr.mxu0 0.0
    %1831 = vmatpush1.msra.mxu0 0.0
    %1832 = vmatprep.subr.mxu0 0.0
    %1833 = vmatpush1.msra.mxu0 0.0
    %1834 = vmatprep.subr.mxu0 0.0
    %1835 = vmatpush1.msra.mxu0 0.0
    %1836 = vmatprep.subr.mxu0 0.0
    %1837 = vmatpush1.msra.mxu0 0.0
    %1838 = vmatprep.mubr.f32.mxu0 0.0
    %1839 = vmatmul.mubr.f32.gmra.mrb[0].mxu0 %v1772
    %v1840 = vpop.f32.mrb[0].mxu0
    %v1841 = vadd.f32 0.0, %v1840
    %v1842 = vpop.f32.mrb[0].mxu0
    %1843 = vdwg.mxu0
    %v1845 = vrot.slane %v1841, 4
    %v1847 = vadd.f32 %v338, %v1845
    %v1848 = vxor.u32 %v1847, 2147483648
    %v1849 = vmul.f32 %v1848, 1.442695
    %v1850 = vpow.pop %v1849
    %v1851 = vadd.f32 %v1850, 1.0
    %v1852 = vrcp.pop %v1851
    %v1853 = vmul.f32 1.0, %v1852
    %v1854 = vtanh.pop %v1847
    %v1856 = vrot.slane %v1757, 2
    %v1858 = vmul.f32 %v1853, %v1856
    %1860 = vrot.lane.b32.xlu0 %v1854, 64
    %v1861 = vpop.permute.xlu0 %1860
    %v1863 = vmul.f32 %v1853, %v1861
    %1865 = vrot.lane.b32.xlu0 %v1863, 32
    %v1866 = vpop.permute.xlu0 %1865
    %v1868 = vadd.f32 %v1858, %v1866
    %v1869 = vtanh.pop %v1868
    %1871 = vrot.lane.b32.xlu0 %v1869, 64
    %v1872 = vpop.permute.xlu0 %1871
    %v1874 = vmul.f32 %v1853, %v1872
    %1876 = vrot.lane.b32.xlu0 %v1874, 64
    %v1877 = vpop.permute.xlu0 %1876
    %1879 = vst.msk [vmem:[#allocation2] sm:$0x30] %vm1436, %v1877
    %v1880 = vrot.slane %v1874, 4
    %1881 = vrot.lane.b32.xlu0 %v1880, 32
    %v1882 = vpop.permute.xlu0 %1881
    %v1883 = vsel %vm346, %v1882, 0
    %1885 = vmatprep.subr.mxu0 0.0
    %1886 = vmatpush1.msra.mxu0 %v172
    %1887 = vmatprep.subr.mxu0 0.0
    %1888 = vmatpush1.msra.mxu0 %v173
    %1889 = vmatprep.subr.mxu0 0.0
    %1890 = vmatpush1.msra.mxu0 %v174
    %1891 = vmatprep.subr.mxu0 0.0
    %1892 = vmatpush1.msra.mxu0 %v175
    %1893 = vmatprep.subr.mxu0 0.0
    %1894 = vmatpush1.msra.mxu0 0.0
    %1895 = vmatprep.subr.mxu0 0.0
    %1896 = vmatpush1.msra.mxu0 0.0
    %1897 = vmatprep.subr.mxu0 0.0
    %1898 = vmatpush1.msra.mxu0 0.0
    %1899 = vmatprep.subr.mxu0 0.0
    %1900 = vmatpush1.msra.mxu0 0.0
    %1901 = vmatprep.subr.mxu0 0.0
    %1902 = vmatpush1.msra.mxu0 0.0
    %1903 = vmatprep.subr.mxu0 0.0
    %1904 = vmatpush1.msra.mxu0 0.0
    %1905 = vmatprep.subr.mxu0 0.0
    %1906 = vmatpush1.msra.mxu0 0.0
    %1907 = vmatprep.subr.mxu0 0.0
    %1908 = vmatpush1.msra.mxu0 0.0
    %1909 = vmatprep.subr.mxu0 0.0
    %1910 = vmatpush1.msra.mxu0 0.0
    %1911 = vmatprep.subr.mxu0 0.0
    %1912 = vmatpush1.msra.mxu0 0.0
    %1913 = vmatprep.subr.mxu0 0.0
    %1914 = vmatpush1.msra.mxu0 0.0
    %1915 = vmatprep.subr.mxu0 0.0
    %1916 = vmatpush1.msra.mxu0 0.0
    %1917 = vmatprep.subr.mxu0 0.0
    %1918 = vmatpush1.msra.mxu0 0.0
    %1919 = vmatprep.subr.mxu0 0.0
    %1920 = vmatpush1.msra.mxu0 0.0
    %1921 = vmatprep.subr.mxu0 0.0
    %1922 = vmatpush1.msra.mxu0 0.0
    %1923 = vmatprep.subr.mxu0 0.0
    %1924 = vmatpush1.msra.mxu0 0.0
    %1925 = vmatprep.subr.mxu0 0.0
    %1926 = vmatpush1.msra.mxu0 0.0
    %1927 = vmatprep.subr.mxu0 0.0
    %1928 = vmatpush1.msra.mxu0 0.0
    %1929 = vmatprep.subr.mxu0 0.0
    %1930 = vmatpush1.msra.mxu0 0.0
    %1931 = vmatprep.subr.mxu0 0.0
    %1932 = vmatpush1.msra.mxu0 0.0
    %1933 = vmatprep.subr.mxu0 0.0
    %1934 = vmatpush1.msra.mxu0 0.0
    %1935 = vmatprep.subr.mxu0 0.0
    %1936 = vmatpush1.msra.mxu0 0.0
    %1937 = vmatprep.subr.mxu0 0.0
    %1938 = vmatpush1.msra.mxu0 0.0
    %1939 = vmatprep.subr.mxu0 0.0
    %1940 = vmatpush1.msra.mxu0 0.0
    %1941 = vmatprep.subr.mxu0 0.0
    %1942 = vmatpush1.msra.mxu0 0.0
    %1943 = vmatprep.subr.mxu0 0.0
    %1944 = vmatpush1.msra.mxu0 0.0
    %1945 = vmatprep.subr.mxu0 0.0
    %1946 = vmatpush1.msra.mxu0 0.0
    %1947 = vmatprep.subr.mxu0 0.0
    %1948 = vmatpush1.msra.mxu0 0.0
    %1949 = vmatprep.mubr.f32.mxu0 0.0
    %1950 = vmatmul.mubr.f32.gmra.mrb[0].mxu0 %v1883
    %v1951 = vpop.f32.mrb[0].mxu0
    %v1952 = vadd.f32 0.0, %v1951
    %v1953 = vpop.f32.mrb[0].mxu0
    %1954 = vdwg.mxu0
    %v1956 = vrot.slane %v1952, 6
    %v1958 = vadd.f32 %v338, %v1956
    %v1959 = vxor.u32 %v1958, 2147483648
    %v1960 = vmul.f32 %v1959, 1.442695
    %v1961 = vpow.pop %v1960
    %v1962 = vadd.f32 %v1961, 1.0
    %v1963 = vrcp.pop %v1962
    %v1964 = vmul.f32 1.0, %v1963
    %v1965 = vtanh.pop %v1958
    %v1967 = vrot.slane %v1868, 2
    %v1969 = vmul.f32 %v1964, %v1967
    %1971 = vrot.lane.b32.xlu0 %v1965, 64
    %v1972 = vpop.permute.xlu0 %1971
    %v1974 = vmul.f32 %v1964, %v1972
    %1976 = vrot.lane.b32.xlu0 %v1974, 32
    %v1977 = vpop.permute.xlu0 %1976
    %v1979 = vadd.f32 %v1969, %v1977
    %v1980 = vtanh.pop %v1979
    %1982 = vrot.lane.b32.xlu0 %v1980, 64
    %v1983 = vpop.permute.xlu0 %1982
    %v1985 = vmul.f32 %v1964, %v1983
    %1987 = vrot.lane.b32.xlu0 %v1985, 64
    %v1988 = vpop.permute.xlu0 %1987
    %1990 = vst.msk [vmem:[#allocation2] sm:$0xc] %vm1548, %v1988
    %v1991 = vrot.slane %v1985, 2
    %1992 = vrot.lane.b32.xlu0 %v1991, 32
    %v1993 = vpop.permute.xlu0 %1992
    %v1994 = vsel %vm346, %v1993, 0
    %1996 = vmatprep.subr.mxu0 0.0
    %1997 = vmatpush1.msra.mxu0 %v172
    %1998 = vmatprep.subr.mxu0 0.0
    %1999 = vmatpush1.msra.mxu0 %v173
    %2000 = vmatprep.subr.mxu0 0.0
    %2001 = vmatpush1.msra.mxu0 %v174
    %2002 = vmatprep.subr.mxu0 0.0
    %2003 = vmatpush1.msra.mxu0 %v175
    %2004 = vmatprep.subr.mxu0 0.0
    %2005 = vmatpush1.msra.mxu0 0.0
    %2006 = vmatprep.subr.mxu0 0.0
    %2007 = vmatpush1.msra.mxu0 0.0
    %2008 = vmatprep.subr.mxu0 0.0
    %2009 = vmatpush1.msra.mxu0 0.0
    %2010 = vmatprep.subr.mxu0 0.0
    %2011 = vmatpush1.msra.mxu0 0.0
    %2012 = vmatprep.subr.mxu0 0.0
    %2013 = vmatpush1.msra.mxu0 0.0
    %2014 = vmatprep.subr.mxu0 0.0
    %2015 = vmatpush1.msra.mxu0 0.0
    %2016 = vmatprep.subr.mxu0 0.0
    %2017 = vmatpush1.msra.mxu0 0.0
    %2018 = vmatprep.subr.mxu0 0.0
    %2019 = vmatpush1.msra.mxu0 0.0
    %2020 = vmatprep.subr.mxu0 0.0
    %2021 = vmatpush1.msra.mxu0 0.0
    %2022 = vmatprep.subr.mxu0 0.0
    %2023 = vmatpush1.msra.mxu0 0.0
    %2024 = vmatprep.subr.mxu0 0.0
    %2025 = vmatpush1.msra.mxu0 0.0
    %2026 = vmatprep.subr.mxu0 0.0
    %2027 = vmatpush1.msra.mxu0 0.0
    %2028 = vmatprep.subr.mxu0 0.0
    %2029 = vmatpush1.msra.mxu0 0.0
    %2030 = vmatprep.subr.mxu0 0.0
    %2031 = vmatpush1.msra.mxu0 0.0
    %2032 = vmatprep.subr.mxu0 0.0
    %2033 = vmatpush1.msra.mxu0 0.0
    %2034 = vmatprep.subr.mxu0 0.0
    %2035 = vmatpush1.msra.mxu0 0.0
    %2036 = vmatprep.subr.mxu0 0.0
    %2037 = vmatpush1.msra.mxu0 0.0
    %2038 = vmatprep.subr.mxu0 0.0
    %2039 = vmatpush1.msra.mxu0 0.0
    %2040 = vmatprep.subr.mxu0 0.0
    %2041 = vmatpush1.msra.mxu0 0.0
    %2042 = vmatprep.subr.mxu0 0.0
    %2043 = vmatpush1.msra.mxu0 0.0
    %2044 = vmatprep.subr.mxu0 0.0
    %2045 = vmatpush1.msra.mxu0 0.0
    %2046 = vmatprep.subr.mxu0 0.0
    %2047 = vmatpush1.msra.mxu0 0.0
    %2048 = vmatprep.subr.mxu0 0.0
    %2049 = vmatpush1.msra.mxu0 0.0
    %2050 = vmatprep.subr.mxu0 0.0
    %2051 = vmatpush1.msra.mxu0 0.0
    %2052 = vmatprep.subr.mxu0 0.0
    %2053 = vmatpush1.msra.mxu0 0.0
    %2054 = vmatprep.subr.mxu0 0.0
    %2055 = vmatpush1.msra.mxu0 0.0
    %2056 = vmatprep.subr.mxu0 0.0
    %2057 = vmatpush1.msra.mxu0 0.0
    %2058 = vmatprep.subr.mxu0 0.0
    %2059 = vmatpush1.msra.mxu0 0.0
    %2060 = vmatprep.mubr.f32.mxu0 0.0
    %2061 = vmatmul.mubr.f32.gmra.mrb[0].mxu0 %v1994
    %v2062 = vpop.f32.mrb[0].mxu0
    %v2063 = vadd.f32 0.0, %v2062
    %v2064 = vpop.f32.mrb[0].mxu0
    %2065 = vdwg.mxu0
    %v2066 = vadd.f32 %v338, %v2063
    %v2067 = vxor.u32 %v2066, 2147483648
    %v2068 = vmul.f32 %v2067, 1.442695
    %v2069 = vpow.pop %v2068
    %v2070 = vadd.f32 %v2069, 1.0
    %v2071 = vrcp.pop %v2070
    %v2072 = vmul.f32 1.0, %v2071
    %v2073 = vtanh.pop %v2066
    %v2075 = vrot.slane %v1979, 2
    %v2077 = vmul.f32 %v2072, %v2075
    %2079 = vrot.lane.b32.xlu0 %v2073, 64
    %v2080 = vpop.permute.xlu0 %2079
    %v2082 = vmul.f32 %v2072, %v2080
    %2084 = vrot.lane.b32.xlu0 %v2082, 32
    %v2085 = vpop.permute.xlu0 %2084
    %v2087 = vadd.f32 %v2077, %v2085
    %v2088 = vtanh.pop %v2087
    %2090 = vrot.lane.b32.xlu0 %v2088, 64
    %v2091 = vpop.permute.xlu0 %2090
    %v2093 = vmul.f32 %v2072, %v2091
    %2095 = vrot.lane.b32.xlu0 %v2093, 64
    %v2096 = vpop.permute.xlu0 %2095
    %2098 = vst.msk [vmem:[#allocation2] sm:$0x3] %vm1657, %v2096
    %v2099 = vld [vmem:[#allocation2] sm:$0xff]
    %v2100 = vld [vmem:[#allocation2 + $0x8] sm:$0xff]
    %v2101 = vld [vmem:[%s8] sm:$0xff]
    %v2102 = vld [vmem:[%s8 + $0x8] sm:$0xff]
    %v2103 = vld [vmem:[%s8 + $0x10] sm:$0xff]
    %v2104 = vld [vmem:[%s8 + $0x18] sm:$0xff]
    %v2105 = vld [vmem:[%s8 + $0x20] sm:$0xff]
    %v2106 = vld [vmem:[%s8 + $0x28] sm:$0xff]
    %v2107 = vld [vmem:[%s8 + $0x30] sm:$0xff]
    %v2108 = vld [vmem:[%s8 + $0x38] sm:$0xff]
    %v2109 = vld [vmem:[%s9] sm:$0xff]
    %v2110 = vld [vmem:[%s9 + $0x8] sm:$0xff]
    %v2111 = vld [vmem:[%s9 + $0x10] sm:$0xff]
    %v2112 = vld [vmem:[%s9 + $0x18] sm:$0xff]
    %v2113 = vld [vmem:[%s10] sm:$0x1]
    %v2114 = vld [vmem:[%s11] sm:$0xff]
    %v2115 = vld [vmem:[%s11 + $0x8] sm:$0xff]
    %v2116 = vld [vmem:[%s11 + $0x10] sm:$0xff]
    %v2117 = vld [vmem:[%s11 + $0x18] sm:$0xff]
    %v2118 = vld [vmem:[%s11 + $0x20] sm:$0xff]
    %v2119 = vld [vmem:[%s11 + $0x28] sm:$0xff]
    %v2120 = vld [vmem:[%s11 + $0x30] sm:$0xff]
    %v2121 = vld [vmem:[%s11 + $0x38] sm:$0xff]
    %v2122 = vld [vmem:[%s12] sm:$0xff]
    %v2123 = vld [vmem:[%s12 + $0x8] sm:$0xff]
    %v2124 = vld [vmem:[%s12 + $0x10] sm:$0xff]
    %v2125 = vld [vmem:[%s12 + $0x18] sm:$0xff]
    %v2126 = vld [vmem:[%s13] sm:$0x1]
    %v2128 = vlaneseq
    %v2129 = vshrl.u32 %v2128, 7
    %v2130 = vsub.s32 0, %v2129
    %v2131 = vrot.slane %v2113, %v2130
    %vm2133 = vcmask 523264
    %v2135 = vsel %vm2133, %v2099, 0
    %v2138 = vsel %vm2133, %v2100, 0
    %2140 = vmatprep.subr.mxu0 0.0
    %2141 = vmatpush1.msra.mxu0 %v2101
    %2142 = vmatprep.subr.mxu0 0.0
    %2143 = vmatpush1.msra.mxu0 %v2102
    %2144 = vmatprep.subr.mxu0 0.0
    %2145 = vmatpush1.msra.mxu0 %v2103
    %2146 = vmatprep.subr.mxu0 0.0
    %2147 = vmatpush1.msra.mxu0 %v2104
    %2148 = vmatprep.subr.mxu0 0.0
    %2149 = vmatpush1.msra.mxu0 %v2105
    %2150 = vmatprep.subr.mxu0 0.0
    %2151 = vmatpush1.msra.mxu0 %v2106
    %2152 = vmatprep.subr.mxu0 0.0
    %2153 = vmatpush1.msra.mxu0 %v2107
    %2154 = vmatprep.subr.mxu0 0.0
    %2155 = vmatpush1.msra.mxu0 %v2108
    %2156 = vmatprep.subr.mxu0 0.0
    %2157 = vmatpush1.msra.mxu0 0.0
    %2158 = vmatprep.subr.mxu0 0.0
    %2159 = vmatpush1.msra.mxu0 0.0
    %2160 = vmatprep.subr.mxu0 0.0
    %2161 = vmatpush1.msra.mxu0 0.0
    %2162 = vmatprep.subr.mxu0 0.0
    %2163 = vmatpush1.msra.mxu0 0.0
    %2164 = vmatprep.subr.mxu0 0.0
    %2165 = vmatpush1.msra.mxu0 0.0
    %2166 = vmatprep.subr.mxu0 0.0
    %2167 = vmatpush1.msra.mxu0 0.0
    %2168 = vmatprep.subr.mxu0 0.0
    %2169 = vmatpush1.msra.mxu0 0.0
    %2170 = vmatprep.subr.mxu0 0.0
    %2171 = vmatpush1.msra.mxu0 0.0
    %2172 = vmatprep.subr.mxu0 0.0
    %2173 = vmatpush1.msra.mxu0 0.0
    %2174 = vmatprep.subr.mxu0 0.0
    %2175 = vmatpush1.msra.mxu0 0.0
    %2176 = vmatprep.subr.mxu0 0.0
    %2177 = vmatpush1.msra.mxu0 0.0
    %2178 = vmatprep.subr.mxu0 0.0
    %2179 = vmatpush1.msra.mxu0 0.0
    %2180 = vmatprep.subr.mxu0 0.0
    %2181 = vmatpush1.msra.mxu0 0.0
    %2182 = vmatprep.subr.mxu0 0.0
    %2183 = vmatpush1.msra.mxu0 0.0
    %2184 = vmatprep.subr.mxu0 0.0
    %2185 = vmatpush1.msra.mxu0 0.0
    %2186 = vmatprep.subr.mxu0 0.0
    %2187 = vmatpush1.msra.mxu0 0.0
    %2188 = vmatprep.subr.mxu0 0.0
    %2189 = vmatpush1.msra.mxu0 0.0
    %2190 = vmatprep.subr.mxu0 0.0
    %2191 = vmatpush1.msra.mxu0 0.0
    %2192 = vmatprep.subr.mxu0 0.0
    %2193 = vmatpush1.msra.mxu0 0.0
    %2194 = vmatprep.subr.mxu0 0.0
    %2195 = vmatpush1.msra.mxu0 0.0
    %2196 = vmatprep.subr.mxu0 0.0
    %2197 = vmatpush1.msra.mxu0 0.0
    %2198 = vmatprep.subr.mxu0 0.0
    %2199 = vmatpush1.msra.mxu0 0.0
    %2200 = vmatprep.subr.mxu0 0.0
    %2201 = vmatpush1.msra.mxu0 0.0
    %2202 = vmatprep.subr.mxu0 0.0
    %2203 = vmatpush1.msra.mxu0 0.0
    %2204 = vmatprep.mubr.f32.mxu0 0.0
    %2205 = vmatmul.mubr.f32.gmra.mrb[0].mxu0 %v2135
    %v2206 = vpop.f32.mrb[0].mxu0
    %v2207 = vadd.f32 %v2131, %v2206
    %v2208 = vpop.f32.mrb[0].mxu0
    %2209 = vmatprep.mubr.f32.mxu0 0.0
    %2210 = vmatmul.mubr.f32.gmra.mrb[0].mxu0 %v2138
    %v2211 = vpop.f32.mrb[0].mxu0
    %v2212 = vadd.f32 %v2131, %v2211
    %v2213 = vpop.f32.mrb[0].mxu0
    %2214 = vdwg.mxu0
    %v2216 = vlaneseq
    %v2217 = vshrl.u32 %v2216, 7
    %v2218 = vsub.s32 0, %v2217
    %v2219 = vrot.slane %v2126, %v2218
    %2221 = vmatprep.subr.mxu0 0.0
    %2222 = vmatpush1.msra.mxu0 %v2114
    %2223 = vmatprep.subr.mxu0 0.0
    %2224 = vmatpush1.msra.mxu0 %v2115
    %2225 = vmatprep.subr.mxu0 0.0
    %2226 = vmatpush1.msra.mxu0 %v2116
    %2227 = vmatprep.subr.mxu0 0.0
    %2228 = vmatpush1.msra.mxu0 %v2117
    %2229 = vmatprep.subr.mxu0 0.0
    %2230 = vmatpush1.msra.mxu0 %v2118
    %2231 = vmatprep.subr.mxu0 0.0
    %2232 = vmatpush1.msra.mxu0 %v2119
    %2233 = vmatprep.subr.mxu0 0.0
    %2234 = vmatpush1.msra.mxu0 %v2120
    %2235 = vmatprep.subr.mxu0 0.0
    %2236 = vmatpush1.msra.mxu0 %v2121
    %2237 = vmatprep.subr.mxu0 0.0
    %2238 = vmatpush1.msra.mxu0 0.0
    %2239 = vmatprep.subr.mxu0 0.0
    %2240 = vmatpush1.msra.mxu0 0.0
    %2241 = vmatprep.subr.mxu0 0.0
    %2242 = vmatpush1.msra.mxu0 0.0
    %2243 = vmatprep.subr.mxu0 0.0
    %2244 = vmatpush1.msra.mxu0 0.0
    %2245 = vmatprep.subr.mxu0 0.0
    %2246 = vmatpush1.msra.mxu0 0.0
    %2247 = vmatprep.subr.mxu0 0.0
    %2248 = vmatpush1.msra.mxu0 0.0
    %2249 = vmatprep.subr.mxu0 0.0
    %2250 = vmatpush1.msra.mxu0 0.0
    %2251 = vmatprep.subr.mxu0 0.0
    %2252 = vmatpush1.msra.mxu0 0.0
    %2253 = vmatprep.subr.mxu0 0.0
    %2254 = vmatpush1.msra.mxu0 0.0
    %2255 = vmatprep.subr.mxu0 0.0
    %2256 = vmatpush1.msra.mxu0 0.0
    %2257 = vmatprep.subr.mxu0 0.0
    %2258 = vmatpush1.msra.mxu0 0.0
    %2259 = vmatprep.subr.mxu0 0.0
    %2260 = vmatpush1.msra.mxu0 0.0
    %2261 = vmatprep.subr.mxu0 0.0
    %2262 = vmatpush1.msra.mxu0 0.0
    %2263 = vmatprep.subr.mxu0 0.0
    %2264 = vmatpush1.msra.mxu0 0.0
    %2265 = vmatprep.subr.mxu0 0.0
    %2266 = vmatpush1.msra.mxu0 0.0
    %2267 = vmatprep.subr.mxu0 0.0
    %2268 = vmatpush1.msra.mxu0 0.0
    %2269 = vmatprep.subr.mxu0 0.0
    %2270 = vmatpush1.msra.mxu0 0.0
    %2271 = vmatprep.subr.mxu0 0.0
    %2272 = vmatpush1.msra.mxu0 0.0
    %2273 = vmatprep.subr.mxu0 0.0
    %2274 = vmatpush1.msra.mxu0 0.0
    %2275 = vmatprep.subr.mxu0 0.0
    %2276 = vmatpush1.msra.mxu0 0.0
    %2277 = vmatprep.subr.mxu0 0.0
    %2278 = vmatpush1.msra.mxu0 0.0
    %2279 = vmatprep.subr.mxu0 0.0
    %2280 = vmatpush1.msra.mxu0 0.0
    %2281 = vmatprep.subr.mxu0 0.0
    %2282 = vmatpush1.msra.mxu0 0.0
    %2283 = vmatprep.subr.mxu0 0.0
    %2284 = vmatpush1.msra.mxu0 0.0
    %2285 = vmatprep.mubr.f32.mxu0 0.0
    %2286 = vmatmul.mubr.f32.gmra.mrb[0].mxu0 %v2135
    %v2287 = vpop.f32.mrb[0].mxu0
    %v2288 = vadd.f32 %v2219, %v2287
    %v2289 = vpop.f32.mrb[0].mxu0
    %2290 = vmatprep.mubr.f32.mxu0 0.0
    %2291 = vmatmul.mubr.f32.gmra.mrb[0].mxu0 %v2138
    %v2292 = vpop.f32.mrb[0].mxu0
    %v2293 = vadd.f32 %v2219, %v2292
    %v2294 = vpop.f32.mrb[0].mxu0
    %2295 = vdwg.mxu0
    %2296 = vmatprep.subr.mxu0 0.0
    %2297 = vmatpush1.msra.mxu0 %v2109
    %2298 = vmatprep.subr.mxu0 0.0
    %2299 = vmatpush1.msra.mxu0 %v2110
    %2300 = vmatprep.subr.mxu0 0.0
    %2301 = vmatpush1.msra.mxu0 %v2111
    %2302 = vmatprep.subr.mxu0 0.0
    %2303 = vmatpush1.msra.mxu0 %v2112
    %2304 = vmatprep.subr.mxu0 0.0
    %2305 = vmatpush1.msra.mxu0 0.0
    %2306 = vmatprep.subr.mxu0 0.0
    %2307 = vmatpush1.msra.mxu0 0.0
    %2308 = vmatprep.subr.mxu0 0.0
    %2309 = vmatpush1.msra.mxu0 0.0
    %2310 = vmatprep.subr.mxu0 0.0
    %2311 = vmatpush1.msra.mxu0 0.0
    %2312 = vmatprep.subr.mxu0 0.0
    %2313 = vmatpush1.msra.mxu0 0.0
    %2314 = vmatprep.subr.mxu0 0.0
    %2315 = vmatpush1.msra.mxu0 0.0
    %2316 = vmatprep.subr.mxu0 0.0
    %2317 = vmatpush1.msra.mxu0 0.0
    %2318 = vmatprep.subr.mxu0 0.0
    %2319 = vmatpush1.msra.mxu0 0.0
    %2320 = vmatprep.subr.mxu0 0.0
    %2321 = vmatpush1.msra.mxu0 0.0
    %2322 = vmatprep.subr.mxu0 0.0
    %2323 = vmatpush1.msra.mxu0 0.0
    %2324 = vmatprep.subr.mxu0 0.0
    %2325 = vmatpush1.msra.mxu0 0.0
    %2326 = vmatprep.subr.mxu0 0.0
    %2327 = vmatpush1.msra.mxu0 0.0
    %2328 = vmatprep.subr.mxu0 0.0
    %2329 = vmatpush1.msra.mxu0 0.0
    %2330 = vmatprep.subr.mxu0 0.0
    %2331 = vmatpush1.msra.mxu0 0.0
    %2332 = vmatprep.subr.mxu0 0.0
    %2333 = vmatpush1.msra.mxu0 0.0
    %2334 = vmatprep.subr.mxu0 0.0
    %2335 = vmatpush1.msra.mxu0 0.0
    %2336 = vmatprep.subr.mxu0 0.0
    %2337 = vmatpush1.msra.mxu0 0.0
    %2338 = vmatprep.subr.mxu0 0.0
    %2339 = vmatpush1.msra.mxu0 0.0
    %2340 = vmatprep.subr.mxu0 0.0
    %2341 = vmatpush1.msra.mxu0 0.0
    %2342 = vmatprep.subr.mxu0 0.0
    %2343 = vmatpush1.msra.mxu0 0.0
    %2344 = vmatprep.subr.mxu0 0.0
    %2345 = vmatpush1.msra.mxu0 0.0
    %2346 = vmatprep.subr.mxu0 0.0
    %2347 = vmatpush1.msra.mxu0 0.0
    %2348 = vmatprep.subr.mxu0 0.0
    %2349 = vmatpush1.msra.mxu0 0.0
    %2350 = vmatprep.subr.mxu0 0.0
    %2351 = vmatpush1.msra.mxu0 0.0
    %2352 = vmatprep.subr.mxu0 0.0
    %2353 = vmatpush1.msra.mxu0 0.0
    %2354 = vmatprep.subr.mxu0 0.0
    %2355 = vmatpush1.msra.mxu0 0.0
    %2356 = vmatprep.subr.mxu0 0.0
    %2357 = vmatpush1.msra.mxu0 0.0
    %2358 = vmatprep.subr.mxu0 0.0
    %2359 = vmatpush1.msra.mxu0 0.0
    %2360 = vmatprep.mubr.f32.mxu0 0.0
    %2361 = vmatmul.mubr.f32.gmra.mrb[0].mxu0 %v348
    %v2362 = vpop.f32.mrb[0].mxu0
    %v2363 = vadd.f32 0.0, %v2362
    %v2364 = vpop.f32.mrb[0].mxu0
    %2365 = vdwg.mxu0
    %v2366 = vadd.f32 %v2207, %v2363
    %v2367 = vxor.u32 %v2366, 2147483648
    %v2368 = vmul.f32 %v2367, 1.442695
    %v2369 = vpow.pop %v2368
    %v2370 = vadd.f32 %v2369, 1.0
    %v2371 = vrcp.pop %v2370
    %v2372 = vmul.f32 1.0, %v2371
    %v2373 = vtanh.pop %v2366
    %v2374 = vmul.f32 %v2372, 0.0
    %2376 = vrot.lane.b32.xlu0 %v2373, 64
    %v2377 = vpop.permute.xlu0 %2376
    %v2379 = vmul.f32 %v2372, %v2377
    %2381 = vrot.lane.b32.xlu0 %v2379, 32
    %v2382 = vpop.permute.xlu0 %2381
    %v2384 = vadd.f32 %v2374, %v2382
    %v2385 = vtanh.pop %v2384
    %2387 = vrot.lane.b32.xlu0 %v2385, 64
    %v2388 = vpop.permute.xlu0 %2387
    %v2390 = vmul.f32 %v2372, %v2388
    %v2393 = vunpack.c.l.s4 1983009808
    %v2394 = vunpack.c.0.s8 %v2393
    %v2395 = vlaneseq
    %v2396 = vshrl.u32 %v2395, 7
    %v2397 = vsub.s32 %v2394, %v2396
    %v2398 = vrot.slane %v2390, %v2397
    %2399 = vrot.lane.b32.xlu0 %v2398, 32
    %v2400 = vpop.permute.xlu0 %2399
    %vm2402 = vcmask 253952
    %2403 = vst.msk [vmem:[#allocation3] sm:$0x1] %vm2402, %v2400
    %v2404 = vrot.slane %v2398, 7
    %v2405 = vrot.slane %v2404, 2
    %2406 = vrot.lane.b32.xlu0 %v2405, 96
    %v2407 = vpop.permute.xlu0 %2406
    %vm2409 = vcmask 778752
    %2410 = vst.msk [vmem:[#allocation3] sm:$0x1] %vm2409, %v2407
    %2411 = vrot.lane.b32.xlu0 %v2390, 32
    %v2412 = vpop.permute.xlu0 %2411
    %v2413 = vsel %vm346, %v2412, 0
    %2415 = vmatprep.subr.mxu0 0.0
    %2416 = vmatpush1.msra.mxu0 %v2109
    %2417 = vmatprep.subr.mxu0 0.0
    %2418 = vmatpush1.msra.mxu0 %v2110
    %2419 = vmatprep.subr.mxu0 0.0
    %2420 = vmatpush1.msra.mxu0 %v2111
    %2421 = vmatprep.subr.mxu0 0.0
    %2422 = vmatpush1.msra.mxu0 %v2112
    %2423 = vmatprep.subr.mxu0 0.0
    %2424 = vmatpush1.msra.mxu0 0.0
    %2425 = vmatprep.subr.mxu0 0.0
    %2426 = vmatpush1.msra.mxu0 0.0
    %2427 = vmatprep.subr.mxu0 0.0
    %2428 = vmatpush1.msra.mxu0 0.0
    %2429 = vmatprep.subr.mxu0 0.0
    %2430 = vmatpush1.msra.mxu0 0.0
    %2431 = vmatprep.subr.mxu0 0.0
    %2432 = vmatpush1.msra.mxu0 0.0
    %2433 = vmatprep.subr.mxu0 0.0
    %2434 = vmatpush1.msra.mxu0 0.0
    %2435 = vmatprep.subr.mxu0 0.0
    %2436 = vmatpush1.msra.mxu0 0.0
    %2437 = vmatprep.subr.mxu0 0.0
    %2438 = vmatpush1.msra.mxu0 0.0
    %2439 = vmatprep.subr.mxu0 0.0
    %2440 = vmatpush1.msra.mxu0 0.0
    %2441 = vmatprep.subr.mxu0 0.0
    %2442 = vmatpush1.msra.mxu0 0.0
    %2443 = vmatprep.subr.mxu0 0.0
    %2444 = vmatpush1.msra.mxu0 0.0
    %2445 = vmatprep.subr.mxu0 0.0
    %2446 = vmatpush1.msra.mxu0 0.0
    %2447 = vmatprep.subr.mxu0 0.0
    %2448 = vmatpush1.msra.mxu0 0.0
    %2449 = vmatprep.subr.mxu0 0.0
    %2450 = vmatpush1.msra.mxu0 0.0
    %2451 = vmatprep.subr.mxu0 0.0
    %2452 = vmatpush1.msra.mxu0 0.0
    %2453 = vmatprep.subr.mxu0 0.0
    %2454 = vmatpush1.msra.mxu0 0.0
    %2455 = vmatprep.subr.mxu0 0.0
    %2456 = vmatpush1.msra.mxu0 0.0
    %2457 = vmatprep.subr.mxu0 0.0
    %2458 = vmatpush1.msra.mxu0 0.0
    %2459 = vmatprep.subr.mxu0 0.0
    %2460 = vmatpush1.msra.mxu0 0.0
    %2461 = vmatprep.subr.mxu0 0.0
    %2462 = vmatpush1.msra.mxu0 0.0
    %2463 = vmatprep.subr.mxu0 0.0
    %2464 = vmatpush1.msra.mxu0 0.0
    %2465 = vmatprep.subr.mxu0 0.0
    %2466 = vmatpush1.msra.mxu0 0.0
    %2467 = vmatprep.subr.mxu0 0.0
    %2468 = vmatpush1.msra.mxu0 0.0
    %2469 = vmatprep.subr.mxu0 0.0
    %2470 = vmatpush1.msra.mxu0 0.0
    %2471 = vmatprep.subr.mxu0 0.0
    %2472 = vmatpush1.msra.mxu0 0.0
    %2473 = vmatprep.subr.mxu0 0.0
    %2474 = vmatpush1.msra.mxu0 0.0
    %2475 = vmatprep.subr.mxu0 0.0
    %2476 = vmatpush1.msra.mxu0 0.0
    %2477 = vmatprep.subr.mxu0 0.0
    %2478 = vmatpush1.msra.mxu0 0.0
    %2479 = vmatprep.mubr.f32.mxu0 0.0
    %2480 = vmatmul.mubr.f32.gmra.mrb[0].mxu0 %v2413
    %v2481 = vpop.f32.mrb[0].mxu0
    %v2482 = vadd.f32 0.0, %v2481
    %v2483 = vpop.f32.mrb[0].mxu0
    %2484 = vdwg.mxu0
    %v2486 = vrot.slane %v2482, 6
    %v2488 = vadd.f32 %v2207, %v2486
    %v2489 = vxor.u32 %v2488, 2147483648
    %v2490 = vmul.f32 %v2489, 1.442695
    %v2491 = vpow.pop %v2490
    %v2492 = vadd.f32 %v2491, 1.0
    %v2493 = vrcp.pop %v2492
    %v2494 = vmul.f32 1.0, %v2493
    %v2495 = vtanh.pop %v2488
    %v2497 = vrot.slane %v2384, 6
    %v2499 = vmul.f32 %v2494, %v2497
    %2501 = vrot.lane.b32.xlu0 %v2495, 64
    %v2502 = vpop.permute.xlu0 %2501
    %v2504 = vmul.f32 %v2494, %v2502
    %2506 = vrot.lane.b32.xlu0 %v2504, 32
    %v2507 = vpop.permute.xlu0 %2506
    %v2509 = vadd.f32 %v2499, %v2507
    %v2510 = vtanh.pop %v2509
    %2512 = vrot.lane.b32.xlu0 %v2510, 64
    %v2513 = vpop.permute.xlu0 %2512
    %v2515 = vmul.f32 %v2494, %v2513
    %v2518 = vunpack.c.l.s4 1983009808
    %v2519 = vunpack.c.0.s8 %v2518
    %v2520 = vlaneseq
    %v2521 = vshrl.u32 %v2520, 7
    %v2522 = vsub.s32 %v2519, %v2521
    %v2523 = vrot.slane %v2515, %v2522
    %v2524 = vcombine.high %v2523, %v2523
    %2525 = vrot.lane.b32.xlu0 %v2524, 32
    %v2526 = vpop.permute.xlu0 %2525
    %2528 = vst.msk [vmem:[#allocation3 + $0x2] sm:$0x1] %vm2402, %v2526
    %v2529 = vrot.slane %v2524, 7
    %v2530 = vrot.slane %v2529, 2
    %2531 = vrot.lane.b32.xlu0 %v2530, 96
    %v2532 = vpop.permute.xlu0 %2531
    %2534 = vst.msk [vmem:[#allocation3 + $0x2] sm:$0x1] %vm2409, %v2532
    %v2535 = vrot.slane %v2515, 2
    %2536 = vrot.lane.b32.xlu0 %v2535, 32
    %v2537 = vpop.permute.xlu0 %2536
    %v2538 = vsel %vm346, %v2537, 0
    %2540 = vmatprep.subr.mxu0 0.0
    %2541 = vmatpush1.msra.mxu0 %v2109
    %2542 = vmatprep.subr.mxu0 0.0
    %2543 = vmatpush1.msra.mxu0 %v2110
    %2544 = vmatprep.subr.mxu0 0.0
    %2545 = vmatpush1.msra.mxu0 %v2111
    %2546 = vmatprep.subr.mxu0 0.0
    %2547 = vmatpush1.msra.mxu0 %v2112
    %2548 = vmatprep.subr.mxu0 0.0
    %2549 = vmatpush1.msra.mxu0 0.0
    %2550 = vmatprep.subr.mxu0 0.0
    %2551 = vmatpush1.msra.mxu0 0.0
    %2552 = vmatprep.subr.mxu0 0.0
    %2553 = vmatpush1.msra.mxu0 0.0
    %2554 = vmatprep.subr.mxu0 0.0
    %2555 = vmatpush1.msra.mxu0 0.0
    %2556 = vmatprep.subr.mxu0 0.0
    %2557 = vmatpush1.msra.mxu0 0.0
    %2558 = vmatprep.subr.mxu0 0.0
    %2559 = vmatpush1.msra.mxu0 0.0
    %2560 = vmatprep.subr.mxu0 0.0
    %2561 = vmatpush1.msra.mxu0 0.0
    %2562 = vmatprep.subr.mxu0 0.0
    %2563 = vmatpush1.msra.mxu0 0.0
    %2564 = vmatprep.subr.mxu0 0.0
    %2565 = vmatpush1.msra.mxu0 0.0
    %2566 = vmatprep.subr.mxu0 0.0
    %2567 = vmatpush1.msra.mxu0 0.0
    %2568 = vmatprep.subr.mxu0 0.0
    %2569 = vmatpush1.msra.mxu0 0.0
    %2570 = vmatprep.subr.mxu0 0.0
    %2571 = vmatpush1.msra.mxu0 0.0
    %2572 = vmatprep.subr.mxu0 0.0
    %2573 = vmatpush1.msra.mxu0 0.0
    %2574 = vmatprep.subr.mxu0 0.0
    %2575 = vmatpush1.msra.mxu0 0.0
    %2576 = vmatprep.subr.mxu0 0.0
    %2577 = vmatpush1.msra.mxu0 0.0
    %2578 = vmatprep.subr.mxu0 0.0
    %2579 = vmatpush1.msra.mxu0 0.0
    %2580 = vmatprep.subr.mxu0 0.0
    %2581 = vmatpush1.msra.mxu0 0.0
    %2582 = vmatprep.subr.mxu0 0.0
    %2583 = vmatpush1.msra.mxu0 0.0
    %2584 = vmatprep.subr.mxu0 0.0
    %2585 = vmatpush1.msra.mxu0 0.0
    %2586 = vmatprep.subr.mxu0 0.0
    %2587 = vmatpush1.msra.mxu0 0.0
    %2588 = vmatprep.subr.mxu0 0.0
    %2589 = vmatpush1.msra.mxu0 0.0
    %2590 = vmatprep.subr.mxu0 0.0
    %2591 = vmatpush1.msra.mxu0 0.0
    %2592 = vmatprep.subr.mxu0 0.0
    %2593 = vmatpush1.msra.mxu0 0.0
    %2594 = vmatprep.subr.mxu0 0.0
    %2595 = vmatpush1.msra.mxu0 0.0
    %2596 = vmatprep.subr.mxu0 0.0
    %2597 = vmatpush1.msra.mxu0 0.0
    %2598 = vmatprep.subr.mxu0 0.0
    %2599 = vmatpush1.msra.mxu0 0.0
    %2600 = vmatprep.subr.mxu0 0.0
    %2601 = vmatpush1.msra.mxu0 0.0
    %2602 = vmatprep.subr.mxu0 0.0
    %2603 = vmatpush1.msra.mxu0 0.0
    %2604 = vmatprep.mubr.f32.mxu0 0.0
    %2605 = vmatmul.mubr.f32.gmra.mrb[0].mxu0 %v2538
    %v2606 = vpop.f32.mrb[0].mxu0
    %v2607 = vadd.f32 0.0, %v2606
    %v2608 = vpop.f32.mrb[0].mxu0
    %2609 = vdwg.mxu0
    %v2611 = vrot.slane %v2607, 4
    %v2613 = vadd.f32 %v2207, %v2611
    %v2614 = vxor.u32 %v2613, 2147483648
    %v2615 = vmul.f32 %v2614, 1.442695
    %v2616 = vpow.pop %v2615
    %v2617 = vadd.f32 %v2616, 1.0
    %v2618 = vrcp.pop %v2617
    %v2619 = vmul.f32 1.0, %v2618
    %v2620 = vtanh.pop %v2613
    %v2622 = vrot.slane %v2509, 6
    %v2624 = vmul.f32 %v2619, %v2622
    %2626 = vrot.lane.b32.xlu0 %v2620, 64
    %v2627 = vpop.permute.xlu0 %2626
    %v2629 = vmul.f32 %v2619, %v2627
    %2631 = vrot.lane.b32.xlu0 %v2629, 32
    %v2632 = vpop.permute.xlu0 %2631
    %v2634 = vadd.f32 %v2624, %v2632
    %v2635 = vtanh.pop %v2634
    %2637 = vrot.lane.b32.xlu0 %v2635, 64
    %v2638 = vpop.permute.xlu0 %2637
    %v2640 = vmul.f32 %v2619, %v2638
    %v2642 = vcombine.high %v2640, %v2640
    %v2644 = vunpack.c.l.s4 1983009808
    %v2645 = vunpack.c.0.s8 %v2644
    %v2646 = vlaneseq
    %v2647 = vshrl.u32 %v2646, 7
    %v2648 = vsub.s32 %v2645, %v2647
    %v2649 = vrot.slane %v2642, %v2648
    %2650 = vrot.lane.b32.xlu0 %v2649, 32
    %v2651 = vpop.permute.xlu0 %2650
    %2653 = vst.msk [vmem:[#allocation3 + $0x4] sm:$0x1] %vm2402, %v2651
    %v2654 = vrot.slane %v2649, 7
    %v2655 = vrot.slane %v2654, 2
    %2656 = vrot.lane.b32.xlu0 %v2655, 96
    %v2657 = vpop.permute.xlu0 %2656
    %2659 = vst.msk [vmem:[#allocation3 + $0x4] sm:$0x1] %vm2409, %v2657
    %v2660 = vrot.slane %v2640, 4
    %2661 = vrot.lane.b32.xlu0 %v2660, 32
    %v2662 = vpop.permute.xlu0 %2661
    %v2663 = vsel %vm346, %v2662, 0
    %2665 = vmatprep.subr.mxu0 0.0
    %2666 = vmatpush1.msra.mxu0 %v2109
    %2667 = vmatprep.subr.mxu0 0.0
    %2668 = vmatpush1.msra.mxu0 %v2110
    %2669 = vmatprep.subr.mxu0 0.0
    %2670 = vmatpush1.msra.mxu0 %v2111
    %2671 = vmatprep.subr.mxu0 0.0
    %2672 = vmatpush1.msra.mxu0 %v2112
    %2673 = vmatprep.subr.mxu0 0.0
    %2674 = vmatpush1.msra.mxu0 0.0
    %2675 = vmatprep.subr.mxu0 0.0
    %2676 = vmatpush1.msra.mxu0 0.0
    %2677 = vmatprep.subr.mxu0 0.0
    %2678 = vmatpush1.msra.mxu0 0.0
    %2679 = vmatprep.subr.mxu0 0.0
    %2680 = vmatpush1.msra.mxu0 0.0
    %2681 = vmatprep.subr.mxu0 0.0
    %2682 = vmatpush1.msra.mxu0 0.0
    %2683 = vmatprep.subr.mxu0 0.0
    %2684 = vmatpush1.msra.mxu0 0.0
    %2685 = vmatprep.subr.mxu0 0.0
    %2686 = vmatpush1.msra.mxu0 0.0
    %2687 = vmatprep.subr.mxu0 0.0
    %2688 = vmatpush1.msra.mxu0 0.0
    %2689 = vmatprep.subr.mxu0 0.0
    %2690 = vmatpush1.msra.mxu0 0.0
    %2691 = vmatprep.subr.mxu0 0.0
    %2692 = vmatpush1.msra.mxu0 0.0
    %2693 = vmatprep.subr.mxu0 0.0
    %2694 = vmatpush1.msra.mxu0 0.0
    %2695 = vmatprep.subr.mxu0 0.0
    %2696 = vmatpush1.msra.mxu0 0.0
    %2697 = vmatprep.subr.mxu0 0.0
    %2698 = vmatpush1.msra.mxu0 0.0
    %2699 = vmatprep.subr.mxu0 0.0
    %2700 = vmatpush1.msra.mxu0 0.0
    %2701 = vmatprep.subr.mxu0 0.0
    %2702 = vmatpush1.msra.mxu0 0.0
    %2703 = vmatprep.subr.mxu0 0.0
    %2704 = vmatpush1.msra.mxu0 0.0
    %2705 = vmatprep.subr.mxu0 0.0
    %2706 = vmatpush1.msra.mxu0 0.0
    %2707 = vmatprep.subr.mxu0 0.0
    %2708 = vmatpush1.msra.mxu0 0.0
    %2709 = vmatprep.subr.mxu0 0.0
    %2710 = vmatpush1.msra.mxu0 0.0
    %2711 = vmatprep.subr.mxu0 0.0
    %2712 = vmatpush1.msra.mxu0 0.0
    %2713 = vmatprep.subr.mxu0 0.0
    %2714 = vmatpush1.msra.mxu0 0.0
    %2715 = vmatprep.subr.mxu0 0.0
    %2716 = vmatpush1.msra.mxu0 0.0
    %2717 = vmatprep.subr.mxu0 0.0
    %2718 = vmatpush1.msra.mxu0 0.0
    %2719 = vmatprep.subr.mxu0 0.0
    %2720 = vmatpush1.msra.mxu0 0.0
    %2721 = vmatprep.subr.mxu0 0.0
    %2722 = vmatpush1.msra.mxu0 0.0
    %2723 = vmatprep.subr.mxu0 0.0
    %2724 = vmatpush1.msra.mxu0 0.0
    %2725 = vmatprep.subr.mxu0 0.0
    %2726 = vmatpush1.msra.mxu0 0.0
    %2727 = vmatprep.subr.mxu0 0.0
    %2728 = vmatpush1.msra.mxu0 0.0
    %2729 = vmatprep.mubr.f32.mxu0 0.0
    %2730 = vmatmul.mubr.f32.gmra.mrb[0].mxu0 %v2663
    %v2731 = vpop.f32.mrb[0].mxu0
    %v2732 = vadd.f32 0.0, %v2731
    %v2733 = vpop.f32.mrb[0].mxu0
    %2734 = vdwg.mxu0
    %v2736 = vrot.slane %v2732, 2
    %v2738 = vadd.f32 %v2207, %v2736
    %v2739 = vxor.u32 %v2738, 2147483648
    %v2740 = vmul.f32 %v2739, 1.442695
    %v2741 = vpow.pop %v2740
    %v2742 = vadd.f32 %v2741, 1.0
    %v2743 = vrcp.pop %v2742
    %v2744 = vmul.f32 1.0, %v2743
    %v2745 = vtanh.pop %v2738
    %v2747 = vrot.slane %v2634, 6
    %v2749 = vmul.f32 %v2744, %v2747
    %2751 = vrot.lane.b32.xlu0 %v2745, 64
    %v2752 = vpop.permute.xlu0 %2751
    %v2754 = vmul.f32 %v2744, %v2752
    %2756 = vrot.lane.b32.xlu0 %v2754, 32
    %v2757 = vpop.permute.xlu0 %2756
    %v2759 = vadd.f32 %v2749, %v2757
    %v2760 = vtanh.pop %v2759
    %2762 = vrot.lane.b32.xlu0 %v2760, 64
    %v2763 = vpop.permute.xlu0 %2762
    %v2765 = vmul.f32 %v2744, %v2763
    %v2767 = vcombine.high %v2765, %v2765
    %v2769 = vunpack.c.l.s4 1983009808
    %v2770 = vunpack.c.0.s8 %v2769
    %v2771 = vlaneseq
    %v2772 = vshrl.u32 %v2771, 7
    %v2773 = vsub.s32 %v2770, %v2772
    %v2774 = vrot.slane %v2767, %v2773
    %v2775 = vcombine.high %v2774, %v2774
    %2776 = vrot.lane.b32.xlu0 %v2775, 32
    %v2777 = vpop.permute.xlu0 %2776
    %2779 = vst.msk [vmem:[#allocation3 + $0x6] sm:$0x1] %vm2402, %v2777
    %v2780 = vrot.slane %v2775, 7
    %v2781 = vrot.slane %v2780, 2
    %2782 = vrot.lane.b32.xlu0 %v2781, 96
    %v2783 = vpop.permute.xlu0 %2782
    %2785 = vst.msk [vmem:[#allocation3 + $0x6] sm:$0x1] %vm2409, %v2783
    %v2786 = vrot.slane %v2765, 6
    %2787 = vrot.lane.b32.xlu0 %v2786, 32
    %v2788 = vpop.permute.xlu0 %2787
    %v2789 = vsel %vm346, %v2788, 0
    %2791 = vmatprep.subr.mxu0 0.0
    %2792 = vmatpush1.msra.mxu0 %v2109
    %2793 = vmatprep.subr.mxu0 0.0
    %2794 = vmatpush1.msra.mxu0 %v2110
    %2795 = vmatprep.subr.mxu0 0.0
    %2796 = vmatpush1.msra.mxu0 %v2111
    %2797 = vmatprep.subr.mxu0 0.0
    %2798 = vmatpush1.msra.mxu0 %v2112
    %2799 = vmatprep.subr.mxu0 0.0
    %2800 = vmatpush1.msra.mxu0 0.0
    %2801 = vmatprep.subr.mxu0 0.0
    %2802 = vmatpush1.msra.mxu0 0.0
    %2803 = vmatprep.subr.mxu0 0.0
    %2804 = vmatpush1.msra.mxu0 0.0
    %2805 = vmatprep.subr.mxu0 0.0
    %2806 = vmatpush1.msra.mxu0 0.0
    %2807 = vmatprep.subr.mxu0 0.0
    %2808 = vmatpush1.msra.mxu0 0.0
    %2809 = vmatprep.subr.mxu0 0.0
    %2810 = vmatpush1.msra.mxu0 0.0
    %2811 = vmatprep.subr.mxu0 0.0
    %2812 = vmatpush1.msra.mxu0 0.0
    %2813 = vmatprep.subr.mxu0 0.0
    %2814 = vmatpush1.msra.mxu0 0.0
    %2815 = vmatprep.subr.mxu0 0.0
    %2816 = vmatpush1.msra.mxu0 0.0
    %2817 = vmatprep.subr.mxu0 0.0
    %2818 = vmatpush1.msra.mxu0 0.0
    %2819 = vmatprep.subr.mxu0 0.0
    %2820 = vmatpush1.msra.mxu0 0.0
    %2821 = vmatprep.subr.mxu0 0.0
    %2822 = vmatpush1.msra.mxu0 0.0
    %2823 = vmatprep.subr.mxu0 0.0
    %2824 = vmatpush1.msra.mxu0 0.0
    %2825 = vmatprep.subr.mxu0 0.0
    %2826 = vmatpush1.msra.mxu0 0.0
    %2827 = vmatprep.subr.mxu0 0.0
    %2828 = vmatpush1.msra.mxu0 0.0
    %2829 = vmatprep.subr.mxu0 0.0
    %2830 = vmatpush1.msra.mxu0 0.0
    %2831 = vmatprep.subr.mxu0 0.0
    %2832 = vmatpush1.msra.mxu0 0.0
    %2833 = vmatprep.subr.mxu0 0.0
    %2834 = vmatpush1.msra.mxu0 0.0
    %2835 = vmatprep.subr.mxu0 0.0
    %2836 = vmatpush1.msra.mxu0 0.0
    %2837 = vmatprep.subr.mxu0 0.0
    %2838 = vmatpush1.msra.mxu0 0.0
    %2839 = vmatprep.subr.mxu0 0.0
    %2840 = vmatpush1.msra.mxu0 0.0
    %2841 = vmatprep.subr.mxu0 0.0
    %2842 = vmatpush1.msra.mxu0 0.0
    %2843 = vmatprep.subr.mxu0 0.0
    %2844 = vmatpush1.msra.mxu0 0.0
    %2845 = vmatprep.subr.mxu0 0.0
    %2846 = vmatpush1.msra.mxu0 0.0
    %2847 = vmatprep.subr.mxu0 0.0
    %2848 = vmatpush1.msra.mxu0 0.0
    %2849 = vmatprep.subr.mxu0 0.0
    %2850 = vmatpush1.msra.mxu0 0.0
    %2851 = vmatprep.subr.mxu0 0.0
    %2852 = vmatpush1.msra.mxu0 0.0
    %2853 = vmatprep.subr.mxu0 0.0
    %2854 = vmatpush1.msra.mxu0 0.0
    %2855 = vmatprep.mubr.f32.mxu0 0.0
    %2856 = vmatmul.mubr.f32.gmra.mrb[0].mxu0 %v2789
    %v2857 = vpop.f32.mrb[0].mxu0
    %v2858 = vadd.f32 0.0, %v2857
    %v2859 = vpop.f32.mrb[0].mxu0
    %2860 = vdwg.mxu0
    %v2861 = vadd.f32 %v2212, %v2858
    %v2862 = vxor.u32 %v2861, 2147483648
    %v2863 = vmul.f32 %v2862, 1.442695
    %v2864 = vpow.pop %v2863
    %v2865 = vadd.f32 %v2864, 1.0
    %v2866 = vrcp.pop %v2865
    %v2867 = vmul.f32 1.0, %v2866
    %v2868 = vtanh.pop %v2861
    %v2870 = vrot.slane %v2759, 6
    %v2872 = vmul.f32 %v2867, %v2870
    %2874 = vrot.lane.b32.xlu0 %v2868, 64
    %v2875 = vpop.permute.xlu0 %2874
    %v2877 = vmul.f32 %v2867, %v2875
    %2879 = vrot.lane.b32.xlu0 %v2877, 32
    %v2880 = vpop.permute.xlu0 %2879
    %v2882 = vadd.f32 %v2872, %v2880
    %v2883 = vtanh.pop %v2882
    %2885 = vrot.lane.b32.xlu0 %v2883, 64
    %v2886 = vpop.permute.xlu0 %2885
    %v2888 = vmul.f32 %v2867, %v2886
    %v2891 = vunpack.c.l.s4 1983009808
    %v2892 = vunpack.c.0.s8 %v2891
    %v2893 = vlaneseq
    %v2894 = vshrl.u32 %v2893, 7
    %v2895 = vsub.s32 %v2892, %v2894
    %v2896 = vrot.slane %v2888, %v2895
    %2897 = vrot.lane.b32.xlu0 %v2896, 32
    %v2898 = vpop.permute.xlu0 %2897
    %2900 = vst.msk [vmem:[#allocation3 + $0x1] sm:$0x1] %vm2402, %v2898
    %v2901 = vrot.slane %v2896, 7
    %v2902 = vrot.slane %v2901, 2
    %2903 = vrot.lane.b32.xlu0 %v2902, 96
    %v2904 = vpop.permute.xlu0 %2903
    %2906 = vst.msk [vmem:[#allocation3 + $0x1] sm:$0x1] %vm2409, %v2904
    %2907 = vrot.lane.b32.xlu0 %v2888, 32
    %v2908 = vpop.permute.xlu0 %2907
    %v2909 = vsel %vm346, %v2908, 0
    %2911 = vmatprep.subr.mxu0 0.0
    %2912 = vmatpush1.msra.mxu0 %v2109
    %2913 = vmatprep.subr.mxu0 0.0
    %2914 = vmatpush1.msra.mxu0 %v2110
    %2915 = vmatprep.subr.mxu0 0.0
    %2916 = vmatpush1.msra.mxu0 %v2111
    %2917 = vmatprep.subr.mxu0 0.0
    %2918 = vmatpush1.msra.mxu0 %v2112
    %2919 = vmatprep.subr.mxu0 0.0
    %2920 = vmatpush1.msra.mxu0 0.0
    %2921 = vmatprep.subr.mxu0 0.0
    %2922 = vmatpush1.msra.mxu0 0.0
    %2923 = vmatprep.subr.mxu0 0.0
    %2924 = vmatpush1.msra.mxu0 0.0
    %2925 = vmatprep.subr.mxu0 0.0
    %2926 = vmatpush1.msra.mxu0 0.0
    %2927 = vmatprep.subr.mxu0 0.0
    %2928 = vmatpush1.msra.mxu0 0.0
    %2929 = vmatprep.subr.mxu0 0.0
    %2930 = vmatpush1.msra.mxu0 0.0
    %2931 = vmatprep.subr.mxu0 0.0
    %2932 = vmatpush1.msra.mxu0 0.0
    %2933 = vmatprep.subr.mxu0 0.0
    %2934 = vmatpush1.msra.mxu0 0.0
    %2935 = vmatprep.subr.mxu0 0.0
    %2936 = vmatpush1.msra.mxu0 0.0
    %2937 = vmatprep.subr.mxu0 0.0
    %2938 = vmatpush1.msra.mxu0 0.0
    %2939 = vmatprep.subr.mxu0 0.0
    %2940 = vmatpush1.msra.mxu0 0.0
    %2941 = vmatprep.subr.mxu0 0.0
    %2942 = vmatpush1.msra.mxu0 0.0
    %2943 = vmatprep.subr.mxu0 0.0
    %2944 = vmatpush1.msra.mxu0 0.0
    %2945 = vmatprep.subr.mxu0 0.0
    %2946 = vmatpush1.msra.mxu0 0.0
    %2947 = vmatprep.subr.mxu0 0.0
    %2948 = vmatpush1.msra.mxu0 0.0
    %2949 = vmatprep.subr.mxu0 0.0
    %2950 = vmatpush1.msra.mxu0 0.0
    %2951 = vmatprep.subr.mxu0 0.0
    %2952 = vmatpush1.msra.mxu0 0.0
    %2953 = vmatprep.subr.mxu0 0.0
    %2954 = vmatpush1.msra.mxu0 0.0
    %2955 = vmatprep.subr.mxu0 0.0
    %2956 = vmatpush1.msra.mxu0 0.0
    %2957 = vmatprep.subr.mxu0 0.0
    %2958 = vmatpush1.msra.mxu0 0.0
    %2959 = vmatprep.subr.mxu0 0.0
    %2960 = vmatpush1.msra.mxu0 0.0
    %2961 = vmatprep.subr.mxu0 0.0
    %2962 = vmatpush1.msra.mxu0 0.0
    %2963 = vmatprep.subr.mxu0 0.0
    %2964 = vmatpush1.msra.mxu0 0.0
    %2965 = vmatprep.subr.mxu0 0.0
    %2966 = vmatpush1.msra.mxu0 0.0
    %2967 = vmatprep.subr.mxu0 0.0
    %2968 = vmatpush1.msra.mxu0 0.0
    %2969 = vmatprep.subr.mxu0 0.0
    %2970 = vmatpush1.msra.mxu0 0.0
    %2971 = vmatprep.subr.mxu0 0.0
    %2972 = vmatpush1.msra.mxu0 0.0
    %2973 = vmatprep.subr.mxu0 0.0
    %2974 = vmatpush1.msra.mxu0 0.0
    %2975 = vmatprep.mubr.f32.mxu0 0.0
    %2976 = vmatmul.mubr.f32.gmra.mrb[0].mxu0 %v2909
    %v2977 = vpop.f32.mrb[0].mxu0
    %v2978 = vadd.f32 0.0, %v2977
    %v2979 = vpop.f32.mrb[0].mxu0
    %2980 = vdwg.mxu0
    %v2982 = vrot.slane %v2978, 6
    %v2984 = vadd.f32 %v2212, %v2982
    %v2985 = vxor.u32 %v2984, 2147483648
    %v2986 = vmul.f32 %v2985, 1.442695
    %v2987 = vpow.pop %v2986
    %v2988 = vadd.f32 %v2987, 1.0
    %v2989 = vrcp.pop %v2988
    %v2990 = vmul.f32 1.0, %v2989
    %v2991 = vtanh.pop %v2984
    %v2993 = vrot.slane %v2882, 6
    %v2995 = vmul.f32 %v2990, %v2993
    %2997 = vrot.lane.b32.xlu0 %v2991, 64
    %v2998 = vpop.permute.xlu0 %2997
    %v3000 = vmul.f32 %v2990, %v2998
    %3002 = vrot.lane.b32.xlu0 %v3000, 32
    %v3003 = vpop.permute.xlu0 %3002
    %v3005 = vadd.f32 %v2995, %v3003
    %v3006 = vtanh.pop %v3005
    %3008 = vrot.lane.b32.xlu0 %v3006, 64
    %v3009 = vpop.permute.xlu0 %3008
    %v3011 = vmul.f32 %v2990, %v3009
    %v3014 = vunpack.c.l.s4 1983009808
    %v3015 = vunpack.c.0.s8 %v3014
    %v3016 = vlaneseq
    %v3017 = vshrl.u32 %v3016, 7
    %v3018 = vsub.s32 %v3015, %v3017
    %v3019 = vrot.slane %v3011, %v3018
    %v3020 = vcombine.high %v3019, %v3019
    %3021 = vrot.lane.b32.xlu0 %v3020, 32
    %v3022 = vpop.permute.xlu0 %3021
    %3024 = vst.msk [vmem:[#allocation3 + $0x3] sm:$0x1] %vm2402, %v3022
    %v3025 = vrot.slane %v3020, 7
    %v3026 = vrot.slane %v3025, 2
    %3027 = vrot.lane.b32.xlu0 %v3026, 96
    %v3028 = vpop.permute.xlu0 %3027
    %3030 = vst.msk [vmem:[#allocation3 + $0x3] sm:$0x1] %vm2409, %v3028
    %v3031 = vrot.slane %v3011, 2
    %3032 = vrot.lane.b32.xlu0 %v3031, 32
    %v3033 = vpop.permute.xlu0 %3032
    %v3034 = vsel %vm346, %v3033, 0
    %3036 = vmatprep.subr.mxu0 0.0
    %3037 = vmatpush1.msra.mxu0 %v2109
    %3038 = vmatprep.subr.mxu0 0.0
    %3039 = vmatpush1.msra.mxu0 %v2110
    %3040 = vmatprep.subr.mxu0 0.0
    %3041 = vmatpush1.msra.mxu0 %v2111
    %3042 = vmatprep.subr.mxu0 0.0
    %3043 = vmatpush1.msra.mxu0 %v2112
    %3044 = vmatprep.subr.mxu0 0.0
    %3045 = vmatpush1.msra.mxu0 0.0
    %3046 = vmatprep.subr.mxu0 0.0
    %3047 = vmatpush1.msra.mxu0 0.0
    %3048 = vmatprep.subr.mxu0 0.0
    %3049 = vmatpush1.msra.mxu0 0.0
    %3050 = vmatprep.subr.mxu0 0.0
    %3051 = vmatpush1.msra.mxu0 0.0
    %3052 = vmatprep.subr.mxu0 0.0
    %3053 = vmatpush1.msra.mxu0 0.0
    %3054 = vmatprep.subr.mxu0 0.0
    %3055 = vmatpush1.msra.mxu0 0.0
    %3056 = vmatprep.subr.mxu0 0.0
    %3057 = vmatpush1.msra.mxu0 0.0
    %3058 = vmatprep.subr.mxu0 0.0
    %3059 = vmatpush1.msra.mxu0 0.0
    %3060 = vmatprep.subr.mxu0 0.0
    %3061 = vmatpush1.msra.mxu0 0.0
    %3062 = vmatprep.subr.mxu0 0.0
    %3063 = vmatpush1.msra.mxu0 0.0
    %3064 = vmatprep.subr.mxu0 0.0
    %3065 = vmatpush1.msra.mxu0 0.0
    %3066 = vmatprep.subr.mxu0 0.0
    %3067 = vmatpush1.msra.mxu0 0.0
    %3068 = vmatprep.subr.mxu0 0.0
    %3069 = vmatpush1.msra.mxu0 0.0
    %3070 = vmatprep.subr.mxu0 0.0
    %3071 = vmatpush1.msra.mxu0 0.0
    %3072 = vmatprep.subr.mxu0 0.0
    %3073 = vmatpush1.msra.mxu0 0.0
    %3074 = vmatprep.subr.mxu0 0.0
    %3075 = vmatpush1.msra.mxu0 0.0
    %3076 = vmatprep.subr.mxu0 0.0
    %3077 = vmatpush1.msra.mxu0 0.0
    %3078 = vmatprep.subr.mxu0 0.0
    %3079 = vmatpush1.msra.mxu0 0.0
    %3080 = vmatprep.subr.mxu0 0.0
    %3081 = vmatpush1.msra.mxu0 0.0
    %3082 = vmatprep.subr.mxu0 0.0
    %3083 = vmatpush1.msra.mxu0 0.0
    %3084 = vmatprep.subr.mxu0 0.0
    %3085 = vmatpush1.msra.mxu0 0.0
    %3086 = vmatprep.subr.mxu0 0.0
    %3087 = vmatpush1.msra.mxu0 0.0
    %3088 = vmatprep.subr.mxu0 0.0
    %3089 = vmatpush1.msra.mxu0 0.0
    %3090 = vmatprep.subr.mxu0 0.0
    %3091 = vmatpush1.msra.mxu0 0.0
    %3092 = vmatprep.subr.mxu0 0.0
    %3093 = vmatpush1.msra.mxu0 0.0
    %3094 = vmatprep.subr.mxu0 0.0
    %3095 = vmatpush1.msra.mxu0 0.0
    %3096 = vmatprep.subr.mxu0 0.0
    %3097 = vmatpush1.msra.mxu0 0.0
    %3098 = vmatprep.subr.mxu0 0.0
    %3099 = vmatpush1.msra.mxu0 0.0
    %3100 = vmatprep.mubr.f32.mxu0 0.0
    %3101 = vmatmul.mubr.f32.gmra.mrb[0].mxu0 %v3034
    %v3102 = vpop.f32.mrb[0].mxu0
    %v3103 = vadd.f32 0.0, %v3102
    %v3104 = vpop.f32.mrb[0].mxu0
    %3105 = vdwg.mxu0
    %v3107 = vrot.slane %v3103, 4
    %v3109 = vadd.f32 %v2212, %v3107
    %v3110 = vxor.u32 %v3109, 2147483648
    %v3111 = vmul.f32 %v3110, 1.442695
    %v3112 = vpow.pop %v3111
    %v3113 = vadd.f32 %v3112, 1.0
    %v3114 = vrcp.pop %v3113
    %v3115 = vmul.f32 1.0, %v3114
    %v3116 = vtanh.pop %v3109
    %v3118 = vrot.slane %v3005, 6
    %v3120 = vmul.f32 %v3115, %v3118
    %3122 = vrot.lane.b32.xlu0 %v3116, 64
    %v3123 = vpop.permute.xlu0 %3122
    %v3125 = vmul.f32 %v3115, %v3123
    %3127 = vrot.lane.b32.xlu0 %v3125, 32
    %v3128 = vpop.permute.xlu0 %3127
    %v3130 = vadd.f32 %v3120, %v3128
    %v3131 = vtanh.pop %v3130
    %3133 = vrot.lane.b32.xlu0 %v3131, 64
    %v3134 = vpop.permute.xlu0 %3133
    %v3136 = vmul.f32 %v3115, %v3134
    %v3138 = vcombine.high %v3136, %v3136
    %v3140 = vunpack.c.l.s4 1983009808
    %v3141 = vunpack.c.0.s8 %v3140
    %v3142 = vlaneseq
    %v3143 = vshrl.u32 %v3142, 7
    %v3144 = vsub.s32 %v3141, %v3143
    %v3145 = vrot.slane %v3138, %v3144
    %3146 = vrot.lane.b32.xlu0 %v3145, 32
    %v3147 = vpop.permute.xlu0 %3146
    %3149 = vst.msk [vmem:[#allocation3 + $0x5] sm:$0x1] %vm2402, %v3147
    %v3150 = vrot.slane %v3145, 7
    %v3151 = vrot.slane %v3150, 2
    %3152 = vrot.lane.b32.xlu0 %v3151, 96
    %v3153 = vpop.permute.xlu0 %3152
    %3155 = vst.msk [vmem:[#allocation3 + $0x5] sm:$0x1] %vm2409, %v3153
    %v3156 = vrot.slane %v3136, 4
    %3157 = vrot.lane.b32.xlu0 %v3156, 32
    %v3158 = vpop.permute.xlu0 %3157
    %v3159 = vsel %vm346, %v3158, 0
    %3161 = vmatprep.subr.mxu0 0.0
    %3162 = vmatpush1.msra.mxu0 %v2109
    %3163 = vmatprep.subr.mxu0 0.0
    %3164 = vmatpush1.msra.mxu0 %v2110
    %3165 = vmatprep.subr.mxu0 0.0
    %3166 = vmatpush1.msra.mxu0 %v2111
    %3167 = vmatprep.subr.mxu0 0.0
    %3168 = vmatpush1.msra.mxu0 %v2112
    %3169 = vmatprep.subr.mxu0 0.0
    %3170 = vmatpush1.msra.mxu0 0.0
    %3171 = vmatprep.subr.mxu0 0.0
    %3172 = vmatpush1.msra.mxu0 0.0
    %3173 = vmatprep.subr.mxu0 0.0
    %3174 = vmatpush1.msra.mxu0 0.0
    %3175 = vmatprep.subr.mxu0 0.0
    %3176 = vmatpush1.msra.mxu0 0.0
    %3177 = vmatprep.subr.mxu0 0.0
    %3178 = vmatpush1.msra.mxu0 0.0
    %3179 = vmatprep.subr.mxu0 0.0
    %3180 = vmatpush1.msra.mxu0 0.0
    %3181 = vmatprep.subr.mxu0 0.0
    %3182 = vmatpush1.msra.mxu0 0.0
    %3183 = vmatprep.subr.mxu0 0.0
    %3184 = vmatpush1.msra.mxu0 0.0
    %3185 = vmatprep.subr.mxu0 0.0
    %3186 = vmatpush1.msra.mxu0 0.0
    %3187 = vmatprep.subr.mxu0 0.0
    %3188 = vmatpush1.msra.mxu0 0.0
    %3189 = vmatprep.subr.mxu0 0.0
    %3190 = vmatpush1.msra.mxu0 0.0
    %3191 = vmatprep.subr.mxu0 0.0
    %3192 = vmatpush1.msra.mxu0 0.0
    %3193 = vmatprep.subr.mxu0 0.0
    %3194 = vmatpush1.msra.mxu0 0.0
    %3195 = vmatprep.subr.mxu0 0.0
    %3196 = vmatpush1.msra.mxu0 0.0
    %3197 = vmatprep.subr.mxu0 0.0
    %3198 = vmatpush1.msra.mxu0 0.0
    %3199 = vmatprep.subr.mxu0 0.0
    %3200 = vmatpush1.msra.mxu0 0.0
    %3201 = vmatprep.subr.mxu0 0.0
    %3202 = vmatpush1.msra.mxu0 0.0
    %3203 = vmatprep.subr.mxu0 0.0
    %3204 = vmatpush1.msra.mxu0 0.0
    %3205 = vmatprep.subr.mxu0 0.0
    %3206 = vmatpush1.msra.mxu0 0.0
    %3207 = vmatprep.subr.mxu0 0.0
    %3208 = vmatpush1.msra.mxu0 0.0
    %3209 = vmatprep.subr.mxu0 0.0
    %3210 = vmatpush1.msra.mxu0 0.0
    %3211 = vmatprep.subr.mxu0 0.0
    %3212 = vmatpush1.msra.mxu0 0.0
    %3213 = vmatprep.subr.mxu0 0.0
    %3214 = vmatpush1.msra.mxu0 0.0
    %3215 = vmatprep.subr.mxu0 0.0
    %3216 = vmatpush1.msra.mxu0 0.0
    %3217 = vmatprep.subr.mxu0 0.0
    %3218 = vmatpush1.msra.mxu0 0.0
    %3219 = vmatprep.subr.mxu0 0.0
    %3220 = vmatpush1.msra.mxu0 0.0
    %3221 = vmatprep.subr.mxu0 0.0
    %3222 = vmatpush1.msra.mxu0 0.0
    %3223 = vmatprep.subr.mxu0 0.0
    %3224 = vmatpush1.msra.mxu0 0.0
    %3225 = vmatprep.mubr.f32.mxu0 0.0
    %3226 = vmatmul.mubr.f32.gmra.mrb[0].mxu0 %v3159
    %v3227 = vpop.f32.mrb[0].mxu0
    %v3228 = vadd.f32 0.0, %v3227
    %v3229 = vpop.f32.mrb[0].mxu0
    %3230 = vdwg.mxu0
    %v3232 = vrot.slane %v3228, 2
    %v3234 = vadd.f32 %v2212, %v3232
    %v3235 = vxor.u32 %v3234, 2147483648
    %v3236 = vmul.f32 %v3235, 1.442695
    %v3237 = vpow.pop %v3236
    %v3238 = vadd.f32 %v3237, 1.0
    %v3239 = vrcp.pop %v3238
    %v3240 = vmul.f32 1.0, %v3239
    %v3241 = vtanh.pop %v3234
    %v3243 = vrot.slane %v3130, 6
    %v3245 = vmul.f32 %v3240, %v3243
    %3247 = vrot.lane.b32.xlu0 %v3241, 64
    %v3248 = vpop.permute.xlu0 %3247
    %v3250 = vmul.f32 %v3240, %v3248
    %3252 = vrot.lane.b32.xlu0 %v3250, 32
    %v3253 = vpop.permute.xlu0 %3252
    %v3255 = vadd.f32 %v3245, %v3253
    %v3256 = vtanh.pop %v3255
    %3258 = vrot.lane.b32.xlu0 %v3256, 64
    %v3259 = vpop.permute.xlu0 %3258
    %v3261 = vmul.f32 %v3240, %v3259
    %v3263 = vcombine.high %v3261, %v3261
    %v3265 = vunpack.c.l.s4 1983009808
    %v3266 = vunpack.c.0.s8 %v3265
    %v3267 = vlaneseq
    %v3268 = vshrl.u32 %v3267, 7
    %v3269 = vsub.s32 %v3266, %v3268
    %v3270 = vrot.slane %v3263, %v3269
    %v3271 = vcombine.high %v3270, %v3270
    %3272 = vrot.lane.b32.xlu0 %v3271, 32
    %v3273 = vpop.permute.xlu0 %3272
    %3275 = vst.msk [vmem:[#allocation3 + $0x7] sm:$0x1] %vm2402, %v3273
    %v3276 = vrot.slane %v3271, 7
    %v3277 = vrot.slane %v3276, 2
    %3278 = vrot.lane.b32.xlu0 %v3277, 96
    %v3279 = vpop.permute.xlu0 %3278
    %3281 = vst.msk [vmem:[#allocation3 + $0x7] sm:$0x1] %vm2409, %v3279
    %3282 = vmatprep.subr.mxu0 0.0
    %3283 = vmatpush1.msra.mxu0 %v2122
    %3284 = vmatprep.subr.mxu0 0.0
    %3285 = vmatpush1.msra.mxu0 %v2123
    %3286 = vmatprep.subr.mxu0 0.0
    %3287 = vmatpush1.msra.mxu0 %v2124
    %3288 = vmatprep.subr.mxu0 0.0
    %3289 = vmatpush1.msra.mxu0 %v2125
    %3290 = vmatprep.subr.mxu0 0.0
    %3291 = vmatpush1.msra.mxu0 0.0
    %3292 = vmatprep.subr.mxu0 0.0
    %3293 = vmatpush1.msra.mxu0 0.0
    %3294 = vmatprep.subr.mxu0 0.0
    %3295 = vmatpush1.msra.mxu0 0.0
    %3296 = vmatprep.subr.mxu0 0.0
    %3297 = vmatpush1.msra.mxu0 0.0
    %3298 = vmatprep.subr.mxu0 0.0
    %3299 = vmatpush1.msra.mxu0 0.0
    %3300 = vmatprep.subr.mxu0 0.0
    %3301 = vmatpush1.msra.mxu0 0.0
    %3302 = vmatprep.subr.mxu0 0.0
    %3303 = vmatpush1.msra.mxu0 0.0
    %3304 = vmatprep.subr.mxu0 0.0
    %3305 = vmatpush1.msra.mxu0 0.0
    %3306 = vmatprep.subr.mxu0 0.0
    %3307 = vmatpush1.msra.mxu0 0.0
    %3308 = vmatprep.subr.mxu0 0.0
    %3309 = vmatpush1.msra.mxu0 0.0
    %3310 = vmatprep.subr.mxu0 0.0
    %3311 = vmatpush1.msra.mxu0 0.0
    %3312 = vmatprep.subr.mxu0 0.0
    %3313 = vmatpush1.msra.mxu0 0.0
    %3314 = vmatprep.subr.mxu0 0.0
    %3315 = vmatpush1.msra.mxu0 0.0
    %3316 = vmatprep.subr.mxu0 0.0
    %3317 = vmatpush1.msra.mxu0 0.0
    %3318 = vmatprep.subr.mxu0 0.0
    %3319 = vmatpush1.msra.mxu0 0.0
    %3320 = vmatprep.subr.mxu0 0.0
    %3321 = vmatpush1.msra.mxu0 0.0
    %3322 = vmatprep.subr.mxu0 0.0
    %3323 = vmatpush1.msra.mxu0 0.0
    %3324 = vmatprep.subr.mxu0 0.0
    %3325 = vmatpush1.msra.mxu0 0.0
    %3326 = vmatprep.subr.mxu0 0.0
    %3327 = vmatpush1.msra.mxu0 0.0
    %3328 = vmatprep.subr.mxu0 0.0
    %3329 = vmatpush1.msra.mxu0 0.0
    %3330 = vmatprep.subr.mxu0 0.0
    %3331 = vmatpush1.msra.mxu0 0.0
    %3332 = vmatprep.subr.mxu0 0.0
    %3333 = vmatpush1.msra.mxu0 0.0
    %3334 = vmatprep.subr.mxu0 0.0
    %3335 = vmatpush1.msra.mxu0 0.0
    %3336 = vmatprep.subr.mxu0 0.0
    %3337 = vmatpush1.msra.mxu0 0.0
    %3338 = vmatprep.subr.mxu0 0.0
    %3339 = vmatpush1.msra.mxu0 0.0
    %3340 = vmatprep.subr.mxu0 0.0
    %3341 = vmatpush1.msra.mxu0 0.0
    %3342 = vmatprep.subr.mxu0 0.0
    %3343 = vmatpush1.msra.mxu0 0.0
    %3344 = vmatprep.subr.mxu0 0.0
    %3345 = vmatpush1.msra.mxu0 0.0
    %3346 = vmatprep.mubr.f32.mxu0 0.0
    %3347 = vmatmul.mubr.f32.gmra.mrb[0].mxu0 %v348
    %v3348 = vpop.f32.mrb[0].mxu0
    %v3349 = vadd.f32 0.0, %v3348
    %v3350 = vpop.f32.mrb[0].mxu0
    %3351 = vdwg.mxu0
    %v3353 = vrot.slane %v3349, 2
    %v3355 = vadd.f32 %v2293, %v3353
    %v3356 = vxor.u32 %v3355, 2147483648
    %v3357 = vmul.f32 %v3356, 1.442695
    %v3358 = vpow.pop %v3357
    %v3359 = vadd.f32 %v3358, 1.0
    %v3360 = vrcp.pop %v3359
    %v3361 = vmul.f32 1.0, %v3360
    %v3362 = vtanh.pop %v3355
    %v3363 = vmul.f32 %v3361, 0.0
    %3365 = vrot.lane.b32.xlu0 %v3362, 64
    %v3366 = vpop.permute.xlu0 %3365
    %v3368 = vmul.f32 %v3361, %v3366
    %3370 = vrot.lane.b32.xlu0 %v3368, 32
    %v3371 = vpop.permute.xlu0 %3370
    %v3373 = vadd.f32 %v3363, %v3371
    %v3374 = vtanh.pop %v3373
    %3376 = vrot.lane.b32.xlu0 %v3374, 64
    %v3377 = vpop.permute.xlu0 %3376
    %v3379 = vmul.f32 %v3361, %v3377
    %v3381 = vcombine.high %v3379, %v3379
    %v3383 = vunpack.c.l.s4 1983009808
    %v3384 = vunpack.c.0.s8 %v3383
    %v3385 = vlaneseq
    %v3386 = vshrl.u32 %v3385, 7
    %v3387 = vsub.s32 %v3384, %v3386
    %v3388 = vrot.slane %v3381, %v3387
    %v3389 = vcombine.high %v3388, %v3388
    %3390 = vrot.lane.b32.xlu0 %v3389, 64
    %v3391 = vpop.permute.xlu0 %3390
    %vm3393 = vcmask 516352
    %3394 = vst.msk [vmem:[#allocation3 + $0x7] sm:$0x1] %vm3393, %v3391
    %v3395 = vrot.slane %v3389, 7
    %v3396 = vrot.slane %v3395, 2
    %vm3398 = vcmask 1041152
    %3399 = vst.msk [vmem:[#allocation3 + $0x7] sm:$0x1] %vm3398, %v3396
    %v3400 = vrot.slane %v3379, 6
    %3401 = vrot.lane.b32.xlu0 %v3400, 32
    %v3402 = vpop.permute.xlu0 %3401
    %v3403 = vsel %vm346, %v3402, 0
    %3405 = vmatprep.subr.mxu0 0.0
    %3406 = vmatpush1.msra.mxu0 %v2122
    %3407 = vmatprep.subr.mxu0 0.0
    %3408 = vmatpush1.msra.mxu0 %v2123
    %3409 = vmatprep.subr.mxu0 0.0
    %3410 = vmatpush1.msra.mxu0 %v2124
    %3411 = vmatprep.subr.mxu0 0.0
    %3412 = vmatpush1.msra.mxu0 %v2125
    %3413 = vmatprep.subr.mxu0 0.0
    %3414 = vmatpush1.msra.mxu0 0.0
    %3415 = vmatprep.subr.mxu0 0.0
    %3416 = vmatpush1.msra.mxu0 0.0
    %3417 = vmatprep.subr.mxu0 0.0
    %3418 = vmatpush1.msra.mxu0 0.0
    %3419 = vmatprep.subr.mxu0 0.0
    %3420 = vmatpush1.msra.mxu0 0.0
    %3421 = vmatprep.subr.mxu0 0.0
    %3422 = vmatpush1.msra.mxu0 0.0
    %3423 = vmatprep.subr.mxu0 0.0
    %3424 = vmatpush1.msra.mxu0 0.0
    %3425 = vmatprep.subr.mxu0 0.0
    %3426 = vmatpush1.msra.mxu0 0.0
    %3427 = vmatprep.subr.mxu0 0.0
    %3428 = vmatpush1.msra.mxu0 0.0
    %3429 = vmatprep.subr.mxu0 0.0
    %3430 = vmatpush1.msra.mxu0 0.0
    %3431 = vmatprep.subr.mxu0 0.0
    %3432 = vmatpush1.msra.mxu0 0.0
    %3433 = vmatprep.subr.mxu0 0.0
    %3434 = vmatpush1.msra.mxu0 0.0
    %3435 = vmatprep.subr.mxu0 0.0
    %3436 = vmatpush1.msra.mxu0 0.0
    %3437 = vmatprep.subr.mxu0 0.0
    %3438 = vmatpush1.msra.mxu0 0.0
    %3439 = vmatprep.subr.mxu0 0.0
    %3440 = vmatpush1.msra.mxu0 0.0
    %3441 = vmatprep.subr.mxu0 0.0
    %3442 = vmatpush1.msra.mxu0 0.0
    %3443 = vmatprep.subr.mxu0 0.0
    %3444 = vmatpush1.msra.mxu0 0.0
    %3445 = vmatprep.subr.mxu0 0.0
    %3446 = vmatpush1.msra.mxu0 0.0
    %3447 = vmatprep.subr.mxu0 0.0
    %3448 = vmatpush1.msra.mxu0 0.0
    %3449 = vmatprep.subr.mxu0 0.0
    %3450 = vmatpush1.msra.mxu0 0.0
    %3451 = vmatprep.subr.mxu0 0.0
    %3452 = vmatpush1.msra.mxu0 0.0
    %3453 = vmatprep.subr.mxu0 0.0
    %3454 = vmatpush1.msra.mxu0 0.0
    %3455 = vmatprep.subr.mxu0 0.0
    %3456 = vmatpush1.msra.mxu0 0.0
    %3457 = vmatprep.subr.mxu0 0.0
    %3458 = vmatpush1.msra.mxu0 0.0
    %3459 = vmatprep.subr.mxu0 0.0
    %3460 = vmatpush1.msra.mxu0 0.0
    %3461 = vmatprep.subr.mxu0 0.0
    %3462 = vmatpush1.msra.mxu0 0.0
    %3463 = vmatprep.subr.mxu0 0.0
    %3464 = vmatpush1.msra.mxu0 0.0
    %3465 = vmatprep.subr.mxu0 0.0
    %3466 = vmatpush1.msra.mxu0 0.0
    %3467 = vmatprep.subr.mxu0 0.0
    %3468 = vmatpush1.msra.mxu0 0.0
    %3469 = vmatprep.mubr.f32.mxu0 0.0
    %3470 = vmatmul.mubr.f32.gmra.mrb[0].mxu0 %v3403
    %v3471 = vpop.f32.mrb[0].mxu0
    %v3472 = vadd.f32 0.0, %v3471
    %v3473 = vpop.f32.mrb[0].mxu0
    %3474 = vdwg.mxu0
    %v3476 = vrot.slane %v3472, 4
    %v3478 = vadd.f32 %v2293, %v3476
    %v3479 = vxor.u32 %v3478, 2147483648
    %v3480 = vmul.f32 %v3479, 1.442695
    %v3481 = vpow.pop %v3480
    %v3482 = vadd.f32 %v3481, 1.0
    %v3483 = vrcp.pop %v3482
    %v3484 = vmul.f32 1.0, %v3483
    %v3485 = vtanh.pop %v3478
    %v3487 = vrot.slane %v3373, 2
    %v3489 = vmul.f32 %v3484, %v3487
    %3491 = vrot.lane.b32.xlu0 %v3485, 64
    %v3492 = vpop.permute.xlu0 %3491
    %v3494 = vmul.f32 %v3484, %v3492
    %3496 = vrot.lane.b32.xlu0 %v3494, 32
    %v3497 = vpop.permute.xlu0 %3496
    %v3499 = vadd.f32 %v3489, %v3497
    %v3500 = vtanh.pop %v3499
    %3502 = vrot.lane.b32.xlu0 %v3500, 64
    %v3503 = vpop.permute.xlu0 %3502
    %v3505 = vmul.f32 %v3484, %v3503
    %v3507 = vcombine.high %v3505, %v3505
    %v3509 = vunpack.c.l.s4 1983009808
    %v3510 = vunpack.c.0.s8 %v3509
    %v3511 = vlaneseq
    %v3512 = vshrl.u32 %v3511, 7
    %v3513 = vsub.s32 %v3510, %v3512
    %v3514 = vrot.slane %v3507, %v3513
    %3515 = vrot.lane.b32.xlu0 %v3514, 64
    %v3516 = vpop.permute.xlu0 %3515
    %3518 = vst.msk [vmem:[#allocation3 + $0x5] sm:$0x1] %vm3393, %v3516
    %v3519 = vrot.slane %v3514, 7
    %v3520 = vrot.slane %v3519, 2
    %3522 = vst.msk [vmem:[#allocation3 + $0x5] sm:$0x1] %vm3398, %v3520
    %v3523 = vrot.slane %v3505, 4
    %3524 = vrot.lane.b32.xlu0 %v3523, 32
    %v3525 = vpop.permute.xlu0 %3524
    %v3526 = vsel %vm346, %v3525, 0
    %3528 = vmatprep.subr.mxu0 0.0
    %3529 = vmatpush1.msra.mxu0 %v2122
    %3530 = vmatprep.subr.mxu0 0.0
    %3531 = vmatpush1.msra.mxu0 %v2123
    %3532 = vmatprep.subr.mxu0 0.0
    %3533 = vmatpush1.msra.mxu0 %v2124
    %3534 = vmatprep.subr.mxu0 0.0
    %3535 = vmatpush1.msra.mxu0 %v2125
    %3536 = vmatprep.subr.mxu0 0.0
    %3537 = vmatpush1.msra.mxu0 0.0
    %3538 = vmatprep.subr.mxu0 0.0
    %3539 = vmatpush1.msra.mxu0 0.0
    %3540 = vmatprep.subr.mxu0 0.0
    %3541 = vmatpush1.msra.mxu0 0.0
    %3542 = vmatprep.subr.mxu0 0.0
    %3543 = vmatpush1.msra.mxu0 0.0
    %3544 = vmatprep.subr.mxu0 0.0
    %3545 = vmatpush1.msra.mxu0 0.0
    %3546 = vmatprep.subr.mxu0 0.0
    %3547 = vmatpush1.msra.mxu0 0.0
    %3548 = vmatprep.subr.mxu0 0.0
    %3549 = vmatpush1.msra.mxu0 0.0
    %3550 = vmatprep.subr.mxu0 0.0
    %3551 = vmatpush1.msra.mxu0 0.0
    %3552 = vmatprep.subr.mxu0 0.0
    %3553 = vmatpush1.msra.mxu0 0.0
    %3554 = vmatprep.subr.mxu0 0.0
    %3555 = vmatpush1.msra.mxu0 0.0
    %3556 = vmatprep.subr.mxu0 0.0
    %3557 = vmatpush1.msra.mxu0 0.0
    %3558 = vmatprep.subr.mxu0 0.0
    %3559 = vmatpush1.msra.mxu0 0.0
    %3560 = vmatprep.subr.mxu0 0.0
    %3561 = vmatpush1.msra.mxu0 0.0
    %3562 = vmatprep.subr.mxu0 0.0
    %3563 = vmatpush1.msra.mxu0 0.0
    %3564 = vmatprep.subr.mxu0 0.0
    %3565 = vmatpush1.msra.mxu0 0.0
    %3566 = vmatprep.subr.mxu0 0.0
    %3567 = vmatpush1.msra.mxu0 0.0
    %3568 = vmatprep.subr.mxu0 0.0
    %3569 = vmatpush1.msra.mxu0 0.0
    %3570 = vmatprep.subr.mxu0 0.0
    %3571 = vmatpush1.msra.mxu0 0.0
    %3572 = vmatprep.subr.mxu0 0.0
    %3573 = vmatpush1.msra.mxu0 0.0
    %3574 = vmatprep.subr.mxu0 0.0
    %3575 = vmatpush1.msra.mxu0 0.0
    %3576 = vmatprep.subr.mxu0 0.0
    %3577 = vmatpush1.msra.mxu0 0.0
    %3578 = vmatprep.subr.mxu0 0.0
    %3579 = vmatpush1.msra.mxu0 0.0
    %3580 = vmatprep.subr.mxu0 0.0
    %3581 = vmatpush1.msra.mxu0 0.0
    %3582 = vmatprep.subr.mxu0 0.0
    %3583 = vmatpush1.msra.mxu0 0.0
    %3584 = vmatprep.subr.mxu0 0.0
    %3585 = vmatpush1.msra.mxu0 0.0
    %3586 = vmatprep.subr.mxu0 0.0
    %3587 = vmatpush1.msra.mxu0 0.0
    %3588 = vmatprep.subr.mxu0 0.0
    %3589 = vmatpush1.msra.mxu0 0.0
    %3590 = vmatprep.subr.mxu0 0.0
    %3591 = vmatpush1.msra.mxu0 0.0
    %3592 = vmatprep.mubr.f32.mxu0 0.0
    %3593 = vmatmul.mubr.f32.gmra.mrb[0].mxu0 %v3526
    %v3594 = vpop.f32.mrb[0].mxu0
    %v3595 = vadd.f32 0.0, %v3594
    %v3596 = vpop.f32.mrb[0].mxu0
    %3597 = vdwg.mxu0
    %v3599 = vrot.slane %v3595, 6
    %v3601 = vadd.f32 %v2293, %v3599
    %v3602 = vxor.u32 %v3601, 2147483648
    %v3603 = vmul.f32 %v3602, 1.442695
    %v3604 = vpow.pop %v3603
    %v3605 = vadd.f32 %v3604, 1.0
    %v3606 = vrcp.pop %v3605
    %v3607 = vmul.f32 1.0, %v3606
    %v3608 = vtanh.pop %v3601
    %v3610 = vrot.slane %v3499, 2
    %v3612 = vmul.f32 %v3607, %v3610
    %3614 = vrot.lane.b32.xlu0 %v3608, 64
    %v3615 = vpop.permute.xlu0 %3614
    %v3617 = vmul.f32 %v3607, %v3615
    %3619 = vrot.lane.b32.xlu0 %v3617, 32
    %v3620 = vpop.permute.xlu0 %3619
    %v3622 = vadd.f32 %v3612, %v3620
    %v3623 = vtanh.pop %v3622
    %3625 = vrot.lane.b32.xlu0 %v3623, 64
    %v3626 = vpop.permute.xlu0 %3625
    %v3628 = vmul.f32 %v3607, %v3626
    %v3631 = vunpack.c.l.s4 1983009808
    %v3632 = vunpack.c.0.s8 %v3631
    %v3633 = vlaneseq
    %v3634 = vshrl.u32 %v3633, 7
    %v3635 = vsub.s32 %v3632, %v3634
    %v3636 = vrot.slane %v3628, %v3635
    %v3637 = vcombine.high %v3636, %v3636
    %3638 = vrot.lane.b32.xlu0 %v3637, 64
    %v3639 = vpop.permute.xlu0 %3638
    %3641 = vst.msk [vmem:[#allocation3 + $0x3] sm:$0x1] %vm3393, %v3639
    %v3642 = vrot.slane %v3637, 7
    %v3643 = vrot.slane %v3642, 2
    %3645 = vst.msk [vmem:[#allocation3 + $0x3] sm:$0x1] %vm3398, %v3643
    %v3646 = vrot.slane %v3628, 2
    %3647 = vrot.lane.b32.xlu0 %v3646, 32
    %v3648 = vpop.permute.xlu0 %3647
    %v3649 = vsel %vm346, %v3648, 0
    %3651 = vmatprep.subr.mxu0 0.0
    %3652 = vmatpush1.msra.mxu0 %v2122
    %3653 = vmatprep.subr.mxu0 0.0
    %3654 = vmatpush1.msra.mxu0 %v2123
    %3655 = vmatprep.subr.mxu0 0.0
    %3656 = vmatpush1.msra.mxu0 %v2124
    %3657 = vmatprep.subr.mxu0 0.0
    %3658 = vmatpush1.msra.mxu0 %v2125
    %3659 = vmatprep.subr.mxu0 0.0
    %3660 = vmatpush1.msra.mxu0 0.0
    %3661 = vmatprep.subr.mxu0 0.0
    %3662 = vmatpush1.msra.mxu0 0.0
    %3663 = vmatprep.subr.mxu0 0.0
    %3664 = vmatpush1.msra.mxu0 0.0
    %3665 = vmatprep.subr.mxu0 0.0
    %3666 = vmatpush1.msra.mxu0 0.0
    %3667 = vmatprep.subr.mxu0 0.0
    %3668 = vmatpush1.msra.mxu0 0.0
    %3669 = vmatprep.subr.mxu0 0.0
    %3670 = vmatpush1.msra.mxu0 0.0
    %3671 = vmatprep.subr.mxu0 0.0
    %3672 = vmatpush1.msra.mxu0 0.0
    %3673 = vmatprep.subr.mxu0 0.0
    %3674 = vmatpush1.msra.mxu0 0.0
    %3675 = vmatprep.subr.mxu0 0.0
    %3676 = vmatpush1.msra.mxu0 0.0
    %3677 = vmatprep.subr.mxu0 0.0
    %3678 = vmatpush1.msra.mxu0 0.0
    %3679 = vmatprep.subr.mxu0 0.0
    %3680 = vmatpush1.msra.mxu0 0.0
    %3681 = vmatprep.subr.mxu0 0.0
    %3682 = vmatpush1.msra.mxu0 0.0
    %3683 = vmatprep.subr.mxu0 0.0
    %3684 = vmatpush1.msra.mxu0 0.0
    %3685 = vmatprep.subr.mxu0 0.0
    %3686 = vmatpush1.msra.mxu0 0.0
    %3687 = vmatprep.subr.mxu0 0.0
    %3688 = vmatpush1.msra.mxu0 0.0
    %3689 = vmatprep.subr.mxu0 0.0
    %3690 = vmatpush1.msra.mxu0 0.0
    %3691 = vmatprep.subr.mxu0 0.0
    %3692 = vmatpush1.msra.mxu0 0.0
    %3693 = vmatprep.subr.mxu0 0.0
    %3694 = vmatpush1.msra.mxu0 0.0
    %3695 = vmatprep.subr.mxu0 0.0
    %3696 = vmatpush1.msra.mxu0 0.0
    %3697 = vmatprep.subr.mxu0 0.0
    %3698 = vmatpush1.msra.mxu0 0.0
    %3699 = vmatprep.subr.mxu0 0.0
    %3700 = vmatpush1.msra.mxu0 0.0
    %3701 = vmatprep.subr.mxu0 0.0
    %3702 = vmatpush1.msra.mxu0 0.0
    %3703 = vmatprep.subr.mxu0 0.0
    %3704 = vmatpush1.msra.mxu0 0.0
    %3705 = vmatprep.subr.mxu0 0.0
    %3706 = vmatpush1.msra.mxu0 0.0
    %3707 = vmatprep.subr.mxu0 0.0
    %3708 = vmatpush1.msra.mxu0 0.0
    %3709 = vmatprep.subr.mxu0 0.0
    %3710 = vmatpush1.msra.mxu0 0.0
    %3711 = vmatprep.subr.mxu0 0.0
    %3712 = vmatpush1.msra.mxu0 0.0
    %3713 = vmatprep.subr.mxu0 0.0
    %3714 = vmatpush1.msra.mxu0 0.0
    %3715 = vmatprep.mubr.f32.mxu0 0.0
    %3716 = vmatmul.mubr.f32.gmra.mrb[0].mxu0 %v3649
    %v3717 = vpop.f32.mrb[0].mxu0
    %v3718 = vadd.f32 0.0, %v3717
    %v3719 = vpop.f32.mrb[0].mxu0
    %3720 = vdwg.mxu0
    %v3721 = vadd.f32 %v2293, %v3718
    %v3722 = vxor.u32 %v3721, 2147483648
    %v3723 = vmul.f32 %v3722, 1.442695
    %v3724 = vpow.pop %v3723
    %v3725 = vadd.f32 %v3724, 1.0
    %v3726 = vrcp.pop %v3725
    %v3727 = vmul.f32 1.0, %v3726
    %v3728 = vtanh.pop %v3721
    %v3730 = vrot.slane %v3622, 2
    %v3732 = vmul.f32 %v3727, %v3730
    %3734 = vrot.lane.b32.xlu0 %v3728, 64
    %v3735 = vpop.permute.xlu0 %3734
    %v3737 = vmul.f32 %v3727, %v3735
    %3739 = vrot.lane.b32.xlu0 %v3737, 32
    %v3740 = vpop.permute.xlu0 %3739
    %v3742 = vadd.f32 %v3732, %v3740
    %v3743 = vtanh.pop %v3742
    %3745 = vrot.lane.b32.xlu0 %v3743, 64
    %v3746 = vpop.permute.xlu0 %3745
    %v3748 = vmul.f32 %v3727, %v3746
    %v3751 = vunpack.c.l.s4 1983009808
    %v3752 = vunpack.c.0.s8 %v3751
    %v3753 = vlaneseq
    %v3754 = vshrl.u32 %v3753, 7
    %v3755 = vsub.s32 %v3752, %v3754
    %v3756 = vrot.slane %v3748, %v3755
    %3757 = vrot.lane.b32.xlu0 %v3756, 64
    %v3758 = vpop.permute.xlu0 %3757
    %3760 = vst.msk [vmem:[#allocation3 + $0x1] sm:$0x1] %vm3393, %v3758
    %v3761 = vrot.slane %v3756, 7
    %v3762 = vrot.slane %v3761, 2
    %3764 = vst.msk [vmem:[#allocation3 + $0x1] sm:$0x1] %vm3398, %v3762
    %3765 = vrot.lane.b32.xlu0 %v3748, 32
    %v3766 = vpop.permute.xlu0 %3765
    %v3767 = vsel %vm346, %v3766, 0
    %3769 = vmatprep.subr.mxu0 0.0
    %3770 = vmatpush1.msra.mxu0 %v2122
    %3771 = vmatprep.subr.mxu0 0.0
    %3772 = vmatpush1.msra.mxu0 %v2123
    %3773 = vmatprep.subr.mxu0 0.0
    %3774 = vmatpush1.msra.mxu0 %v2124
    %3775 = vmatprep.subr.mxu0 0.0
    %3776 = vmatpush1.msra.mxu0 %v2125
    %3777 = vmatprep.subr.mxu0 0.0
    %3778 = vmatpush1.msra.mxu0 0.0
    %3779 = vmatprep.subr.mxu0 0.0
    %3780 = vmatpush1.msra.mxu0 0.0
    %3781 = vmatprep.subr.mxu0 0.0
    %3782 = vmatpush1.msra.mxu0 0.0
    %3783 = vmatprep.subr.mxu0 0.0
    %3784 = vmatpush1.msra.mxu0 0.0
    %3785 = vmatprep.subr.mxu0 0.0
    %3786 = vmatpush1.msra.mxu0 0.0
    %3787 = vmatprep.subr.mxu0 0.0
    %3788 = vmatpush1.msra.mxu0 0.0
    %3789 = vmatprep.subr.mxu0 0.0
    %3790 = vmatpush1.msra.mxu0 0.0
    %3791 = vmatprep.subr.mxu0 0.0
    %3792 = vmatpush1.msra.mxu0 0.0
    %3793 = vmatprep.subr.mxu0 0.0
    %3794 = vmatpush1.msra.mxu0 0.0
    %3795 = vmatprep.subr.mxu0 0.0
    %3796 = vmatpush1.msra.mxu0 0.0
    %3797 = vmatprep.subr.mxu0 0.0
    %3798 = vmatpush1.msra.mxu0 0.0
    %3799 = vmatprep.subr.mxu0 0.0
    %3800 = vmatpush1.msra.mxu0 0.0
    %3801 = vmatprep.subr.mxu0 0.0
    %3802 = vmatpush1.msra.mxu0 0.0
    %3803 = vmatprep.subr.mxu0 0.0
    %3804 = vmatpush1.msra.mxu0 0.0
    %3805 = vmatprep.subr.mxu0 0.0
    %3806 = vmatpush1.msra.mxu0 0.0
    %3807 = vmatprep.subr.mxu0 0.0
    %3808 = vmatpush1.msra.mxu0 0.0
    %3809 = vmatprep.subr.mxu0 0.0
    %3810 = vmatpush1.msra.mxu0 0.0
    %3811 = vmatprep.subr.mxu0 0.0
    %3812 = vmatpush1.msra.mxu0 0.0
    %3813 = vmatprep.subr.mxu0 0.0
    %3814 = vmatpush1.msra.mxu0 0.0
    %3815 = vmatprep.subr.mxu0 0.0
    %3816 = vmatpush1.msra.mxu0 0.0
    %3817 = vmatprep.subr.mxu0 0.0
    %3818 = vmatpush1.msra.mxu0 0.0
    %3819 = vmatprep.subr.mxu0 0.0
    %3820 = vmatpush1.msra.mxu0 0.0
    %3821 = vmatprep.subr.mxu0 0.0
    %3822 = vmatpush1.msra.mxu0 0.0
    %3823 = vmatprep.subr.mxu0 0.0
    %3824 = vmatpush1.msra.mxu0 0.0
    %3825 = vmatprep.subr.mxu0 0.0
    %3826 = vmatpush1.msra.mxu0 0.0
    %3827 = vmatprep.subr.mxu0 0.0
    %3828 = vmatpush1.msra.mxu0 0.0
    %3829 = vmatprep.subr.mxu0 0.0
    %3830 = vmatpush1.msra.mxu0 0.0
    %3831 = vmatprep.subr.mxu0 0.0
    %3832 = vmatpush1.msra.mxu0 0.0
    %3833 = vmatprep.mubr.f32.mxu0 0.0
    %3834 = vmatmul.mubr.f32.gmra.mrb[0].mxu0 %v3767
    %v3835 = vpop.f32.mrb[0].mxu0
    %v3836 = vadd.f32 0.0, %v3835
    %v3837 = vpop.f32.mrb[0].mxu0
    %3838 = vdwg.mxu0
    %v3840 = vrot.slane %v3836, 2
    %v3842 = vadd.f32 %v2288, %v3840
    %v3843 = vxor.u32 %v3842, 2147483648
    %v3844 = vmul.f32 %v3843, 1.442695
    %v3845 = vpow.pop %v3844
    %v3846 = vadd.f32 %v3845, 1.0
    %v3847 = vrcp.pop %v3846
    %v3848 = vmul.f32 1.0, %v3847
    %v3849 = vtanh.pop %v3842
    %v3851 = vrot.slane %v3742, 2
    %v3853 = vmul.f32 %v3848, %v3851
    %3855 = vrot.lane.b32.xlu0 %v3849, 64
    %v3856 = vpop.permute.xlu0 %3855
    %v3858 = vmul.f32 %v3848, %v3856
    %3860 = vrot.lane.b32.xlu0 %v3858, 32
    %v3861 = vpop.permute.xlu0 %3860
    %v3863 = vadd.f32 %v3853, %v3861
    %v3864 = vtanh.pop %v3863
    %3866 = vrot.lane.b32.xlu0 %v3864, 64
    %v3867 = vpop.permute.xlu0 %3866
    %v3869 = vmul.f32 %v3848, %v3867
    %v3871 = vcombine.high %v3869, %v3869
    %v3873 = vunpack.c.l.s4 1983009808
    %v3874 = vunpack.c.0.s8 %v3873
    %v3875 = vlaneseq
    %v3876 = vshrl.u32 %v3875, 7
    %v3877 = vsub.s32 %v3874, %v3876
    %v3878 = vrot.slane %v3871, %v3877
    %v3879 = vcombine.high %v3878, %v3878
    %3880 = vrot.lane.b32.xlu0 %v3879, 64
    %v3881 = vpop.permute.xlu0 %3880
    %3883 = vst.msk [vmem:[#allocation3 + $0x6] sm:$0x1] %vm3393, %v3881
    %v3884 = vrot.slane %v3879, 7
    %v3885 = vrot.slane %v3884, 2
    %3887 = vst.msk [vmem:[#allocation3 + $0x6] sm:$0x1] %vm3398, %v3885
    %v3888 = vrot.slane %v3869, 6
    %3889 = vrot.lane.b32.xlu0 %v3888, 32
    %v3890 = vpop.permute.xlu0 %3889
    %v3891 = vsel %vm346, %v3890, 0
    %3893 = vmatprep.subr.mxu0 0.0
    %3894 = vmatpush1.msra.mxu0 %v2122
    %3895 = vmatprep.subr.mxu0 0.0
    %3896 = vmatpush1.msra.mxu0 %v2123
    %3897 = vmatprep.subr.mxu0 0.0
    %3898 = vmatpush1.msra.mxu0 %v2124
    %3899 = vmatprep.subr.mxu0 0.0
    %3900 = vmatpush1.msra.mxu0 %v2125
    %3901 = vmatprep.subr.mxu0 0.0
    %3902 = vmatpush1.msra.mxu0 0.0
    %3903 = vmatprep.subr.mxu0 0.0
    %3904 = vmatpush1.msra.mxu0 0.0
    %3905 = vmatprep.subr.mxu0 0.0
    %3906 = vmatpush1.msra.mxu0 0.0
    %3907 = vmatprep.subr.mxu0 0.0
    %3908 = vmatpush1.msra.mxu0 0.0
    %3909 = vmatprep.subr.mxu0 0.0
    %3910 = vmatpush1.msra.mxu0 0.0
    %3911 = vmatprep.subr.mxu0 0.0
    %3912 = vmatpush1.msra.mxu0 0.0
    %3913 = vmatprep.subr.mxu0 0.0
    %3914 = vmatpush1.msra.mxu0 0.0
    %3915 = vmatprep.subr.mxu0 0.0
    %3916 = vmatpush1.msra.mxu0 0.0
    %3917 = vmatprep.subr.mxu0 0.0
    %3918 = vmatpush1.msra.mxu0 0.0
    %3919 = vmatprep.subr.mxu0 0.0
    %3920 = vmatpush1.msra.mxu0 0.0
    %3921 = vmatprep.subr.mxu0 0.0
    %3922 = vmatpush1.msra.mxu0 0.0
    %3923 = vmatprep.subr.mxu0 0.0
    %3924 = vmatpush1.msra.mxu0 0.0
    %3925 = vmatprep.subr.mxu0 0.0
    %3926 = vmatpush1.msra.mxu0 0.0
    %3927 = vmatprep.subr.mxu0 0.0
    %3928 = vmatpush1.msra.mxu0 0.0
    %3929 = vmatprep.subr.mxu0 0.0
    %3930 = vmatpush1.msra.mxu0 0.0
    %3931 = vmatprep.subr.mxu0 0.0
    %3932 = vmatpush1.msra.mxu0 0.0
    %3933 = vmatprep.subr.mxu0 0.0
    %3934 = vmatpush1.msra.mxu0 0.0
    %3935 = vmatprep.subr.mxu0 0.0
    %3936 = vmatpush1.msra.mxu0 0.0
    %3937 = vmatprep.subr.mxu0 0.0
    %3938 = vmatpush1.msra.mxu0 0.0
    %3939 = vmatprep.subr.mxu0 0.0
    %3940 = vmatpush1.msra.mxu0 0.0
    %3941 = vmatprep.subr.mxu0 0.0
    %3942 = vmatpush1.msra.mxu0 0.0
    %3943 = vmatprep.subr.mxu0 0.0
    %3944 = vmatpush1.msra.mxu0 0.0
    %3945 = vmatprep.subr.mxu0 0.0
    %3946 = vmatpush1.msra.mxu0 0.0
    %3947 = vmatprep.subr.mxu0 0.0
    %3948 = vmatpush1.msra.mxu0 0.0
    %3949 = vmatprep.subr.mxu0 0.0
    %3950 = vmatpush1.msra.mxu0 0.0
    %3951 = vmatprep.subr.mxu0 0.0
    %3952 = vmatpush1.msra.mxu0 0.0
    %3953 = vmatprep.subr.mxu0 0.0
    %3954 = vmatpush1.msra.mxu0 0.0
    %3955 = vmatprep.subr.mxu0 0.0
    %3956 = vmatpush1.msra.mxu0 0.0
    %3957 = vmatprep.mubr.f32.mxu0 0.0
    %3958 = vmatmul.mubr.f32.gmra.mrb[0].mxu0 %v3891
    %v3959 = vpop.f32.mrb[0].mxu0
    %v3960 = vadd.f32 0.0, %v3959
    %v3961 = vpop.f32.mrb[0].mxu0
    %3962 = vdwg.mxu0
    %v3964 = vrot.slane %v3960, 4
    %v3966 = vadd.f32 %v2288, %v3964
    %v3967 = vxor.u32 %v3966, 2147483648
    %v3968 = vmul.f32 %v3967, 1.442695
    %v3969 = vpow.pop %v3968
    %v3970 = vadd.f32 %v3969, 1.0
    %v3971 = vrcp.pop %v3970
    %v3972 = vmul.f32 1.0, %v3971
    %v3973 = vtanh.pop %v3966
    %v3975 = vrot.slane %v3863, 2
    %v3977 = vmul.f32 %v3972, %v3975
    %3979 = vrot.lane.b32.xlu0 %v3973, 64
    %v3980 = vpop.permute.xlu0 %3979
    %v3982 = vmul.f32 %v3972, %v3980
    %3984 = vrot.lane.b32.xlu0 %v3982, 32
    %v3985 = vpop.permute.xlu0 %3984
    %v3987 = vadd.f32 %v3977, %v3985
    %v3988 = vtanh.pop %v3987
    %3990 = vrot.lane.b32.xlu0 %v3988, 64
    %v3991 = vpop.permute.xlu0 %3990
    %v3993 = vmul.f32 %v3972, %v3991
    %v3995 = vcombine.high %v3993, %v3993
    %v3997 = vunpack.c.l.s4 1983009808
    %v3998 = vunpack.c.0.s8 %v3997
    %v3999 = vlaneseq
    %v4000 = vshrl.u32 %v3999, 7
    %v4001 = vsub.s32 %v3998, %v4000
    %v4002 = vrot.slane %v3995, %v4001
    %4003 = vrot.lane.b32.xlu0 %v4002, 64
    %v4004 = vpop.permute.xlu0 %4003
    %4006 = vst.msk [vmem:[#allocation3 + $0x4] sm:$0x1] %vm3393, %v4004
    %v4007 = vrot.slane %v4002, 7
    %v4008 = vrot.slane %v4007, 2
    %4010 = vst.msk [vmem:[#allocation3 + $0x4] sm:$0x1] %vm3398, %v4008
    %v4011 = vrot.slane %v3993, 4
    %4012 = vrot.lane.b32.xlu0 %v4011, 32
    %v4013 = vpop.permute.xlu0 %4012
    %v4014 = vsel %vm346, %v4013, 0
    %4016 = vmatprep.subr.mxu0 0.0
    %4017 = vmatpush1.msra.mxu0 %v2122
    %4018 = vmatprep.subr.mxu0 0.0
    %4019 = vmatpush1.msra.mxu0 %v2123
    %4020 = vmatprep.subr.mxu0 0.0
    %4021 = vmatpush1.msra.mxu0 %v2124
    %4022 = vmatprep.subr.mxu0 0.0
    %4023 = vmatpush1.msra.mxu0 %v2125
    %4024 = vmatprep.subr.mxu0 0.0
    %4025 = vmatpush1.msra.mxu0 0.0
    %4026 = vmatprep.subr.mxu0 0.0
    %4027 = vmatpush1.msra.mxu0 0.0
    %4028 = vmatprep.subr.mxu0 0.0
    %4029 = vmatpush1.msra.mxu0 0.0
    %4030 = vmatprep.subr.mxu0 0.0
    %4031 = vmatpush1.msra.mxu0 0.0
    %4032 = vmatprep.subr.mxu0 0.0
    %4033 = vmatpush1.msra.mxu0 0.0
    %4034 = vmatprep.subr.mxu0 0.0
    %4035 = vmatpush1.msra.mxu0 0.0
    %4036 = vmatprep.subr.mxu0 0.0
    %4037 = vmatpush1.msra.mxu0 0.0
    %4038 = vmatprep.subr.mxu0 0.0
    %4039 = vmatpush1.msra.mxu0 0.0
    %4040 = vmatprep.subr.mxu0 0.0
    %4041 = vmatpush1.msra.mxu0 0.0
    %4042 = vmatprep.subr.mxu0 0.0
    %4043 = vmatpush1.msra.mxu0 0.0
    %4044 = vmatprep.subr.mxu0 0.0
    %4045 = vmatpush1.msra.mxu0 0.0
    %4046 = vmatprep.subr.mxu0 0.0
    %4047 = vmatpush1.msra.mxu0 0.0
    %4048 = vmatprep.subr.mxu0 0.0
    %4049 = vmatpush1.msra.mxu0 0.0
    %4050 = vmatprep.subr.mxu0 0.0
    %4051 = vmatpush1.msra.mxu0 0.0
    %4052 = vmatprep.subr.mxu0 0.0
    %4053 = vmatpush1.msra.mxu0 0.0
    %4054 = vmatprep.subr.mxu0 0.0
    %4055 = vmatpush1.msra.mxu0 0.0
    %4056 = vmatprep.subr.mxu0 0.0
    %4057 = vmatpush1.msra.mxu0 0.0
    %4058 = vmatprep.subr.mxu0 0.0
    %4059 = vmatpush1.msra.mxu0 0.0
    %4060 = vmatprep.subr.mxu0 0.0
    %4061 = vmatpush1.msra.mxu0 0.0
    %4062 = vmatprep.subr.mxu0 0.0
    %4063 = vmatpush1.msra.mxu0 0.0
    %4064 = vmatprep.subr.mxu0 0.0
    %4065 = vmatpush1.msra.mxu0 0.0
    %4066 = vmatprep.subr.mxu0 0.0
    %4067 = vmatpush1.msra.mxu0 0.0
    %4068 = vmatprep.subr.mxu0 0.0
    %4069 = vmatpush1.msra.mxu0 0.0
    %4070 = vmatprep.subr.mxu0 0.0
    %4071 = vmatpush1.msra.mxu0 0.0
    %4072 = vmatprep.subr.mxu0 0.0
    %4073 = vmatpush1.msra.mxu0 0.0
    %4074 = vmatprep.subr.mxu0 0.0
    %4075 = vmatpush1.msra.mxu0 0.0
    %4076 = vmatprep.subr.mxu0 0.0
    %4077 = vmatpush1.msra.mxu0 0.0
    %4078 = vmatprep.subr.mxu0 0.0
    %4079 = vmatpush1.msra.mxu0 0.0
    %4080 = vmatprep.mubr.f32.mxu0 0.0
    %4081 = vmatmul.mubr.f32.gmra.mrb[0].mxu0 %v4014
    %v4082 = vpop.f32.mrb[0].mxu0
    %v4083 = vadd.f32 0.0, %v4082
    %v4084 = vpop.f32.mrb[0].mxu0
    %4085 = vdwg.mxu0
    %v4087 = vrot.slane %v4083, 6
    %v4089 = vadd.f32 %v2288, %v4087
    %v4090 = vxor.u32 %v4089, 2147483648
    %v4091 = vmul.f32 %v4090, 1.442695
    %v4092 = vpow.pop %v4091
    %v4093 = vadd.f32 %v4092, 1.0
    %v4094 = vrcp.pop %v4093
    %v4095 = vmul.f32 1.0, %v4094
    %v4096 = vtanh.pop %v4089
    %v4098 = vrot.slane %v3987, 2
    %v4100 = vmul.f32 %v4095, %v4098
    %4102 = vrot.lane.b32.xlu0 %v4096, 64
    %v4103 = vpop.permute.xlu0 %4102
    %v4105 = vmul.f32 %v4095, %v4103
    %4107 = vrot.lane.b32.xlu0 %v4105, 32
    %v4108 = vpop.permute.xlu0 %4107
    %v4110 = vadd.f32 %v4100, %v4108
    %v4111 = vtanh.pop %v4110
    %4113 = vrot.lane.b32.xlu0 %v4111, 64
    %v4114 = vpop.permute.xlu0 %4113
    %v4116 = vmul.f32 %v4095, %v4114
    %v4119 = vunpack.c.l.s4 1983009808
    %v4120 = vunpack.c.0.s8 %v4119
    %v4121 = vlaneseq
    %v4122 = vshrl.u32 %v4121, 7
    %v4123 = vsub.s32 %v4120, %v4122
    %v4124 = vrot.slane %v4116, %v4123
    %v4125 = vcombine.high %v4124, %v4124
    %4126 = vrot.lane.b32.xlu0 %v4125, 64
    %v4127 = vpop.permute.xlu0 %4126
    %4129 = vst.msk [vmem:[#allocation3 + $0x2] sm:$0x1] %vm3393, %v4127
    %v4130 = vrot.slane %v4125, 7
    %v4131 = vrot.slane %v4130, 2
    %4133 = vst.msk [vmem:[#allocation3 + $0x2] sm:$0x1] %vm3398, %v4131
    %v4134 = vrot.slane %v4116, 2
    %4135 = vrot.lane.b32.xlu0 %v4134, 32
    %v4136 = vpop.permute.xlu0 %4135
    %v4137 = vsel %vm346, %v4136, 0
    %4139 = vmatprep.subr.mxu0 0.0
    %4140 = vmatpush1.msra.mxu0 %v2122
    %4141 = vmatprep.subr.mxu0 0.0
    %4142 = vmatpush1.msra.mxu0 %v2123
    %4143 = vmatprep.subr.mxu0 0.0
    %4144 = vmatpush1.msra.mxu0 %v2124
    %4145 = vmatprep.subr.mxu0 0.0
    %4146 = vmatpush1.msra.mxu0 %v2125
    %4147 = vmatprep.subr.mxu0 0.0
    %4148 = vmatpush1.msra.mxu0 0.0
    %4149 = vmatprep.subr.mxu0 0.0
    %4150 = vmatpush1.msra.mxu0 0.0
    %4151 = vmatprep.subr.mxu0 0.0
    %4152 = vmatpush1.msra.mxu0 0.0
    %4153 = vmatprep.subr.mxu0 0.0
    %4154 = vmatpush1.msra.mxu0 0.0
    %4155 = vmatprep.subr.mxu0 0.0
    %4156 = vmatpush1.msra.mxu0 0.0
    %4157 = vmatprep.subr.mxu0 0.0
    %4158 = vmatpush1.msra.mxu0 0.0
    %4159 = vmatprep.subr.mxu0 0.0
    %4160 = vmatpush1.msra.mxu0 0.0
    %4161 = vmatprep.subr.mxu0 0.0
    %4162 = vmatpush1.msra.mxu0 0.0
    %4163 = vmatprep.subr.mxu0 0.0
    %4164 = vmatpush1.msra.mxu0 0.0
    %4165 = vmatprep.subr.mxu0 0.0
    %4166 = vmatpush1.msra.mxu0 0.0
    %4167 = vmatprep.subr.mxu0 0.0
    %4168 = vmatpush1.msra.mxu0 0.0
    %4169 = vmatprep.subr.mxu0 0.0
    %4170 = vmatpush1.msra.mxu0 0.0
    %4171 = vmatprep.subr.mxu0 0.0
    %4172 = vmatpush1.msra.mxu0 0.0
    %4173 = vmatprep.subr.mxu0 0.0
    %4174 = vmatpush1.msra.mxu0 0.0
    %4175 = vmatprep.subr.mxu0 0.0
    %4176 = vmatpush1.msra.mxu0 0.0
    %4177 = vmatprep.subr.mxu0 0.0
    %4178 = vmatpush1.msra.mxu0 0.0
    %4179 = vmatprep.subr.mxu0 0.0
    %4180 = vmatpush1.msra.mxu0 0.0
    %4181 = vmatprep.subr.mxu0 0.0
    %4182 = vmatpush1.msra.mxu0 0.0
    %4183 = vmatprep.subr.mxu0 0.0
    %4184 = vmatpush1.msra.mxu0 0.0
    %4185 = vmatprep.subr.mxu0 0.0
    %4186 = vmatpush1.msra.mxu0 0.0
    %4187 = vmatprep.subr.mxu0 0.0
    %4188 = vmatpush1.msra.mxu0 0.0
    %4189 = vmatprep.subr.mxu0 0.0
    %4190 = vmatpush1.msra.mxu0 0.0
    %4191 = vmatprep.subr.mxu0 0.0
    %4192 = vmatpush1.msra.mxu0 0.0
    %4193 = vmatprep.subr.mxu0 0.0
    %4194 = vmatpush1.msra.mxu0 0.0
    %4195 = vmatprep.subr.mxu0 0.0
    %4196 = vmatpush1.msra.mxu0 0.0
    %4197 = vmatprep.subr.mxu0 0.0
    %4198 = vmatpush1.msra.mxu0 0.0
    %4199 = vmatprep.subr.mxu0 0.0
    %4200 = vmatpush1.msra.mxu0 0.0
    %4201 = vmatprep.subr.mxu0 0.0
    %4202 = vmatpush1.msra.mxu0 0.0
    %4203 = vmatprep.mubr.f32.mxu0 0.0
    %4204 = vmatmul.mubr.f32.gmra.mrb[0].mxu0 %v4137
    %v4205 = vpop.f32.mrb[0].mxu0
    %v4206 = vadd.f32 0.0, %v4205
    %v4207 = vpop.f32.mrb[0].mxu0
    %4208 = vdwg.mxu0
    %v4209 = vadd.f32 %v2288, %v4206
    %v4210 = vxor.u32 %v4209, 2147483648
    %v4211 = vmul.f32 %v4210, 1.442695
    %v4212 = vpow.pop %v4211
    %v4213 = vadd.f32 %v4212, 1.0
    %v4214 = vrcp.pop %v4213
    %v4215 = vmul.f32 1.0, %v4214
    %v4216 = vtanh.pop %v4209
    %v4218 = vrot.slane %v4110, 2
    %v4220 = vmul.f32 %v4215, %v4218
    %4222 = vrot.lane.b32.xlu0 %v4216, 64
    %v4223 = vpop.permute.xlu0 %4222
    %v4225 = vmul.f32 %v4215, %v4223
    %4227 = vrot.lane.b32.xlu0 %v4225, 32
    %v4228 = vpop.permute.xlu0 %4227
    %v4230 = vadd.f32 %v4220, %v4228
    %v4231 = vtanh.pop %v4230
    %4233 = vrot.lane.b32.xlu0 %v4231, 64
    %v4234 = vpop.permute.xlu0 %4233
    %v4236 = vmul.f32 %v4215, %v4234
    %v4239 = vunpack.c.l.s4 1983009808
    %v4240 = vunpack.c.0.s8 %v4239
    %v4241 = vlaneseq
    %v4242 = vshrl.u32 %v4241, 7
    %v4243 = vsub.s32 %v4240, %v4242
    %v4244 = vrot.slane %v4236, %v4243
    %4245 = vrot.lane.b32.xlu0 %v4244, 64
    %v4246 = vpop.permute.xlu0 %4245
    %4248 = vst.msk [vmem:[#allocation3] sm:$0x1] %vm3393, %v4246
    %v4249 = vrot.slane %v4244, 7
    %v4250 = vrot.slane %v4249, 2
    %4252 = vst.msk [vmem:[#allocation3] sm:$0x1] %vm3398, %v4250
    %v4253 = vld [vmem:[#allocation3] sm:$0xff]
    %v4254 = vld [vmem:[%s14] sm:$0xff]
    %v4255 = vld [vmem:[%s14 + $0x8] sm:$0xff]
    %v4256 = vld [vmem:[%s14 + $0x10] sm:$0xff]
    %v4257 = vld [vmem:[%s14 + $0x18] sm:$0xff]
    %v4258 = vld [vmem:[%s14 + $0x20] sm:$0xff]
    %v4259 = vld [vmem:[%s14 + $0x28] sm:$0xff]
    %v4260 = vld [vmem:[%s14 + $0x30] sm:$0xff]
    %v4261 = vld [vmem:[%s14 + $0x38] sm:$0xff]
    %v4262 = vld [vmem:[%s14 + $0x40] sm:$0xff]
    %v4263 = vld [vmem:[%s14 + $0x48] sm:$0xff]
    %v4264 = vld [vmem:[%s14 + $0x50] sm:$0xff]
    %v4265 = vld [vmem:[%s14 + $0x58] sm:$0xff]
    %v4266 = vld [vmem:[%s14 + $0x60] sm:$0xff]
    %v4267 = vld [vmem:[%s14 + $0x68] sm:$0xff]
    %v4268 = vld [vmem:[%s14 + $0x70] sm:$0xff]
    %v4269 = vld [vmem:[%s14 + $0x78] sm:$0xff]
    %v4270 = vld [vmem:[%s14 + $0x80] sm:$0xff]
    %v4271 = vld [vmem:[%s14 + $0x88] sm:$0xff]
    %v4272 = vld [vmem:[%s14 + $0x90] sm:$0xff]
    %v4273 = vld [vmem:[%s14 + $0x98] sm:$0xff]
    %v4274 = vld [vmem:[%s14 + $0xa0] sm:$0xff]
    %v4275 = vld [vmem:[%s14 + $0xa8] sm:$0xff]
    %v4276 = vld [vmem:[%s14 + $0xb0] sm:$0xff]
    %v4277 = vld [vmem:[%s14 + $0xb8] sm:$0xff]
    %v4278 = vld [vmem:[%s14 + $0xc0] sm:$0xff]
    %v4279 = vld [vmem:[%s14 + $0xc8] sm:$0xff]
    %v4280 = vld [vmem:[%s14 + $0xd0] sm:$0xff]
    %v4281 = vld [vmem:[%s14 + $0xd8] sm:$0xff]
    %v4282 = vld [vmem:[%s14 + $0xe0] sm:$0xff]
    %v4283 = vld [vmem:[%s14 + $0xe8] sm:$0xff]
    %v4284 = vld [vmem:[%s14 + $0xf0] sm:$0xff]
    %v4285 = vld [vmem:[%s14 + $0xf8] sm:$0xff]
    %v4286 = vld [vmem:[%s14 + $0x100] sm:$0xff]
    %v4287 = vld [vmem:[%s14 + $0x108] sm:$0xff]
    %v4288 = vld [vmem:[%s14 + $0x110] sm:$0xff]
    %v4289 = vld [vmem:[%s14 + $0x118] sm:$0xff]
    %v4290 = vld [vmem:[%s14 + $0x120] sm:$0xff]
    %v4291 = vld [vmem:[%s14 + $0x128] sm:$0xff]
    %v4292 = vld [vmem:[%s14 + $0x130] sm:$0xff]
    %v4293 = vld [vmem:[%s14 + $0x138] sm:$0xff]
    %v4294 = vld [vmem:[%s14 + $0x140] sm:$0xff]
    %v4295 = vld [vmem:[%s14 + $0x148] sm:$0xff]
    %v4296 = vld [vmem:[%s14 + $0x150] sm:$0xff]
    %v4297 = vld [vmem:[%s14 + $0x158] sm:$0xff]
    %v4298 = vld [vmem:[%s14 + $0x160] sm:$0xff]
    %v4299 = vld [vmem:[%s14 + $0x168] sm:$0xff]
    %v4300 = vld [vmem:[%s14 + $0x170] sm:$0xff]
    %v4301 = vld [vmem:[%s14 + $0x178] sm:$0xff]
    %v4302 = vld [vmem:[%s14 + $0x180] sm:$0xff]
    %v4303 = vld [vmem:[%s14 + $0x188] sm:$0xff]
    %v4304 = vld [vmem:[%s14 + $0x190] sm:$0xff]
    %v4305 = vld [vmem:[%s14 + $0x198] sm:$0xff]
    %v4306 = vld [vmem:[%s14 + $0x1a0] sm:$0xff]
    %v4307 = vld [vmem:[%s14 + $0x1a8] sm:$0xff]
    %v4308 = vld [vmem:[%s14 + $0x1b0] sm:$0xff]
    %v4309 = vld [vmem:[%s14 + $0x1b8] sm:$0xff]
    %v4310 = vld [vmem:[%s14 + $0x1c0] sm:$0xff]
    %v4311 = vld [vmem:[%s14 + $0x1c8] sm:$0xff]
    %v4312 = vld [vmem:[%s14 + $0x1d0] sm:$0xff]
    %v4313 = vld [vmem:[%s14 + $0x1d8] sm:$0xff]
    %v4314 = vld [vmem:[%s14 + $0x1e0] sm:$0xff]
    %v4315 = vld [vmem:[%s14 + $0x1e8] sm:$0xff]
    %v4316 = vld [vmem:[%s14 + $0x1f0] sm:$0xff]
    %v4317 = vld [vmem:[%s14 + $0x1f8] sm:$0xff]
    %v4318 = vld [vmem:[%s15] sm:$0x1]
    %v4320 = vlaneseq
    %v4321 = vshrl.u32 %v4320, 7
    %v4322 = vsub.s32 0, %v4321
    %v4323 = vrot.slane %v4318, %v4322
    %v4326 = vcombine.high %v4253, %v4253
    %v4328 = vunpack.c.l.s4 1983009808
    %v4329 = vunpack.c.0.s8 %v4328
    %v4330 = vlaneseq
    %v4331 = vshrl.u32 %v4330, 7
    %v4332 = vsub.s32 %v4329, %v4331
    %v4333 = vrot.slane %v4253, %v4332
    %v4335 = vunpack.c.l.s4 1983009808
    %v4336 = vunpack.c.0.s8 %v4335
    %v4337 = vlaneseq
    %v4338 = vshrl.u32 %v4337, 7
    %v4339 = vsub.s32 %v4336, %v4338
    %v4340 = vrot.slane %v4326, %v4339
    %v4341 = vcombine.high %v4333, %v4333
    %v4342 = vcombine.high %v4340, %v4340
    %4347 = vmatprep.subr.mxu0 0.0
    %4348 = vmatpush1.msra.mxu0 %v4254
    %4349 = vmatprep.subr.mxu0 0.0
    %4350 = vmatpush1.msra.mxu0 %v4255
    %4351 = vmatprep.subr.mxu0 0.0
    %4352 = vmatpush1.msra.mxu0 %v4256
    %4353 = vmatprep.subr.mxu0 0.0
    %4354 = vmatpush1.msra.mxu0 %v4257
    %4355 = vmatprep.subr.mxu0 0.0
    %4356 = vmatpush1.msra.mxu0 %v4258
    %4357 = vmatprep.subr.mxu0 0.0
    %4358 = vmatpush1.msra.mxu0 %v4259
    %4359 = vmatprep.subr.mxu0 0.0
    %4360 = vmatpush1.msra.mxu0 %v4260
    %4361 = vmatprep.subr.mxu0 0.0
    %4362 = vmatpush1.msra.mxu0 %v4261
    %4363 = vmatprep.subr.mxu0 0.0
    %4364 = vmatpush1.msra.mxu0 %v4262
    %4365 = vmatprep.subr.mxu0 0.0
    %4366 = vmatpush1.msra.mxu0 %v4263
    %4367 = vmatprep.subr.mxu0 0.0
    %4368 = vmatpush1.msra.mxu0 %v4264
    %4369 = vmatprep.subr.mxu0 0.0
    %4370 = vmatpush1.msra.mxu0 %v4265
    %4371 = vmatprep.subr.mxu0 0.0
    %4372 = vmatpush1.msra.mxu0 %v4266
    %4373 = vmatprep.subr.mxu0 0.0
    %4374 = vmatpush1.msra.mxu0 %v4267
    %4375 = vmatprep.subr.mxu0 0.0
    %4376 = vmatpush1.msra.mxu0 %v4268
    %4377 = vmatprep.subr.mxu0 0.0
    %4378 = vmatpush1.msra.mxu0 %v4269
    %4379 = vmatprep.subr.mxu0 0.0
    %4380 = vmatpush1.msra.mxu0 %v4270
    %4381 = vmatprep.subr.mxu0 0.0
    %4382 = vmatpush1.msra.mxu0 %v4271
    %4383 = vmatprep.subr.mxu0 0.0
    %4384 = vmatpush1.msra.mxu0 %v4272
    %4385 = vmatprep.subr.mxu0 0.0
    %4386 = vmatpush1.msra.mxu0 %v4273
    %4387 = vmatprep.subr.mxu0 0.0
    %4388 = vmatpush1.msra.mxu0 %v4274
    %4389 = vmatprep.subr.mxu0 0.0
    %4390 = vmatpush1.msra.mxu0 %v4275
    %4391 = vmatprep.subr.mxu0 0.0
    %4392 = vmatpush1.msra.mxu0 %v4276
    %4393 = vmatprep.subr.mxu0 0.0
    %4394 = vmatpush1.msra.mxu0 %v4277
    %4395 = vmatprep.subr.mxu0 0.0
    %4396 = vmatpush1.msra.mxu0 %v4278
    %4397 = vmatprep.subr.mxu0 0.0
    %4398 = vmatpush1.msra.mxu0 %v4279
    %4399 = vmatprep.subr.mxu0 0.0
    %4400 = vmatpush1.msra.mxu0 %v4280
    %4401 = vmatprep.subr.mxu0 0.0
    %4402 = vmatpush1.msra.mxu0 %v4281
    %4403 = vmatprep.subr.mxu0 0.0
    %4404 = vmatpush1.msra.mxu0 %v4282
    %4405 = vmatprep.subr.mxu0 0.0
    %4406 = vmatpush1.msra.mxu0 %v4283
    %4407 = vmatprep.subr.mxu0 0.0
    %4408 = vmatpush1.msra.mxu0 %v4284
    %4409 = vmatprep.subr.mxu0 0.0
    %4410 = vmatpush1.msra.mxu0 %v4285
    %4411 = vmatprep.mubr.f32.mxu0 %v4341
    %4412 = vmatmul.mubr.f32.gmra.mrb[0].mxu0 %v4333
    %v4413 = vpop.f32.mrb[0].mxu0
    %v4414 = vadd.f32 %v4323, %v4413
    %v4415 = vpop.f32.mrb[0].mxu0
    %4416 = vdwg.mxu0
    %4417 = vmatprep.subr.mxu0 0.0
    %4418 = vmatpush1.msra.mxu0 %v4286
    %4419 = vmatprep.subr.mxu0 0.0
    %4420 = vmatpush1.msra.mxu0 %v4287
    %4421 = vmatprep.subr.mxu0 0.0
    %4422 = vmatpush1.msra.mxu0 %v4288
    %4423 = vmatprep.subr.mxu0 0.0
    %4424 = vmatpush1.msra.mxu0 %v4289
    %4425 = vmatprep.subr.mxu0 0.0
    %4426 = vmatpush1.msra.mxu0 %v4290
    %4427 = vmatprep.subr.mxu0 0.0
    %4428 = vmatpush1.msra.mxu0 %v4291
    %4429 = vmatprep.subr.mxu0 0.0
    %4430 = vmatpush1.msra.mxu0 %v4292
    %4431 = vmatprep.subr.mxu0 0.0
    %4432 = vmatpush1.msra.mxu0 %v4293
    %4433 = vmatprep.subr.mxu0 0.0
    %4434 = vmatpush1.msra.mxu0 %v4294
    %4435 = vmatprep.subr.mxu0 0.0
    %4436 = vmatpush1.msra.mxu0 %v4295
    %4437 = vmatprep.subr.mxu0 0.0
    %4438 = vmatpush1.msra.mxu0 %v4296
    %4439 = vmatprep.subr.mxu0 0.0
    %4440 = vmatpush1.msra.mxu0 %v4297
    %4441 = vmatprep.subr.mxu0 0.0
    %4442 = vmatpush1.msra.mxu0 %v4298
    %4443 = vmatprep.subr.mxu0 0.0
    %4444 = vmatpush1.msra.mxu0 %v4299
    %4445 = vmatprep.subr.mxu0 0.0
    %4446 = vmatpush1.msra.mxu0 %v4300
    %4447 = vmatprep.subr.mxu0 0.0
    %4448 = vmatpush1.msra.mxu0 %v4301
    %4449 = vmatprep.subr.mxu0 0.0
    %4450 = vmatpush1.msra.mxu0 %v4302
    %4451 = vmatprep.subr.mxu0 0.0
    %4452 = vmatpush1.msra.mxu0 %v4303
    %4453 = vmatprep.subr.mxu0 0.0
    %4454 = vmatpush1.msra.mxu0 %v4304
    %4455 = vmatprep.subr.mxu0 0.0
    %4456 = vmatpush1.msra.mxu0 %v4305
    %4457 = vmatprep.subr.mxu0 0.0
    %4458 = vmatpush1.msra.mxu0 %v4306
    %4459 = vmatprep.subr.mxu0 0.0
    %4460 = vmatpush1.msra.mxu0 %v4307
    %4461 = vmatprep.subr.mxu0 0.0
    %4462 = vmatpush1.msra.mxu0 %v4308
    %4463 = vmatprep.subr.mxu0 0.0
    %4464 = vmatpush1.msra.mxu0 %v4309
    %4465 = vmatprep.subr.mxu0 0.0
    %4466 = vmatpush1.msra.mxu0 %v4310
    %4467 = vmatprep.subr.mxu0 0.0
    %4468 = vmatpush1.msra.mxu0 %v4311
    %4469 = vmatprep.subr.mxu0 0.0
    %4470 = vmatpush1.msra.mxu0 %v4312
    %4471 = vmatprep.subr.mxu0 0.0
    %4472 = vmatpush1.msra.mxu0 %v4313
    %4473 = vmatprep.subr.mxu0 0.0
    %4474 = vmatpush1.msra.mxu0 %v4314
    %4475 = vmatprep.subr.mxu0 0.0
    %4476 = vmatpush1.msra.mxu0 %v4315
    %4477 = vmatprep.subr.mxu0 0.0
    %4478 = vmatpush1.msra.mxu0 %v4316
    %4479 = vmatprep.subr.mxu0 0.0
    %4480 = vmatpush1.msra.mxu0 %v4317
    %4481 = vmatprep.mubr.f32.mxu0 %v4342
    %4482 = vmatmul.mubr.f32.gmra.mrb[0].mxu0 %v4340
    %v4483 = vpop.f32.mrb[0].mxu0
    %v4484 = vadd.f32 %v4414, %v4483
    %v4485 = vpop.f32.mrb[0].mxu0
    %4486 = vdwg.mxu0
    %v4487 = vxor.u32 %v4484, 2147483648
    %v4488 = vmul.f32 %v4487, 1.442695
    %v4489 = vpow.pop %v4488
    %v4490 = vadd.f32 %v4489, 1.0
    %v4491 = vrcp.pop %v4490
    %v4492 = vmul.f32 1.0, %v4491
    %vm4493 = vcmask 25600
    %4494 = vst.msk [vmem:[#allocation4] sm:$0x3] %vm4493, %v4492
    // Predicated region
    $region66: #{tpu_custom_call.1} parent=1 // pred_check
      _
    $region67: #{tpu_custom_call.1} parent=1 // pred_check_branch
      %4496 = sbr.rel (0) target = $region69
    $region68: #{tpu_custom_call.1} parent=1 // pred_region
      %s4498 = ssub.s32 32, 32
      %4499 = vsyncadd [#allocation5], %s4498
      %s4501 = sshll.u32 [#allocation4], 4
      %s4502 = int_to_ptr.vmem [resolvable:$true] %s4501
      %4504 = dma.vmem_to_hbm [thread:$0]  %s4502, 32, %s16, [#allocation5]
    $region69: #{tpu_custom_call.1} parent=1 // pred_fallthru
      _
    // Predicated region
    $region70: #{tpu_custom_call.1} parent=1 // pred_check
      _
    $region71: #{tpu_custom_call.1} parent=1 // pred_check_branch
      %4506 = sbr.rel (0) target = $region73
    $region72: #{tpu_custom_call.1} parent=1 // pred_region
      %4507 = dma.done [#allocation5], 32
    $region73: #{tpu_custom_call.1} parent=1 // pred_fallthru
      _
    %4508 = vsyncpa [#allocation5], 1

</llo_original>
